<compile_context>
chip_gen: v7x
topology: tpu7x:2x2x1
jax: 0.10.0
libtpu: 0.0.40
codegen_flags: <defaults>
</compile_context>

<pallas_src>
import functools
import math

import jax
import jax.numpy as jnp
import numpy as np
from jax.experimental import pallas as pl
from jax.experimental.pallas import tpu as pltpu

HIDDEN = 32
LANE = 128
SUBLANE = 8


class QValueOutput:
    def __init__(self, q_value):
        self.q_value = q_value


def _round_up(n, m):
    return ((n + m - 1) // m) * m


def _qnet_kernel(x_ref, w1_ref, b1_ref, w2_ref, b2_ref, w3_ref, b3_ref, out_ref):
    # One batch tile per grid step; weights/biases are VMEM-resident across the
    # whole grid (constant index_maps), so only x/out tiles stream from HBM.
    # bf16 cast happens here (free VPU work hidden under the x DMA) instead of
    # in a separate wrapper-side XLA pad/cast pass.
    x = x_ref[...].astype(jnp.bfloat16)              # (TB, D) f32 -> bf16
    # Layer 1: bf16 MXU matmul, f32 accumulate, f32 bias + ReLU on the VPU.
    h = jnp.dot(x, w1_ref[...], preferred_element_type=jnp.float32) + b1_ref[...]
    h = jnp.maximum(h, 0.0)                          # (TB, 32) f32
    # Layer 2 (tiny, f32).
    h = jnp.dot(h, w2_ref[...], preferred_element_type=jnp.float32) + b2_ref[...]
    h = jnp.maximum(h, 0.0)                          # (TB, 32) f32
    # Layer 3: N padded once to 128 -> lane-dense, unmasked store.
    q = jnp.dot(h, w3_ref[...], preferred_element_type=jnp.float32) + b3_ref[...]
    out_ref[...] = q                                 # (TB, 128) f32


def init_params(key, obs_shape, action_size, hidden=HIDDEN):
    """Synthetic params in (in_dim, out_dim) layout so the kernel computes
    x @ W + b (equivalent to torch's x @ W.T + b with weight (out, in))."""
    d_in = int(np.prod(obs_shape))
    ks = jax.random.split(key, 6)

    def lin(kw, kb, fan_in, fan_out):
        bound = 1.0 / math.sqrt(fan_in)
        w = jax.random.uniform(kw, (fan_in, fan_out), jnp.float32, -bound, bound)
        b = jax.random.uniform(kb, (1, fan_out), jnp.float32, -bound, bound)
        return w, b

    w1, b1 = lin(ks[0], ks[1], d_in, hidden)
    w2, b2 = lin(ks[2], ks[3], hidden, hidden)
    w3, b3 = lin(ks[4], ks[5], hidden, action_size)
    return dict(w1=w1, b1=b1, w2=w2, b2=b2, w3=w3, b3=b3)


def pack_params(params):
    """One-time weight prep (no per-call work on x):
       - w1 -> bf16 (the only weight with meaningful HBM/VMEM footprint),
       - final-layer N padded with zeros to exactly 128 lanes so the output
         store is lane-dense and unmasked."""
    action_size = params["w3"].shape[1]
    a_pad = _round_up(action_size, LANE)
    w3 = jnp.pad(params["w3"], ((0, 0), (0, a_pad - action_size)))
    b3 = jnp.pad(params["b3"], ((0, 0), (0, a_pad - action_size)))
    return dict(w1=params["w1"].astype(jnp.bfloat16), b1=params["b1"],
                w2=params["w2"], b2=params["b2"], w3=w3, b3=b3)


def _batch_tiling(B, max_tb=512):
    """Pick the batch tile: cdiv-derived (minimal padding), rounded to the
    sublane (8), capped at max_tb rows (double-buffered f32 x tile stays far
    below the 32 MiB scoped-VMEM default, v7x-safe), and >=2 tiles whenever B
    allows so both v7x TensorCores get a share of the 'parallel' grid axis."""
    if B >= 2 * SUBLANE:
        n_tiles = max(2, pl.cdiv(B, max_tb))
    else:
        n_tiles = 1
    tb = _round_up(pl.cdiv(B, n_tiles), SUBLANE)
    b_pad = _round_up(B, tb)
    return tb, b_pad


@functools.partial(jax.jit, static_argnames=("action_size",))
def qvalue_forward(x, packed, action_size):
    B = x.shape[0]
    # Same flatten order as torch's .view(B, -1); reshape is layout-free.
    x_flat = x.reshape(B, -1).astype(jnp.float32)
    D = x_flat.shape[1]
    H = packed["w1"].shape[1]
    A_pad = packed["w3"].shape[1]

    TB, B_pad = _batch_tiling(B)
    if B_pad != B:                                   # only a small batch-tail pad
        x_flat = jnp.pad(x_flat, ((0, B_pad - B), (0, 0)))

    grid = (B_pad // TB,)
    flops = 2 * B_pad * (D * H + H * H + H * A_pad)
    bytes_accessed = (B_pad * D * 4                       # x, read as f32
                      + packed["w1"].size * 2             # bf16 w1
                      + (packed["w2"].size + packed["w3"].size
                         + packed["b1"].size + packed["b2"].size
                         + packed["b3"].size) * 4
                      + B_pad * A_pad * 4)                # f32 output

    q_pad = pl.pallas_call(
        _qnet_kernel,
        out_shape=jax.ShapeDtypeStruct((B_pad, A_pad), jnp.float32),
        grid=grid,
        in_specs=[
            pl.BlockSpec((TB, D), lambda i: (i, 0)),      # x: f32, streamed over batch
            pl.BlockSpec((D, H), lambda i: (0, 0)),       # weights/biases VMEM-resident
            pl.BlockSpec((1, H), lambda i: (0, 0)),
            pl.BlockSpec((H, H), lambda i: (0, 0)),
            pl.BlockSpec((1, H), lambda i: (0, 0)),
            pl.BlockSpec((H, A_pad), lambda i: (0, 0)),
            pl.BlockSpec((1, A_pad), lambda i: (0, 0)),
        ],
        out_specs=pl.BlockSpec((TB, A_pad), lambda i: (i, 0)),
        compiler_params=pltpu.CompilerParams(
            dimension_semantics=("parallel",)),           # v7x: 2 TCs split batch tiles
        cost_estimate=pl.CostEstimate(flops=flops, transcendentals=0,
                                      bytes_accessed=bytes_accessed),
    )(x_flat, packed["w1"], packed["b1"], packed["w2"], packed["b2"],
      packed["w3"], packed["b3"])

    return q_pad[:B, :action_size]


def qvalue_forward_ref_bf16(x, packed, action_size):
    """Pure-JAX reference with the same math as the kernel (bf16 layer-1
    inputs/weights, f32 accumulation)."""
    B = x.shape[0]
    xf = x.reshape(B, -1).astype(jnp.bfloat16)
    h = jnp.dot(xf, packed["w1"], preferred_element_type=jnp.float32) + packed["b1"]
    h = jnp.maximum(h, 0.0)
    h = jnp.maximum(jnp.dot(h, packed["w2"], preferred_element_type=jnp.float32)
                    + packed["b2"], 0.0)
    q = jnp.dot(h, packed["w3"], preferred_element_type=jnp.float32) + packed["b3"]
    return q[:, :action_size]


def qvalue_forward_ref_f32(x, params):
    """Full-precision reference matching the original torch module."""
    B = x.shape[0]
    h = x.reshape(B, -1).astype(jnp.float32)
    h = jnp.maximum(h @ params["w1"] + params["b1"], 0.0)
    h = jnp.maximum(h @ params["w2"] + params["b2"], 0.0)
    return h @ params["w3"] + params["b3"]


if __name__ == "__main__":
    obs_shape = (31, 14, 6)   # docstring example: input (B, 31, 14, 6)
    action_size = 6

    key = jax.random.PRNGKey(0)
    kp, *kxs = jax.random.split(key, 4)
    params = init_params(kp, obs_shape, action_size)
    packed = pack_params(params)

    # B=512: two 256-row tiles (parallel axis -> both v7x TCs busy).
    # B=260: ragged batch; cdiv tiling pads to 272 rows (not 512).
    # B=3:   tiny batch; single 8-row tile + final slice.
    for kx, B in zip(kxs, (512, 260, 3)):
        x = jax.random.normal(kx, (B,) + obs_shape, dtype=jnp.float32)
        q = jax.block_until_ready(qvalue_forward(x, packed, action_size))
        out = QValueOutput(q)
        assert out.q_value.shape == (B, action_size)

        ref_same_math = qvalue_forward_ref_bf16(x, packed, action_size)
        err_bf16 = float(jnp.max(jnp.abs(out.q_value - ref_same_math)))
        assert jnp.allclose(out.q_value, ref_same_math, atol=5e-3, rtol=5e-3), err_bf16

        # bf16 layer-1 contraction => ~5e-2 agreement with the f32 torch math.
        ref_f32 = qvalue_forward_ref_f32(x, params)
        err_f32 = float(jnp.max(jnp.abs(out.q_value - ref_f32)))
        assert jnp.allclose(out.q_value, ref_f32, atol=5e-2, rtol=5e-2), err_f32

    print("KERNEL_OK")
</pallas_src>

<mosaic_0001>
module attributes {stable_mosaic.version = 11 : i64} {
  func.func @_qnet_kernel(%arg0: i32, %arg1: memref<256x2604xf32, #tpu.memory_space<vmem>>, %arg2: memref<2604x32xbf16, #tpu.memory_space<vmem>>, %arg3: memref<1x32xf32, #tpu.memory_space<vmem>>, %arg4: memref<32x32xf32, #tpu.memory_space<vmem>>, %arg5: memref<1x32xf32, #tpu.memory_space<vmem>>, %arg6: memref<32x128xf32, #tpu.memory_space<vmem>>, %arg7: memref<1x128xf32, #tpu.memory_space<vmem>>, %arg8: memref<256x128xf32, #tpu.memory_space<vmem>>) attributes {dimension_semantics = [#tpu.dimension_semantics<parallel>], iteration_bounds = array<i64: 2>, scalar_prefetch = 0 : i64, scratch_operands = 0 : i64, tpu.core_type = #tpu.core_type<tc>, window_params = [{transform_indices = @transform_0, window_bounds = array<i64: 256, 2604>}, {pipeline_mode = #tpu.pipeline_mode<synchronous>, transform_indices = @transform_1, window_bounds = array<i64: 2604, 32>}, {pipeline_mode = #tpu.pipeline_mode<synchronous>, transform_indices = @transform_2, window_bounds = array<i64: 1, 32>}, {pipeline_mode = #tpu.pipeline_mode<synchronous>, transform_indices = @transform_3, window_bounds = array<i64: 32, 32>}, {pipeline_mode = #tpu.pipeline_mode<synchronous>, transform_indices = @transform_4, window_bounds = array<i64: 1, 32>}, {pipeline_mode = #tpu.pipeline_mode<synchronous>, transform_indices = @transform_5, window_bounds = array<i64: 32, 128>}, {pipeline_mode = #tpu.pipeline_mode<synchronous>, transform_indices = @transform_6, window_bounds = array<i64: 1, 128>}, {transform_indices = @transform_7, window_bounds = array<i64: 256, 128>}]} {
    %c0 = arith.constant 0 : index
    %c0_0 = arith.constant 0 : index
    %0 = vector.load %arg1[%c0, %c0_0] : memref<256x2604xf32, #tpu.memory_space<vmem>>, vector<256x2604xf32>
    %1 = arith.truncf %0 : vector<256x2604xf32> to vector<256x2604xbf16>
    %c0_1 = arith.constant 0 : index
    %c0_2 = arith.constant 0 : index
    %2 = vector.load %arg2[%c0_1, %c0_2] : memref<2604x32xbf16, #tpu.memory_space<vmem>>, vector<2604x32xbf16>
    %cst = arith.constant dense<0.000000e+00> : vector<256x32xf32>
    %3 = tpu.matmul %1, %2, %cst {dimension_numbers = #tpu.dot_dimension_numbers<[1], [0], [0], [1], [0, 0, 1, 1], [], []>} : vector<256x2604xbf16>, vector<2604x32xbf16>, vector<256x32xf32> -> vector<256x32xf32>
    %c0_3 = arith.constant 0 : index
    %c0_4 = arith.constant 0 : index
    %4 = vector.load %arg3[%c0_3, %c0_4] : memref<1x32xf32, #tpu.memory_space<vmem>>, vector<1x32xf32>
    %5 = vector.broadcast %4 : vector<1x32xf32> to vector<256x32xf32>
    %6 = arith.addf %3, %5 : vector<256x32xf32>
    %cst_5 = arith.constant 0.000000e+00 : f32
    %7 = vector.broadcast %cst_5 : f32 to vector<256x32xf32>
    %8 = arith.maximumf %6, %7 : vector<256x32xf32>
    %c0_6 = arith.constant 0 : index
    %c0_7 = arith.constant 0 : index
    %9 = vector.load %arg4[%c0_6, %c0_7] : memref<32x32xf32, #tpu.memory_space<vmem>>, vector<32x32xf32>
    %cst_8 = arith.constant dense<0.000000e+00> : vector<256x32xf32>
    %10 = tpu.matmul %8, %9, %cst_8 {dimension_numbers = #tpu.dot_dimension_numbers<[1], [0], [0], [1], [0, 0, 1, 1], [], []>} : vector<256x32xf32>, vector<32x32xf32>, vector<256x32xf32> -> vector<256x32xf32>
    %c0_9 = arith.constant 0 : index
    %c0_10 = arith.constant 0 : index
    %11 = vector.load %arg5[%c0_9, %c0_10] : memref<1x32xf32, #tpu.memory_space<vmem>>, vector<1x32xf32>
    %12 = vector.broadcast %11 : vector<1x32xf32> to vector<256x32xf32>
    %13 = arith.addf %10, %12 : vector<256x32xf32>
    %cst_11 = arith.constant 0.000000e+00 : f32
    %14 = vector.broadcast %cst_11 : f32 to vector<256x32xf32>
    %15 = arith.maximumf %13, %14 : vector<256x32xf32>
    %c0_12 = arith.constant 0 : index
    %c0_13 = arith.constant 0 : index
    %16 = vector.load %arg6[%c0_12, %c0_13] : memref<32x128xf32, #tpu.memory_space<vmem>>, vector<32x128xf32>
    %cst_14 = arith.constant dense<0.000000e+00> : vector<256x128xf32>
    %17 = tpu.matmul %15, %16, %cst_14 {dimension_numbers = #tpu.dot_dimension_numbers<[1], [0], [0], [1], [0, 0, 1, 1], [], []>} : vector<256x32xf32>, vector<32x128xf32>, vector<256x128xf32> -> vector<256x128xf32>
    %c0_15 = arith.constant 0 : index
    %c0_16 = arith.constant 0 : index
    %18 = vector.load %arg7[%c0_15, %c0_16] : memref<1x128xf32, #tpu.memory_space<vmem>>, vector<1x128xf32>
    %19 = vector.broadcast %18 : vector<1x128xf32> to vector<256x128xf32>
    %20 = arith.addf %17, %19 : vector<256x128xf32>
    %c0_17 = arith.constant 0 : index
    %c0_18 = arith.constant 0 : index
    %21 = vector.load %arg8[%c0_17, %c0_18] : memref<256x128xf32, #tpu.memory_space<vmem>>, vector<256x128xf32>
    tpu.vector_store %arg8[%c0_17, %c0_18], %20 {strides = array<i32>} : memref<256x128xf32, #tpu.memory_space<vmem>>, vector<256x128xf32>,
    return
  }
  func.func @transform_0(%arg0: i32) -> (i32, i32) {
    %c0_i32 = arith.constant 0 : i32
    %c0_i32_0 = arith.constant 0 : i32
    return %arg0, %c0_i32 : i32, i32
  }
  func.func @transform_1(%arg0: i32) -> (i32, i32) {
    %c0_i32 = arith.constant 0 : i32
    %c0_i32_0 = arith.constant 0 : i32
    %c0_i32_1 = arith.constant 0 : i32
    return %c0_i32, %c0_i32_0 : i32, i32
  }
  func.func @transform_2(%arg0: i32) -> (i32, i32) {
    %c0_i32 = arith.constant 0 : i32
    %c0_i32_0 = arith.constant 0 : i32
    %c0_i32_1 = arith.constant 0 : i32
    return %c0_i32, %c0_i32_0 : i32, i32
  }
  func.func @transform_3(%arg0: i32) -> (i32, i32) {
    %c0_i32 = arith.constant 0 : i32
    %c0_i32_0 = arith.constant 0 : i32
    %c0_i32_1 = arith.constant 0 : i32
    return %c0_i32, %c0_i32_0 : i32, i32
  }
  func.func @transform_4(%arg0: i32) -> (i32, i32) {
    %c0_i32 = arith.constant 0 : i32
    %c0_i32_0 = arith.constant 0 : i32
    %c0_i32_1 = arith.constant 0 : i32
    return %c0_i32, %c0_i32_0 : i32, i32
  }
  func.func @transform_5(%arg0: i32) -> (i32, i32) {
    %c0_i32 = arith.constant 0 : i32
    %c0_i32_0 = arith.constant 0 : i32
    %c0_i32_1 = arith.constant 0 : i32
    return %c0_i32, %c0_i32_0 : i32, i32
  }
  func.func @transform_6(%arg0: i32) -> (i32, i32) {
    %c0_i32 = arith.constant 0 : i32
    %c0_i32_0 = arith.constant 0 : i32
    %c0_i32_1 = arith.constant 0 : i32
    return %c0_i32, %c0_i32_0 : i32, i32
  }
  func.func @transform_7(%arg0: i32) -> (i32, i32) {
    %c0_i32 = arith.constant 0 : i32
    %c0_i32_0 = arith.constant 0 : i32
    return %arg0, %c0_i32 : i32, i32
  }
}

</mosaic_0001>

<llo_original>
// kernel: qvalue_forward.1
$region0: #{qvalue_forward.1}
  #allocation0 [shape = 'u32[]', space=smem, size = 0x4, offset = 0x4, fixed_abs, tag = 'smem constant byte address 0x4 - core index']
  #allocation1 [shape = 'u32[144,128]{1,0:T(1,128)}', space=vmem, size = 0x12000, scoped, tag = 'internal scratch']
  %s0 = inlined_call_operand.vmem [shape: f32[512,2604], index: 0, kind: input, shape index: {}]
  %s1 = inlined_call_operand.vmem [shape: bf16[2604,32], index: 1, kind: input, shape index: {}]
  %s2 = inlined_call_operand.vmem [shape: f32[1,32], index: 2, kind: input, shape index: {}]
  %s3 = inlined_call_operand.vmem [shape: f32[32,32], index: 3, kind: input, shape index: {}]
  %s4 = inlined_call_operand.vmem [shape: f32[1,32], index: 4, kind: input, shape index: {}]
  %s5 = inlined_call_operand.vmem [shape: f32[32,128], index: 5, kind: input, shape index: {}]
  %s6 = inlined_call_operand.vmem [shape: f32[1,128], index: 6, kind: input, shape index: {}]
  %s7 = inlined_call_operand.vmem [shape: f32[512,128], index: 7, kind: output, shape index: {}]
  %s8 = sld [smem:[#allocation0]]
  $region61: #{qvalue_forward.1} parent=0
    _
  %s10 = ssub.s32 1, %s8
  %s11 = scalar_select 0, %s10, %s8
  loop: start=0, step=1, limit=4
  $region2: #{qvalue_forward.1} parent=0 // loop_pre_header
    _
  $region3: #{qvalue_forward.1} parent=0 // loop_header
    %s13 = sphi 0, %s17
    %p14 = scmp.ge.s32.totalorder %s13, 4
    %s23 = sphi 0, %s25
    %s26 = sphi 0, %s23
    %s27 = sphi 0, %s26
    %s43 = sphi 0, %s27
    %s47 = sphi 0, %s47
    %s49 = sphi 0, %s47
    %s50 = sphi 0, %s49
    %s64 = sphi 0, %s50
    %s68 = sphi 0, %s68
    %s70 = sphi 0, %s68
    %s71 = sphi 0, %s70
    %s85 = sphi 0, %s71
    %s89 = sphi 0, %s89
    %s91 = sphi 0, %s89
    %s92 = sphi 0, %s91
    %s106 = sphi 0, %s92
    %s110 = sphi 0, %s110
    %s112 = sphi 0, %s110
    %s113 = sphi 0, %s112
    %s127 = sphi 0, %s113
    %s131 = sphi 0, %s131
    %s133 = sphi 0, %s131
    %s134 = sphi 0, %s133
    %s148 = sphi 0, %s134
    %s152 = sphi 0, %s152
    %s154 = sphi 0, %s152
    %s155 = sphi 0, %s154
    %s169 = sphi 0, %s155
    %s175 = sphi 0, %s177
    %s178 = sphi 0, %s175
    %s179 = sphi 0, %s178
    %s195 = sphi 0, %s179
  $region4: #{qvalue_forward.1} parent=0 // loop_header_branch
    %16 = sbr.rel (%p14) target = $region8
  $region5: #{qvalue_forward.1} parent=0 // loop_body
    %s18 = ssub.s32 %s13, 1
    %s19 = ssub.s32 %s13, 2
    %s20 = sadd.s32 %s13, 1
    %s21 = ssub.s32 %s13, %s20
    %p22 = scmp.eq.s32.totalorder %s21, 0
    %s24 = sadd.s32 %s23, 1
    %s25 = scalar_select %p22, %s23, %s24
    %p28 = pneg %p22
    %p29 = scmp.eq.s32.totalorder %s13, 1
    %p30 = por %p28, %p29
    %p31 = scmp.ne.s32.totalorder %s23, %s26
    %p32 = scmp.eq.s32.totalorder %s13, 0
    %p33 = por %p31, %p32
    %p34 = scmp.ne.s32.totalorder %s23, %s26
    %p35 = scmp.eq.s32.totalorder %s18, 1
    %p36 = por %p34, %p35
    %p37 = scmp.ne.s32.totalorder %s26, %s27
    %p38 = scmp.eq.s32.totalorder %s18, 0
    %p39 = por %p37, %p38
    %p40 = scmp.ne.s32.totalorder %s26, %s27
    %p41 = scmp.eq.s32.totalorder %s19, 1
    %p42 = por %p40, %p41
    %p44 = scmp.ne.s32.totalorder %s27, %s43
    %p45 = scmp.eq.s32.totalorder %s19, 0
    %p46 = por %p44, %p45
    %s48 = sadd.s32 %s47, 1
    %p51 = scmp.eq.s32.totalorder %s13, 1
    %p52 = scmp.ne.s32.totalorder %s47, %s49
    %p53 = scmp.eq.s32.totalorder %s13, 0
    %p54 = por %p52, %p53
    %p55 = scmp.ne.s32.totalorder %s47, %s49
    %p56 = scmp.eq.s32.totalorder %s18, 1
    %p57 = por %p55, %p56
    %p58 = scmp.ne.s32.totalorder %s49, %s50
    %p59 = scmp.eq.s32.totalorder %s18, 0
    %p60 = por %p58, %p59
    %p61 = scmp.ne.s32.totalorder %s49, %s50
    %p62 = scmp.eq.s32.totalorder %s19, 1
    %p63 = por %p61, %p62
    %p65 = scmp.ne.s32.totalorder %s50, %s64
    %p66 = scmp.eq.s32.totalorder %s19, 0
    %p67 = por %p65, %p66
    %s69 = sadd.s32 %s68, 1
    %p72 = scmp.eq.s32.totalorder %s13, 1
    %p73 = scmp.ne.s32.totalorder %s68, %s70
    %p74 = scmp.eq.s32.totalorder %s13, 0
    %p75 = por %p73, %p74
    %p76 = scmp.ne.s32.totalorder %s68, %s70
    %p77 = scmp.eq.s32.totalorder %s18, 1
    %p78 = por %p76, %p77
    %p79 = scmp.ne.s32.totalorder %s70, %s71
    %p80 = scmp.eq.s32.totalorder %s18, 0
    %p81 = por %p79, %p80
    %p82 = scmp.ne.s32.totalorder %s70, %s71
    %p83 = scmp.eq.s32.totalorder %s19, 1
    %p84 = por %p82, %p83
    %p86 = scmp.ne.s32.totalorder %s71, %s85
    %p87 = scmp.eq.s32.totalorder %s19, 0
    %p88 = por %p86, %p87
    %s90 = sadd.s32 %s89, 1
    %p93 = scmp.eq.s32.totalorder %s13, 1
    %p94 = scmp.ne.s32.totalorder %s89, %s91
    %p95 = scmp.eq.s32.totalorder %s13, 0
    %p96 = por %p94, %p95
    %p97 = scmp.ne.s32.totalorder %s89, %s91
    %p98 = scmp.eq.s32.totalorder %s18, 1
    %p99 = por %p97, %p98
    %p100 = scmp.ne.s32.totalorder %s91, %s92
    %p101 = scmp.eq.s32.totalorder %s18, 0
    %p102 = por %p100, %p101
    %p103 = scmp.ne.s32.totalorder %s91, %s92
    %p104 = scmp.eq.s32.totalorder %s19, 1
    %p105 = por %p103, %p104
    %p107 = scmp.ne.s32.totalorder %s92, %s106
    %p108 = scmp.eq.s32.totalorder %s19, 0
    %p109 = por %p107, %p108
    %s111 = sadd.s32 %s110, 1
    %p114 = scmp.eq.s32.totalorder %s13, 1
    %p115 = scmp.ne.s32.totalorder %s110, %s112
    %p116 = scmp.eq.s32.totalorder %s13, 0
    %p117 = por %p115, %p116
    %p118 = scmp.ne.s32.totalorder %s110, %s112
    %p119 = scmp.eq.s32.totalorder %s18, 1
    %p120 = por %p118, %p119
    %p121 = scmp.ne.s32.totalorder %s112, %s113
    %p122 = scmp.eq.s32.totalorder %s18, 0
    %p123 = por %p121, %p122
    %p124 = scmp.ne.s32.totalorder %s112, %s113
    %p125 = scmp.eq.s32.totalorder %s19, 1
    %p126 = por %p124, %p125
    %p128 = scmp.ne.s32.totalorder %s113, %s127
    %p129 = scmp.eq.s32.totalorder %s19, 0
    %p130 = por %p128, %p129
    %s132 = sadd.s32 %s131, 1
    %p135 = scmp.eq.s32.totalorder %s13, 1
    %p136 = scmp.ne.s32.totalorder %s131, %s133
    %p137 = scmp.eq.s32.totalorder %s13, 0
    %p138 = por %p136, %p137
    %p139 = scmp.ne.s32.totalorder %s131, %s133
    %p140 = scmp.eq.s32.totalorder %s18, 1
    %p141 = por %p139, %p140
    %p142 = scmp.ne.s32.totalorder %s133, %s134
    %p143 = scmp.eq.s32.totalorder %s18, 0
    %p144 = por %p142, %p143
    %p145 = scmp.ne.s32.totalorder %s133, %s134
    %p146 = scmp.eq.s32.totalorder %s19, 1
    %p147 = por %p145, %p146
    %p149 = scmp.ne.s32.totalorder %s134, %s148
    %p150 = scmp.eq.s32.totalorder %s19, 0
    %p151 = por %p149, %p150
    %s153 = sadd.s32 %s152, 1
    %p156 = scmp.eq.s32.totalorder %s13, 1
    %p157 = scmp.ne.s32.totalorder %s152, %s154
    %p158 = scmp.eq.s32.totalorder %s13, 0
    %p159 = por %p157, %p158
    %p160 = scmp.ne.s32.totalorder %s152, %s154
    %p161 = scmp.eq.s32.totalorder %s18, 1
    %p162 = por %p160, %p161
    %p163 = scmp.ne.s32.totalorder %s154, %s155
    %p164 = scmp.eq.s32.totalorder %s18, 0
    %p165 = por %p163, %p164
    %p166 = scmp.ne.s32.totalorder %s154, %s155
    %p167 = scmp.eq.s32.totalorder %s19, 1
    %p168 = por %p166, %p167
    %p170 = scmp.ne.s32.totalorder %s155, %s169
    %p171 = scmp.eq.s32.totalorder %s19, 0
    %p172 = por %p170, %p171
    %s173 = ssub.s32 %s13, %s20
    %p174 = scmp.eq.s32.totalorder %s173, 0
    %s176 = sadd.s32 %s175, 1
    %s177 = scalar_select %p174, %s175, %s176
    %p180 = pneg %p174
    %p181 = scmp.eq.s32.totalorder %s13, 1
    %p182 = por %p180, %p181
    %p183 = scmp.ne.s32.totalorder %s175, %s178
    %p184 = scmp.eq.s32.totalorder %s13, 0
    %p185 = por %p183, %p184
    %p186 = scmp.ne.s32.totalorder %s175, %s178
    %p187 = scmp.eq.s32.totalorder %s18, 1
    %p188 = por %p186, %p187
    %p189 = scmp.ne.s32.totalorder %s178, %s179
    %p190 = scmp.eq.s32.totalorder %s18, 0
    %p191 = por %p189, %p190
    %p192 = scmp.ne.s32.totalorder %s178, %s179
    %p193 = scmp.eq.s32.totalorder %s19, 1
    %p194 = por %p192, %p193
    %p196 = scmp.ne.s32.totalorder %s179, %s195
    %p197 = scmp.eq.s32.totalorder %s19, 0
    %p198 = por %p196, %p197
    %p199 = scmp.le.s32.totalorder 1, %s13
    %p200 = scmp.lt.s32.totalorder %s13, 3
    %p201 = pnand %p199, %p200
    %p202 = pneg %p201
    // Predicated region
    $region9: #{qvalue_forward.1} parent=5 // pred_check
      _
    $region10: #{qvalue_forward.1} parent=5 // pred_check_branch
      %204 = sbr.rel (%p201) target = $region12
    $region11: #{qvalue_forward.1} parent=5 // pred_region
      %s205 = ssub.s32 %s13, 1
      // Predicated region
      $region13: #{qvalue_forward.1} parent=11 // pred_check
        %p206 = pneg %p60
      $region14: #{qvalue_forward.1} parent=11 // pred_check_branch
        %208 = sbr.rel (%p206) target = $region16
      $region15: #{qvalue_forward.1} parent=11 // pred_region
        _
      $region16: #{qvalue_forward.1} parent=11 // pred_fallthru
        _
      // Predicated region
      $region17: #{qvalue_forward.1} parent=11 // pred_check
        %p209 = pneg %p81
      $region18: #{qvalue_forward.1} parent=11 // pred_check_branch
        %211 = sbr.rel (%p209) target = $region20
      $region19: #{qvalue_forward.1} parent=11 // pred_region
        _
      $region20: #{qvalue_forward.1} parent=11 // pred_fallthru
        _
      // Predicated region
      $region21: #{qvalue_forward.1} parent=11 // pred_check
        %p212 = pneg %p102
      $region22: #{qvalue_forward.1} parent=11 // pred_check_branch
        %214 = sbr.rel (%p212) target = $region24
      $region23: #{qvalue_forward.1} parent=11 // pred_region
        _
      $region24: #{qvalue_forward.1} parent=11 // pred_fallthru
        _
      // Predicated region
      $region25: #{qvalue_forward.1} parent=11 // pred_check
        %p215 = pneg %p123
      $region26: #{qvalue_forward.1} parent=11 // pred_check_branch
        %217 = sbr.rel (%p215) target = $region28
      $region27: #{qvalue_forward.1} parent=11 // pred_region
        _
      $region28: #{qvalue_forward.1} parent=11 // pred_fallthru
        _
      // Predicated region
      $region29: #{qvalue_forward.1} parent=11 // pred_check
        %p218 = pneg %p144
      $region30: #{qvalue_forward.1} parent=11 // pred_check_branch
        %220 = sbr.rel (%p218) target = $region32
      $region31: #{qvalue_forward.1} parent=11 // pred_region
        _
      $region32: #{qvalue_forward.1} parent=11 // pred_fallthru
        _
      // Predicated region
      $region33: #{qvalue_forward.1} parent=11 // pred_check
        %p221 = pneg %p165
      $region34: #{qvalue_forward.1} parent=11 // pred_check_branch
        %223 = sbr.rel (%p221) target = $region36
      $region35: #{qvalue_forward.1} parent=11 // pred_region
        _
      $region36: #{qvalue_forward.1} parent=11 // pred_fallthru
        _
    $region12: #{qvalue_forward.1} parent=5 // pred_fallthru
      _
    %p224 = scmp.lt.s32.totalorder %s13, 2
    // Predicated region
    $region37: #{qvalue_forward.1} parent=5 // pred_check
      %p225 = pneg %p224
    $region38: #{qvalue_forward.1} parent=5 // pred_check_branch
      %227 = sbr.rel (%p225) target = $region40
    $region39: #{qvalue_forward.1} parent=5 // pred_region
      // Predicated region
      $region41: #{qvalue_forward.1} parent=39 // pred_check
        %p228 = pneg %p33
      $region42: #{qvalue_forward.1} parent=39 // pred_check_branch
        %230 = sbr.rel (%p228) target = $region44
      $region43: #{qvalue_forward.1} parent=39 // pred_region
        %s231 = smul.u32 32, %s13
        %p232 = scmp.lt.s32.totalorder %s231, 63
        %s233 = scalar_select %p232, %s231, 63
        %s234 = smul.addr %s233, 21
        %s235 = smul.addr %s234, 8
        %s236 = scalar_lea.vmem %s0, %s235
        %s237 = smul.u32 32, %s13
      $region44: #{qvalue_forward.1} parent=39 // pred_fallthru
        _
    $region40: #{qvalue_forward.1} parent=5 // pred_fallthru
      _
    %p238 = scmp.le.s32.totalorder 1, %s13
    %p239 = scmp.lt.s32.totalorder %s13, 3
    %p240 = pnand %p238, %p239
    %p241 = pneg %p240
    // Predicated region
    $region45: #{qvalue_forward.1} parent=5 // pred_check
      _
    $region46: #{qvalue_forward.1} parent=5 // pred_check_branch
      %243 = sbr.rel (%p240) target = $region48
    $region47: #{qvalue_forward.1} parent=5 // pred_region
      %s244 = ssub.s32 %s13, 1
      %s245 = smul.u32 32, %s18
      %p246 = scmp.lt.s32.totalorder %s245, 63
      %s247 = scalar_select %p246, %s245, 63
      %s248 = smul.addr %s247, 21
      %s249 = smul.addr %s248, 8
      %s250 = scalar_lea.vmem %s0, %s249
      %p251 = pneg %p39
      %p252 = pneg %p36
      %p253 = pneg %p60
      %p254 = pneg %p57
      %p255 = pneg %p81
      %p256 = pneg %p78
      %p257 = pneg %p102
      %p258 = pneg %p99
      %p259 = pneg %p123
      %p260 = pneg %p120
      %p261 = pneg %p144
      %p262 = pneg %p141
      %p263 = pneg %p165
      %p264 = pneg %p162
      %p265 = pneg %p191
      %p266 = pneg %p188
      %s267 = smul.u32 32, %s18
      %p268 = scmp.lt.s32.totalorder %s267, 63
      %s269 = scalar_select %p268, %s267, 63
      %s270 = smul.addr %s269, 8
      %s271 = scalar_lea.vmem %s7, %s270
      %s272 = smul.u32 32, %s18
      %p273 = scmp.lt.s32.totalorder %s272, 63
      %s274 = scalar_select %p273, %s272, 63
      %s275 = smul.addr %s274, 21
      %s276 = smul.addr %s275, 8
      %s277 = scalar_lea.vmem %s0, %s276
      %s278 = smul.u32 32, %s18
      %s279 = smul.u32 32, %s18
      %p280 = scmp.lt.s32.totalorder %s279, 63
      %s281 = scalar_select %p280, %s279, 63
      %s282 = smul.addr %s281, 8
      %s283 = scalar_lea.vmem %s7, %s282
      %s284 = smul.u32 32, %s18
      %v286 = vld [vmem:[%s277] sm:$0xff]
      %v287 = vld [vmem:[%s277 + $0x8] sm:$0xff]
      %v288 = vld [vmem:[%s277 + $0x10] sm:$0xff]
      %v289 = vld [vmem:[%s277 + $0x18] sm:$0xff]
      %v290 = vld [vmem:[%s277 + $0x20] sm:$0xff]
      %v291 = vld [vmem:[%s277 + $0x28] sm:$0xff]
      %v292 = vld [vmem:[%s277 + $0x30] sm:$0xff]
      %v293 = vld [vmem:[%s277 + $0x38] sm:$0xff]
      %v294 = vld [vmem:[%s277 + $0x40] sm:$0xff]
      %v295 = vld [vmem:[%s277 + $0x48] sm:$0xff]
      %v296 = vld [vmem:[%s277 + $0x50] sm:$0xff]
      %v297 = vld [vmem:[%s277 + $0x58] sm:$0xff]
      %v298 = vld [vmem:[%s277 + $0x60] sm:$0xff]
      %v299 = vld [vmem:[%s277 + $0x68] sm:$0xff]
      %v300 = vld [vmem:[%s277 + $0x70] sm:$0xff]
      %v301 = vld [vmem:[%s277 + $0x78] sm:$0xff]
      %v302 = vld [vmem:[%s277 + $0x80] sm:$0xff]
      %v303 = vld [vmem:[%s277 + $0x88] sm:$0xff]
      %v304 = vld [vmem:[%s277 + $0x90] sm:$0xff]
      %v305 = vld [vmem:[%s277 + $0x98] sm:$0xff]
      %v306 = vld [vmem:[%s277 + $0xa0] sm:$0xff]
      %v307 = vld [vmem:[%s277 + $0xa8] sm:$0xff]
      %v308 = vld [vmem:[%s277 + $0xb0] sm:$0xff]
      %v309 = vld [vmem:[%s277 + $0xb8] sm:$0xff]
      %v310 = vld [vmem:[%s277 + $0xc0] sm:$0xff]
      %v311 = vld [vmem:[%s277 + $0xc8] sm:$0xff]
      %v312 = vld [vmem:[%s277 + $0xd0] sm:$0xff]
      %v313 = vld [vmem:[%s277 + $0xd8] sm:$0xff]
      %v314 = vld [vmem:[%s277 + $0xe0] sm:$0xff]
      %v315 = vld [vmem:[%s277 + $0xe8] sm:$0xff]
      %v316 = vld [vmem:[%s277 + $0xf0] sm:$0xff]
      %v317 = vld [vmem:[%s277 + $0xf8] sm:$0xff]
      %v318 = vld [vmem:[%s277 + $0x100] sm:$0xff]
      %v319 = vld [vmem:[%s277 + $0x108] sm:$0xff]
      %v320 = vld [vmem:[%s277 + $0x110] sm:$0xff]
      %v321 = vld [vmem:[%s277 + $0x118] sm:$0xff]
      %v322 = vld [vmem:[%s277 + $0x120] sm:$0xff]
      %v323 = vld [vmem:[%s277 + $0x128] sm:$0xff]
      %v324 = vld [vmem:[%s277 + $0x130] sm:$0xff]
      %v325 = vld [vmem:[%s277 + $0x138] sm:$0xff]
      %v326 = vld [vmem:[%s277 + $0x140] sm:$0xff]
      %v327 = vld [vmem:[%s277 + $0x148] sm:$0xff]
      %v328 = vld [vmem:[%s277 + $0x150] sm:$0xff]
      %v329 = vld [vmem:[%s277 + $0x158] sm:$0xff]
      %v330 = vld [vmem:[%s277 + $0x160] sm:$0xff]
      %v331 = vld [vmem:[%s277 + $0x168] sm:$0xff]
      %v332 = vld [vmem:[%s277 + $0x170] sm:$0xff]
      %v333 = vld [vmem:[%s277 + $0x178] sm:$0xff]
      %v334 = vld [vmem:[%s277 + $0x180] sm:$0xff]
      %v335 = vld [vmem:[%s277 + $0x188] sm:$0xff]
      %v336 = vld [vmem:[%s277 + $0x190] sm:$0xff]
      %v337 = vld [vmem:[%s277 + $0x198] sm:$0xff]
      %v338 = vld [vmem:[%s277 + $0x1a0] sm:$0xff]
      %v339 = vld [vmem:[%s277 + $0x1a8] sm:$0xff]
      %v340 = vld [vmem:[%s277 + $0x1b0] sm:$0xff]
      %v341 = vld [vmem:[%s277 + $0x1b8] sm:$0xff]
      %v342 = vld [vmem:[%s277 + $0x1c0] sm:$0xff]
      %v343 = vld [vmem:[%s277 + $0x1c8] sm:$0xff]
      %v344 = vld [vmem:[%s277 + $0x1d0] sm:$0xff]
      %v345 = vld [vmem:[%s277 + $0x1d8] sm:$0xff]
      %v346 = vld [vmem:[%s277 + $0x1e0] sm:$0xff]
      %v347 = vld [vmem:[%s277 + $0x1e8] sm:$0xff]
      %v348 = vld [vmem:[%s277 + $0x1f0] sm:$0xff]
      %v349 = vld [vmem:[%s277 + $0x1f8] sm:$0xff]
      %v350 = vld [vmem:[%s277 + $0x200] sm:$0xff]
      %v351 = vld [vmem:[%s277 + $0x208] sm:$0xff]
      %v352 = vld [vmem:[%s277 + $0x210] sm:$0xff]
      %v353 = vld [vmem:[%s277 + $0x218] sm:$0xff]
      %v354 = vld [vmem:[%s277 + $0x220] sm:$0xff]
      %v355 = vld [vmem:[%s277 + $0x228] sm:$0xff]
      %v356 = vld [vmem:[%s277 + $0x230] sm:$0xff]
      %v357 = vld [vmem:[%s277 + $0x238] sm:$0xff]
      %v358 = vld [vmem:[%s277 + $0x240] sm:$0xff]
      %v359 = vld [vmem:[%s277 + $0x248] sm:$0xff]
      %v360 = vld [vmem:[%s277 + $0x250] sm:$0xff]
      %v361 = vld [vmem:[%s277 + $0x258] sm:$0xff]
      %v362 = vld [vmem:[%s277 + $0x260] sm:$0xff]
      %v363 = vld [vmem:[%s277 + $0x268] sm:$0xff]
      %v364 = vld [vmem:[%s277 + $0x270] sm:$0xff]
      %v365 = vld [vmem:[%s277 + $0x278] sm:$0xff]
      %v366 = vld [vmem:[%s277 + $0x280] sm:$0xff]
      %v367 = vld [vmem:[%s277 + $0x288] sm:$0xff]
      %v368 = vld [vmem:[%s277 + $0x290] sm:$0xff]
      %v369 = vld [vmem:[%s277 + $0x298] sm:$0xff]
      %v370 = vld [vmem:[%s277 + $0x2a0] sm:$0xff]
      %v371 = vld [vmem:[%s277 + $0x2a8] sm:$0xff]
      %v372 = vld [vmem:[%s277 + $0x2b0] sm:$0xff]
      %v373 = vld [vmem:[%s277 + $0x2b8] sm:$0xff]
      %v374 = vld [vmem:[%s277 + $0x2c0] sm:$0xff]
      %v375 = vld [vmem:[%s277 + $0x2c8] sm:$0xff]
      %v376 = vld [vmem:[%s277 + $0x2d0] sm:$0xff]
      %v377 = vld [vmem:[%s277 + $0x2d8] sm:$0xff]
      %v378 = vld [vmem:[%s277 + $0x2e0] sm:$0xff]
      %v379 = vld [vmem:[%s277 + $0x2e8] sm:$0xff]
      %v380 = vld [vmem:[%s277 + $0x2f0] sm:$0xff]
      %v381 = vld [vmem:[%s277 + $0x2f8] sm:$0xff]
      %v382 = vld [vmem:[%s277 + $0x300] sm:$0xff]
      %v383 = vld [vmem:[%s277 + $0x308] sm:$0xff]
      %v384 = vld [vmem:[%s277 + $0x310] sm:$0xff]
      %v385 = vld [vmem:[%s277 + $0x318] sm:$0xff]
      %v386 = vld [vmem:[%s277 + $0x320] sm:$0xff]
      %v387 = vld [vmem:[%s277 + $0x328] sm:$0xff]
      %v388 = vld [vmem:[%s277 + $0x330] sm:$0xff]
      %v389 = vld [vmem:[%s277 + $0x338] sm:$0xff]
      %v390 = vld [vmem:[%s277 + $0x340] sm:$0xff]
      %v391 = vld [vmem:[%s277 + $0x348] sm:$0xff]
      %v392 = vld [vmem:[%s277 + $0x350] sm:$0xff]
      %v393 = vld [vmem:[%s277 + $0x358] sm:$0xff]
      %v394 = vld [vmem:[%s277 + $0x360] sm:$0xff]
      %v395 = vld [vmem:[%s277 + $0x368] sm:$0xff]
      %v396 = vld [vmem:[%s277 + $0x370] sm:$0xff]
      %v397 = vld [vmem:[%s277 + $0x378] sm:$0xff]
      %v398 = vld [vmem:[%s277 + $0x380] sm:$0xff]
      %v399 = vld [vmem:[%s277 + $0x388] sm:$0xff]
      %v400 = vld [vmem:[%s277 + $0x390] sm:$0xff]
      %v401 = vld [vmem:[%s277 + $0x398] sm:$0xff]
      %v402 = vld [vmem:[%s277 + $0x3a0] sm:$0xff]
      %v403 = vld [vmem:[%s277 + $0x3a8] sm:$0xff]
      %v404 = vld [vmem:[%s277 + $0x3b0] sm:$0xff]
      %v405 = vld [vmem:[%s277 + $0x3b8] sm:$0xff]
      %v406 = vld [vmem:[%s277 + $0x3c0] sm:$0xff]
      %v407 = vld [vmem:[%s277 + $0x3c8] sm:$0xff]
      %v408 = vld [vmem:[%s277 + $0x3d0] sm:$0xff]
      %v409 = vld [vmem:[%s277 + $0x3d8] sm:$0xff]
      %v410 = vld [vmem:[%s277 + $0x3e0] sm:$0xff]
      %v411 = vld [vmem:[%s277 + $0x3e8] sm:$0xff]
      %v412 = vld [vmem:[%s277 + $0x3f0] sm:$0xff]
      %v413 = vld [vmem:[%s277 + $0x3f8] sm:$0xff]
      %v414 = vld [vmem:[%s277 + $0x400] sm:$0xff]
      %v415 = vld [vmem:[%s277 + $0x408] sm:$0xff]
      %v416 = vld [vmem:[%s277 + $0x410] sm:$0xff]
      %v417 = vld [vmem:[%s277 + $0x418] sm:$0xff]
      %v418 = vld [vmem:[%s277 + $0x420] sm:$0xff]
      %v419 = vld [vmem:[%s277 + $0x428] sm:$0xff]
      %v420 = vld [vmem:[%s277 + $0x430] sm:$0xff]
      %v421 = vld [vmem:[%s277 + $0x438] sm:$0xff]
      %v422 = vld [vmem:[%s277 + $0x440] sm:$0xff]
      %v423 = vld [vmem:[%s277 + $0x448] sm:$0xff]
      %v424 = vld [vmem:[%s277 + $0x450] sm:$0xff]
      %v425 = vld [vmem:[%s277 + $0x458] sm:$0xff]
      %v426 = vld [vmem:[%s277 + $0x460] sm:$0xff]
      %v427 = vld [vmem:[%s277 + $0x468] sm:$0xff]
      %v428 = vld [vmem:[%s277 + $0x470] sm:$0xff]
      %v429 = vld [vmem:[%s277 + $0x478] sm:$0xff]
      %v430 = vld [vmem:[%s277 + $0x480] sm:$0xff]
      %v431 = vld [vmem:[%s277 + $0x488] sm:$0xff]
      %v432 = vld [vmem:[%s277 + $0x490] sm:$0xff]
      %v433 = vld [vmem:[%s277 + $0x498] sm:$0xff]
      %v434 = vld [vmem:[%s277 + $0x4a0] sm:$0xff]
      %v435 = vld [vmem:[%s277 + $0x4a8] sm:$0xff]
      %v436 = vld [vmem:[%s277 + $0x4b0] sm:$0xff]
      %v437 = vld [vmem:[%s277 + $0x4b8] sm:$0xff]
      %v438 = vld [vmem:[%s277 + $0x4c0] sm:$0xff]
      %v439 = vld [vmem:[%s277 + $0x4c8] sm:$0xff]
      %v440 = vld [vmem:[%s277 + $0x4d0] sm:$0xff]
      %v441 = vld [vmem:[%s277 + $0x4d8] sm:$0xff]
      %v442 = vld [vmem:[%s277 + $0x4e0] sm:$0xff]
      %v443 = vld [vmem:[%s277 + $0x4e8] sm:$0xff]
      %v444 = vld [vmem:[%s277 + $0x4f0] sm:$0xff]
      %v445 = vld [vmem:[%s277 + $0x4f8] sm:$0xff]
      %v446 = vld [vmem:[%s277 + $0x500] sm:$0xff]
      %v447 = vld [vmem:[%s277 + $0x508] sm:$0xff]
      %v448 = vld [vmem:[%s277 + $0x510] sm:$0xff]
      %v449 = vld [vmem:[%s277 + $0x518] sm:$0xff]
      %v450 = vld [vmem:[%s277 + $0x520] sm:$0xff]
      %v451 = vld [vmem:[%s277 + $0x528] sm:$0xff]
      %v452 = vld [vmem:[%s277 + $0x530] sm:$0xff]
      %v453 = vld [vmem:[%s277 + $0x538] sm:$0xff]
      %v454 = vld [vmem:[%s277 + $0x540] sm:$0xff]
      %v455 = vld [vmem:[%s277 + $0x548] sm:$0xff]
      %v456 = vld [vmem:[%s277 + $0x550] sm:$0xff]
      %v457 = vld [vmem:[%s277 + $0x558] sm:$0xff]
      %v458 = vld [vmem:[%s277 + $0x560] sm:$0xff]
      %v459 = vld [vmem:[%s277 + $0x568] sm:$0xff]
      %v460 = vld [vmem:[%s277 + $0x570] sm:$0xff]
      %v461 = vld [vmem:[%s277 + $0x578] sm:$0xff]
      %v462 = vld [vmem:[%s277 + $0x580] sm:$0xff]
      %v463 = vld [vmem:[%s277 + $0x588] sm:$0xff]
      %v464 = vld [vmem:[%s277 + $0x590] sm:$0xff]
      %v465 = vld [vmem:[%s277 + $0x598] sm:$0xff]
      %v466 = vld [vmem:[%s277 + $0x5a0] sm:$0xff]
      %v467 = vld [vmem:[%s277 + $0x5a8] sm:$0xff]
      %v468 = vld [vmem:[%s277 + $0x5b0] sm:$0xff]
      %v469 = vld [vmem:[%s277 + $0x5b8] sm:$0xff]
      %v470 = vld [vmem:[%s277 + $0x5c0] sm:$0xff]
      %v471 = vld [vmem:[%s277 + $0x5c8] sm:$0xff]
      %v472 = vld [vmem:[%s277 + $0x5d0] sm:$0xff]
      %v473 = vld [vmem:[%s277 + $0x5d8] sm:$0xff]
      %v474 = vld [vmem:[%s277 + $0x5e0] sm:$0xff]
      %v475 = vld [vmem:[%s277 + $0x5e8] sm:$0xff]
      %v476 = vld [vmem:[%s277 + $0x5f0] sm:$0xff]
      %v477 = vld [vmem:[%s277 + $0x5f8] sm:$0xff]
      %v478 = vld [vmem:[%s277 + $0x600] sm:$0xff]
      %v479 = vld [vmem:[%s277 + $0x608] sm:$0xff]
      %v480 = vld [vmem:[%s277 + $0x610] sm:$0xff]
      %v481 = vld [vmem:[%s277 + $0x618] sm:$0xff]
      %v482 = vld [vmem:[%s277 + $0x620] sm:$0xff]
      %v483 = vld [vmem:[%s277 + $0x628] sm:$0xff]
      %v484 = vld [vmem:[%s277 + $0x630] sm:$0xff]
      %v485 = vld [vmem:[%s277 + $0x638] sm:$0xff]
      %v486 = vld [vmem:[%s277 + $0x640] sm:$0xff]
      %v487 = vld [vmem:[%s277 + $0x648] sm:$0xff]
      %v488 = vld [vmem:[%s277 + $0x650] sm:$0xff]
      %v489 = vld [vmem:[%s277 + $0x658] sm:$0xff]
      %v490 = vld [vmem:[%s277 + $0x660] sm:$0xff]
      %v491 = vld [vmem:[%s277 + $0x668] sm:$0xff]
      %v492 = vld [vmem:[%s277 + $0x670] sm:$0xff]
      %v493 = vld [vmem:[%s277 + $0x678] sm:$0xff]
      %v494 = vld [vmem:[%s277 + $0x680] sm:$0xff]
      %v495 = vld [vmem:[%s277 + $0x688] sm:$0xff]
      %v496 = vld [vmem:[%s277 + $0x690] sm:$0xff]
      %v497 = vld [vmem:[%s277 + $0x698] sm:$0xff]
      %v498 = vld [vmem:[%s277 + $0x6a0] sm:$0xff]
      %v499 = vld [vmem:[%s277 + $0x6a8] sm:$0xff]
      %v500 = vld [vmem:[%s277 + $0x6b0] sm:$0xff]
      %v501 = vld [vmem:[%s277 + $0x6b8] sm:$0xff]
      %v502 = vld [vmem:[%s277 + $0x6c0] sm:$0xff]
      %v503 = vld [vmem:[%s277 + $0x6c8] sm:$0xff]
      %v504 = vld [vmem:[%s277 + $0x6d0] sm:$0xff]
      %v505 = vld [vmem:[%s277 + $0x6d8] sm:$0xff]
      %v506 = vld [vmem:[%s277 + $0x6e0] sm:$0xff]
      %v507 = vld [vmem:[%s277 + $0x6e8] sm:$0xff]
      %v508 = vld [vmem:[%s277 + $0x6f0] sm:$0xff]
      %v509 = vld [vmem:[%s277 + $0x6f8] sm:$0xff]
      %v510 = vld [vmem:[%s277 + $0x700] sm:$0xff]
      %v511 = vld [vmem:[%s277 + $0x708] sm:$0xff]
      %v512 = vld [vmem:[%s277 + $0x710] sm:$0xff]
      %v513 = vld [vmem:[%s277 + $0x718] sm:$0xff]
      %v514 = vld [vmem:[%s277 + $0x720] sm:$0xff]
      %v515 = vld [vmem:[%s277 + $0x728] sm:$0xff]
      %v516 = vld [vmem:[%s277 + $0x730] sm:$0xff]
      %v517 = vld [vmem:[%s277 + $0x738] sm:$0xff]
      %v518 = vld [vmem:[%s277 + $0x740] sm:$0xff]
      %v519 = vld [vmem:[%s277 + $0x748] sm:$0xff]
      %v520 = vld [vmem:[%s277 + $0x750] sm:$0xff]
      %v521 = vld [vmem:[%s277 + $0x758] sm:$0xff]
      %v522 = vld [vmem:[%s277 + $0x760] sm:$0xff]
      %v523 = vld [vmem:[%s277 + $0x768] sm:$0xff]
      %v524 = vld [vmem:[%s277 + $0x770] sm:$0xff]
      %v525 = vld [vmem:[%s277 + $0x778] sm:$0xff]
      %v526 = vld [vmem:[%s277 + $0x780] sm:$0xff]
      %v527 = vld [vmem:[%s277 + $0x788] sm:$0xff]
      %v528 = vld [vmem:[%s277 + $0x790] sm:$0xff]
      %v529 = vld [vmem:[%s277 + $0x798] sm:$0xff]
      %v530 = vld [vmem:[%s277 + $0x7a0] sm:$0xff]
      %v531 = vld [vmem:[%s277 + $0x7a8] sm:$0xff]
      %v532 = vld [vmem:[%s277 + $0x7b0] sm:$0xff]
      %v533 = vld [vmem:[%s277 + $0x7b8] sm:$0xff]
      %v534 = vld [vmem:[%s277 + $0x7c0] sm:$0xff]
      %v535 = vld [vmem:[%s277 + $0x7c8] sm:$0xff]
      %v536 = vld [vmem:[%s277 + $0x7d0] sm:$0xff]
      %v537 = vld [vmem:[%s277 + $0x7d8] sm:$0xff]
      %v538 = vld [vmem:[%s277 + $0x7e0] sm:$0xff]
      %v539 = vld [vmem:[%s277 + $0x7e8] sm:$0xff]
      %v540 = vld [vmem:[%s277 + $0x7f0] sm:$0xff]
      %v541 = vld [vmem:[%s277 + $0x7f8] sm:$0xff]
      %v542 = vld [vmem:[%s277 + $0x800] sm:$0xff]
      %v543 = vld [vmem:[%s277 + $0x808] sm:$0xff]
      %v544 = vld [vmem:[%s277 + $0x810] sm:$0xff]
      %v545 = vld [vmem:[%s277 + $0x818] sm:$0xff]
      %v546 = vld [vmem:[%s277 + $0x820] sm:$0xff]
      %v547 = vld [vmem:[%s277 + $0x828] sm:$0xff]
      %v548 = vld [vmem:[%s277 + $0x830] sm:$0xff]
      %v549 = vld [vmem:[%s277 + $0x838] sm:$0xff]
      %v550 = vld [vmem:[%s277 + $0x840] sm:$0xff]
      %v551 = vld [vmem:[%s277 + $0x848] sm:$0xff]
      %v552 = vld [vmem:[%s277 + $0x850] sm:$0xff]
      %v553 = vld [vmem:[%s277 + $0x858] sm:$0xff]
      %v554 = vld [vmem:[%s277 + $0x860] sm:$0xff]
      %v555 = vld [vmem:[%s277 + $0x868] sm:$0xff]
      %v556 = vld [vmem:[%s277 + $0x870] sm:$0xff]
      %v557 = vld [vmem:[%s277 + $0x878] sm:$0xff]
      %v558 = vld [vmem:[%s277 + $0x880] sm:$0xff]
      %v559 = vld [vmem:[%s277 + $0x888] sm:$0xff]
      %v560 = vld [vmem:[%s277 + $0x890] sm:$0xff]
      %v561 = vld [vmem:[%s277 + $0x898] sm:$0xff]
      %v562 = vld [vmem:[%s277 + $0x8a0] sm:$0xff]
      %v563 = vld [vmem:[%s277 + $0x8a8] sm:$0xff]
      %v564 = vld [vmem:[%s277 + $0x8b0] sm:$0xff]
      %v565 = vld [vmem:[%s277 + $0x8b8] sm:$0xff]
      %v566 = vld [vmem:[%s277 + $0x8c0] sm:$0xff]
      %v567 = vld [vmem:[%s277 + $0x8c8] sm:$0xff]
      %v568 = vld [vmem:[%s277 + $0x8d0] sm:$0xff]
      %v569 = vld [vmem:[%s277 + $0x8d8] sm:$0xff]
      %v570 = vld [vmem:[%s277 + $0x8e0] sm:$0xff]
      %v571 = vld [vmem:[%s277 + $0x8e8] sm:$0xff]
      %v572 = vld [vmem:[%s277 + $0x8f0] sm:$0xff]
      %v573 = vld [vmem:[%s277 + $0x8f8] sm:$0xff]
      %v574 = vld [vmem:[%s277 + $0x900] sm:$0xff]
      %v575 = vld [vmem:[%s277 + $0x908] sm:$0xff]
      %v576 = vld [vmem:[%s277 + $0x910] sm:$0xff]
      %v577 = vld [vmem:[%s277 + $0x918] sm:$0xff]
      %v578 = vld [vmem:[%s277 + $0x920] sm:$0xff]
      %v579 = vld [vmem:[%s277 + $0x928] sm:$0xff]
      %v580 = vld [vmem:[%s277 + $0x930] sm:$0xff]
      %v581 = vld [vmem:[%s277 + $0x938] sm:$0xff]
      %v582 = vld [vmem:[%s277 + $0x940] sm:$0xff]
      %v583 = vld [vmem:[%s277 + $0x948] sm:$0xff]
      %v584 = vld [vmem:[%s277 + $0x950] sm:$0xff]
      %v585 = vld [vmem:[%s277 + $0x958] sm:$0xff]
      %v586 = vld [vmem:[%s277 + $0x960] sm:$0xff]
      %v587 = vld [vmem:[%s277 + $0x968] sm:$0xff]
      %v588 = vld [vmem:[%s277 + $0x970] sm:$0xff]
      %v589 = vld [vmem:[%s277 + $0x978] sm:$0xff]
      %v590 = vld [vmem:[%s277 + $0x980] sm:$0xff]
      %v591 = vld [vmem:[%s277 + $0x988] sm:$0xff]
      %v592 = vld [vmem:[%s277 + $0x990] sm:$0xff]
      %v593 = vld [vmem:[%s277 + $0x998] sm:$0xff]
      %v594 = vld [vmem:[%s277 + $0x9a0] sm:$0xff]
      %v595 = vld [vmem:[%s277 + $0x9a8] sm:$0xff]
      %v596 = vld [vmem:[%s277 + $0x9b0] sm:$0xff]
      %v597 = vld [vmem:[%s277 + $0x9b8] sm:$0xff]
      %v598 = vld [vmem:[%s277 + $0x9c0] sm:$0xff]
      %v599 = vld [vmem:[%s277 + $0x9c8] sm:$0xff]
      %v600 = vld [vmem:[%s277 + $0x9d0] sm:$0xff]
      %v601 = vld [vmem:[%s277 + $0x9d8] sm:$0xff]
      %v602 = vld [vmem:[%s277 + $0x9e0] sm:$0xff]
      %v603 = vld [vmem:[%s277 + $0x9e8] sm:$0xff]
      %v604 = vld [vmem:[%s277 + $0x9f0] sm:$0xff]
      %v605 = vld [vmem:[%s277 + $0x9f8] sm:$0xff]
      %v606 = vld [vmem:[%s277 + $0xa00] sm:$0xff]
      %v607 = vld [vmem:[%s277 + $0xa08] sm:$0xff]
      %v608 = vld [vmem:[%s277 + $0xa10] sm:$0xff]
      %v609 = vld [vmem:[%s277 + $0xa18] sm:$0xff]
      %v610 = vld [vmem:[%s277 + $0xa20] sm:$0xff]
      %v611 = vld [vmem:[%s277 + $0xa28] sm:$0xff]
      %v612 = vld [vmem:[%s277 + $0xa30] sm:$0xff]
      %v613 = vld [vmem:[%s277 + $0xa38] sm:$0xff]
      %v614 = vld [vmem:[%s277 + $0xa40] sm:$0xff]
      %v615 = vld [vmem:[%s277 + $0xa48] sm:$0xff]
      %v616 = vld [vmem:[%s277 + $0xa50] sm:$0xff]
      %v617 = vld [vmem:[%s277 + $0xa58] sm:$0xff]
      %v618 = vld [vmem:[%s277 + $0xa60] sm:$0xff]
      %v619 = vld [vmem:[%s277 + $0xa68] sm:$0xff]
      %v620 = vld [vmem:[%s277 + $0xa70] sm:$0xff]
      %v621 = vld [vmem:[%s277 + $0xa78] sm:$0xff]
      %v622 = vld [vmem:[%s277 + $0xa80] sm:$0xff]
      %v623 = vld [vmem:[%s277 + $0xa88] sm:$0xff]
      %v624 = vld [vmem:[%s277 + $0xa90] sm:$0xff]
      %v625 = vld [vmem:[%s277 + $0xa98] sm:$0xff]
      %v626 = vld [vmem:[%s277 + $0xaa0] sm:$0xff]
      %v627 = vld [vmem:[%s277 + $0xaa8] sm:$0xff]
      %v628 = vld [vmem:[%s277 + $0xab0] sm:$0xff]
      %v629 = vld [vmem:[%s277 + $0xab8] sm:$0xff]
      %v630 = vld [vmem:[%s277 + $0xac0] sm:$0xff]
      %v631 = vld [vmem:[%s277 + $0xac8] sm:$0xff]
      %v632 = vld [vmem:[%s277 + $0xad0] sm:$0xff]
      %v633 = vld [vmem:[%s277 + $0xad8] sm:$0xff]
      %v634 = vld [vmem:[%s277 + $0xae0] sm:$0xff]
      %v635 = vld [vmem:[%s277 + $0xae8] sm:$0xff]
      %v636 = vld [vmem:[%s277 + $0xaf0] sm:$0xff]
      %v637 = vld [vmem:[%s277 + $0xaf8] sm:$0xff]
      %v638 = vld [vmem:[%s277 + $0xb00] sm:$0xff]
      %v639 = vld [vmem:[%s277 + $0xb08] sm:$0xff]
      %v640 = vld [vmem:[%s277 + $0xb10] sm:$0xff]
      %v641 = vld [vmem:[%s277 + $0xb18] sm:$0xff]
      %v642 = vld [vmem:[%s277 + $0xb20] sm:$0xff]
      %v643 = vld [vmem:[%s277 + $0xb28] sm:$0xff]
      %v644 = vld [vmem:[%s277 + $0xb30] sm:$0xff]
      %v645 = vld [vmem:[%s277 + $0xb38] sm:$0xff]
      %v646 = vld [vmem:[%s277 + $0xb40] sm:$0xff]
      %v647 = vld [vmem:[%s277 + $0xb48] sm:$0xff]
      %v648 = vld [vmem:[%s277 + $0xb50] sm:$0xff]
      %v649 = vld [vmem:[%s277 + $0xb58] sm:$0xff]
      %v650 = vld [vmem:[%s277 + $0xb60] sm:$0xff]
      %v651 = vld [vmem:[%s277 + $0xb68] sm:$0xff]
      %v652 = vld [vmem:[%s277 + $0xb70] sm:$0xff]
      %v653 = vld [vmem:[%s277 + $0xb78] sm:$0xff]
      %v654 = vld [vmem:[%s277 + $0xb80] sm:$0xff]
      %v655 = vld [vmem:[%s277 + $0xb88] sm:$0xff]
      %v656 = vld [vmem:[%s277 + $0xb90] sm:$0xff]
      %v657 = vld [vmem:[%s277 + $0xb98] sm:$0xff]
      %v658 = vld [vmem:[%s277 + $0xba0] sm:$0xff]
      %v659 = vld [vmem:[%s277 + $0xba8] sm:$0xff]
      %v660 = vld [vmem:[%s277 + $0xbb0] sm:$0xff]
      %v661 = vld [vmem:[%s277 + $0xbb8] sm:$0xff]
      %v662 = vld [vmem:[%s277 + $0xbc0] sm:$0xff]
      %v663 = vld [vmem:[%s277 + $0xbc8] sm:$0xff]
      %v664 = vld [vmem:[%s277 + $0xbd0] sm:$0xff]
      %v665 = vld [vmem:[%s277 + $0xbd8] sm:$0xff]
      %v666 = vld [vmem:[%s277 + $0xbe0] sm:$0xff]
      %v667 = vld [vmem:[%s277 + $0xbe8] sm:$0xff]
      %v668 = vld [vmem:[%s277 + $0xbf0] sm:$0xff]
      %v669 = vld [vmem:[%s277 + $0xbf8] sm:$0xff]
      %v670 = vld [vmem:[%s277 + $0xc00] sm:$0xff]
      %v671 = vld [vmem:[%s277 + $0xc08] sm:$0xff]
      %v672 = vld [vmem:[%s277 + $0xc10] sm:$0xff]
      %v673 = vld [vmem:[%s277 + $0xc18] sm:$0xff]
      %v674 = vld [vmem:[%s277 + $0xc20] sm:$0xff]
      %v675 = vld [vmem:[%s277 + $0xc28] sm:$0xff]
      %v676 = vld [vmem:[%s277 + $0xc30] sm:$0xff]
      %v677 = vld [vmem:[%s277 + $0xc38] sm:$0xff]
      %v678 = vld [vmem:[%s277 + $0xc40] sm:$0xff]
      %v679 = vld [vmem:[%s277 + $0xc48] sm:$0xff]
      %v680 = vld [vmem:[%s277 + $0xc50] sm:$0xff]
      %v681 = vld [vmem:[%s277 + $0xc58] sm:$0xff]
      %v682 = vld [vmem:[%s277 + $0xc60] sm:$0xff]
      %v683 = vld [vmem:[%s277 + $0xc68] sm:$0xff]
      %v684 = vld [vmem:[%s277 + $0xc70] sm:$0xff]
      %v685 = vld [vmem:[%s277 + $0xc78] sm:$0xff]
      %v686 = vld [vmem:[%s277 + $0xc80] sm:$0xff]
      %v687 = vld [vmem:[%s277 + $0xc88] sm:$0xff]
      %v688 = vld [vmem:[%s277 + $0xc90] sm:$0xff]
      %v689 = vld [vmem:[%s277 + $0xc98] sm:$0xff]
      %v690 = vld [vmem:[%s277 + $0xca0] sm:$0xff]
      %v691 = vld [vmem:[%s277 + $0xca8] sm:$0xff]
      %v692 = vld [vmem:[%s277 + $0xcb0] sm:$0xff]
      %v693 = vld [vmem:[%s277 + $0xcb8] sm:$0xff]
      %v694 = vld [vmem:[%s277 + $0xcc0] sm:$0xff]
      %v695 = vld [vmem:[%s277 + $0xcc8] sm:$0xff]
      %v696 = vld [vmem:[%s277 + $0xcd0] sm:$0xff]
      %v697 = vld [vmem:[%s277 + $0xcd8] sm:$0xff]
      %v698 = vld [vmem:[%s277 + $0xce0] sm:$0xff]
      %v699 = vld [vmem:[%s277 + $0xce8] sm:$0xff]
      %v700 = vld [vmem:[%s277 + $0xcf0] sm:$0xff]
      %v701 = vld [vmem:[%s277 + $0xcf8] sm:$0xff]
      %v702 = vld [vmem:[%s277 + $0xd00] sm:$0xff]
      %v703 = vld [vmem:[%s277 + $0xd08] sm:$0xff]
      %v704 = vld [vmem:[%s277 + $0xd10] sm:$0xff]
      %v705 = vld [vmem:[%s277 + $0xd18] sm:$0xff]
      %v706 = vld [vmem:[%s277 + $0xd20] sm:$0xff]
      %v707 = vld [vmem:[%s277 + $0xd28] sm:$0xff]
      %v708 = vld [vmem:[%s277 + $0xd30] sm:$0xff]
      %v709 = vld [vmem:[%s277 + $0xd38] sm:$0xff]
      %v710 = vld [vmem:[%s277 + $0xd40] sm:$0xff]
      %v711 = vld [vmem:[%s277 + $0xd48] sm:$0xff]
      %v712 = vld [vmem:[%s277 + $0xd50] sm:$0xff]
      %v713 = vld [vmem:[%s277 + $0xd58] sm:$0xff]
      %v714 = vld [vmem:[%s277 + $0xd60] sm:$0xff]
      %v715 = vld [vmem:[%s277 + $0xd68] sm:$0xff]
      %v716 = vld [vmem:[%s277 + $0xd70] sm:$0xff]
      %v717 = vld [vmem:[%s277 + $0xd78] sm:$0xff]
      %v718 = vld [vmem:[%s277 + $0xd80] sm:$0xff]
      %v719 = vld [vmem:[%s277 + $0xd88] sm:$0xff]
      %v720 = vld [vmem:[%s277 + $0xd90] sm:$0xff]
      %v721 = vld [vmem:[%s277 + $0xd98] sm:$0xff]
      %v722 = vld [vmem:[%s277 + $0xda0] sm:$0xff]
      %v723 = vld [vmem:[%s277 + $0xda8] sm:$0xff]
      %v724 = vld [vmem:[%s277 + $0xdb0] sm:$0xff]
      %v725 = vld [vmem:[%s277 + $0xdb8] sm:$0xff]
      %v726 = vld [vmem:[%s277 + $0xdc0] sm:$0xff]
      %v727 = vld [vmem:[%s277 + $0xdc8] sm:$0xff]
      %v728 = vld [vmem:[%s277 + $0xdd0] sm:$0xff]
      %v729 = vld [vmem:[%s277 + $0xdd8] sm:$0xff]
      %v730 = vld [vmem:[%s277 + $0xde0] sm:$0xff]
      %v731 = vld [vmem:[%s277 + $0xde8] sm:$0xff]
      %v732 = vld [vmem:[%s277 + $0xdf0] sm:$0xff]
      %v733 = vld [vmem:[%s277 + $0xdf8] sm:$0xff]
      %v734 = vld [vmem:[%s277 + $0xe00] sm:$0xff]
      %v735 = vld [vmem:[%s277 + $0xe08] sm:$0xff]
      %v736 = vld [vmem:[%s277 + $0xe10] sm:$0xff]
      %v737 = vld [vmem:[%s277 + $0xe18] sm:$0xff]
      %v738 = vld [vmem:[%s277 + $0xe20] sm:$0xff]
      %v739 = vld [vmem:[%s277 + $0xe28] sm:$0xff]
      %v740 = vld [vmem:[%s277 + $0xe30] sm:$0xff]
      %v741 = vld [vmem:[%s277 + $0xe38] sm:$0xff]
      %v742 = vld [vmem:[%s277 + $0xe40] sm:$0xff]
      %v743 = vld [vmem:[%s277 + $0xe48] sm:$0xff]
      %v744 = vld [vmem:[%s277 + $0xe50] sm:$0xff]
      %v745 = vld [vmem:[%s277 + $0xe58] sm:$0xff]
      %v746 = vld [vmem:[%s277 + $0xe60] sm:$0xff]
      %v747 = vld [vmem:[%s277 + $0xe68] sm:$0xff]
      %v748 = vld [vmem:[%s277 + $0xe70] sm:$0xff]
      %v749 = vld [vmem:[%s277 + $0xe78] sm:$0xff]
      %v750 = vld [vmem:[%s277 + $0xe80] sm:$0xff]
      %v751 = vld [vmem:[%s277 + $0xe88] sm:$0xff]
      %v752 = vld [vmem:[%s277 + $0xe90] sm:$0xff]
      %v753 = vld [vmem:[%s277 + $0xe98] sm:$0xff]
      %v754 = vld [vmem:[%s277 + $0xea0] sm:$0xff]
      %v755 = vld [vmem:[%s277 + $0xea8] sm:$0xff]
      %v756 = vld [vmem:[%s277 + $0xeb0] sm:$0xff]
      %v757 = vld [vmem:[%s277 + $0xeb8] sm:$0xff]
      %v758 = vld [vmem:[%s277 + $0xec0] sm:$0xff]
      %v759 = vld [vmem:[%s277 + $0xec8] sm:$0xff]
      %v760 = vld [vmem:[%s277 + $0xed0] sm:$0xff]
      %v761 = vld [vmem:[%s277 + $0xed8] sm:$0xff]
      %v762 = vld [vmem:[%s277 + $0xee0] sm:$0xff]
      %v763 = vld [vmem:[%s277 + $0xee8] sm:$0xff]
      %v764 = vld [vmem:[%s277 + $0xef0] sm:$0xff]
      %v765 = vld [vmem:[%s277 + $0xef8] sm:$0xff]
      %v766 = vld [vmem:[%s277 + $0xf00] sm:$0xff]
      %v767 = vld [vmem:[%s277 + $0xf08] sm:$0xff]
      %v768 = vld [vmem:[%s277 + $0xf10] sm:$0xff]
      %v769 = vld [vmem:[%s277 + $0xf18] sm:$0xff]
      %v770 = vld [vmem:[%s277 + $0xf20] sm:$0xff]
      %v771 = vld [vmem:[%s277 + $0xf28] sm:$0xff]
      %v772 = vld [vmem:[%s277 + $0xf30] sm:$0xff]
      %v773 = vld [vmem:[%s277 + $0xf38] sm:$0xff]
      %v774 = vld [vmem:[%s277 + $0xf40] sm:$0xff]
      %v775 = vld [vmem:[%s277 + $0xf48] sm:$0xff]
      %v776 = vld [vmem:[%s277 + $0xf50] sm:$0xff]
      %v777 = vld [vmem:[%s277 + $0xf58] sm:$0xff]
      %v778 = vld [vmem:[%s277 + $0xf60] sm:$0xff]
      %v779 = vld [vmem:[%s277 + $0xf68] sm:$0xff]
      %v780 = vld [vmem:[%s277 + $0xf70] sm:$0xff]
      %v781 = vld [vmem:[%s277 + $0xf78] sm:$0xff]
      %v782 = vld [vmem:[%s277 + $0xf80] sm:$0xff]
      %v783 = vld [vmem:[%s277 + $0xf88] sm:$0xff]
      %v784 = vld [vmem:[%s277 + $0xf90] sm:$0xff]
      %v785 = vld [vmem:[%s277 + $0xf98] sm:$0xff]
      %v786 = vld [vmem:[%s277 + $0xfa0] sm:$0xff]
      %v787 = vld [vmem:[%s277 + $0xfa8] sm:$0xff]
      %v788 = vld [vmem:[%s277 + $0xfb0] sm:$0xff]
      %v789 = vld [vmem:[%s277 + $0xfb8] sm:$0xff]
      %v790 = vld [vmem:[%s277 + $0xfc0] sm:$0xff]
      %v791 = vld [vmem:[%s277 + $0xfc8] sm:$0xff]
      %v792 = vld [vmem:[%s277 + $0xfd0] sm:$0xff]
      %v793 = vld [vmem:[%s277 + $0xfd8] sm:$0xff]
      %v794 = vld [vmem:[%s277 + $0xfe0] sm:$0xff]
      %v795 = vld [vmem:[%s277 + $0xfe8] sm:$0xff]
      %v796 = vld [vmem:[%s277 + $0xff0] sm:$0xff]
      %v797 = vld [vmem:[%s277 + $0xff8] sm:$0xff]
      %v798 = vld [vmem:[%s277 + $0x1000] sm:$0xff]
      %v799 = vld [vmem:[%s277 + $0x1008] sm:$0xff]
      %v800 = vld [vmem:[%s277 + $0x1010] sm:$0xff]
      %v801 = vld [vmem:[%s277 + $0x1018] sm:$0xff]
      %v802 = vld [vmem:[%s277 + $0x1020] sm:$0xff]
      %v803 = vld [vmem:[%s277 + $0x1028] sm:$0xff]
      %v804 = vld [vmem:[%s277 + $0x1030] sm:$0xff]
      %v805 = vld [vmem:[%s277 + $0x1038] sm:$0xff]
      %v806 = vld [vmem:[%s277 + $0x1040] sm:$0xff]
      %v807 = vld [vmem:[%s277 + $0x1048] sm:$0xff]
      %v808 = vld [vmem:[%s277 + $0x1050] sm:$0xff]
      %v809 = vld [vmem:[%s277 + $0x1058] sm:$0xff]
      %v810 = vld [vmem:[%s277 + $0x1060] sm:$0xff]
      %v811 = vld [vmem:[%s277 + $0x1068] sm:$0xff]
      %v812 = vld [vmem:[%s277 + $0x1070] sm:$0xff]
      %v813 = vld [vmem:[%s277 + $0x1078] sm:$0xff]
      %v814 = vld [vmem:[%s277 + $0x1080] sm:$0xff]
      %v815 = vld [vmem:[%s277 + $0x1088] sm:$0xff]
      %v816 = vld [vmem:[%s277 + $0x1090] sm:$0xff]
      %v817 = vld [vmem:[%s277 + $0x1098] sm:$0xff]
      %v818 = vld [vmem:[%s277 + $0x10a0] sm:$0xff]
      %v819 = vld [vmem:[%s277 + $0x10a8] sm:$0xff]
      %v820 = vld [vmem:[%s277 + $0x10b0] sm:$0xff]
      %v821 = vld [vmem:[%s277 + $0x10b8] sm:$0xff]
      %v822 = vld [vmem:[%s277 + $0x10c0] sm:$0xff]
      %v823 = vld [vmem:[%s277 + $0x10c8] sm:$0xff]
      %v824 = vld [vmem:[%s277 + $0x10d0] sm:$0xff]
      %v825 = vld [vmem:[%s277 + $0x10d8] sm:$0xff]
      %v826 = vld [vmem:[%s277 + $0x10e0] sm:$0xff]
      %v827 = vld [vmem:[%s277 + $0x10e8] sm:$0xff]
      %v828 = vld [vmem:[%s277 + $0x10f0] sm:$0xff]
      %v829 = vld [vmem:[%s277 + $0x10f8] sm:$0xff]
      %v830 = vld [vmem:[%s277 + $0x1100] sm:$0xff]
      %v831 = vld [vmem:[%s277 + $0x1108] sm:$0xff]
      %v832 = vld [vmem:[%s277 + $0x1110] sm:$0xff]
      %v833 = vld [vmem:[%s277 + $0x1118] sm:$0xff]
      %v834 = vld [vmem:[%s277 + $0x1120] sm:$0xff]
      %v835 = vld [vmem:[%s277 + $0x1128] sm:$0xff]
      %v836 = vld [vmem:[%s277 + $0x1130] sm:$0xff]
      %v837 = vld [vmem:[%s277 + $0x1138] sm:$0xff]
      %v838 = vld [vmem:[%s277 + $0x1140] sm:$0xff]
      %v839 = vld [vmem:[%s277 + $0x1148] sm:$0xff]
      %v840 = vld [vmem:[%s277 + $0x1150] sm:$0xff]
      %v841 = vld [vmem:[%s277 + $0x1158] sm:$0xff]
      %v842 = vld [vmem:[%s277 + $0x1160] sm:$0xff]
      %v843 = vld [vmem:[%s277 + $0x1168] sm:$0xff]
      %v844 = vld [vmem:[%s277 + $0x1170] sm:$0xff]
      %v845 = vld [vmem:[%s277 + $0x1178] sm:$0xff]
      %v846 = vld [vmem:[%s277 + $0x1180] sm:$0xff]
      %v847 = vld [vmem:[%s277 + $0x1188] sm:$0xff]
      %v848 = vld [vmem:[%s277 + $0x1190] sm:$0xff]
      %v849 = vld [vmem:[%s277 + $0x1198] sm:$0xff]
      %v850 = vld [vmem:[%s277 + $0x11a0] sm:$0xff]
      %v851 = vld [vmem:[%s277 + $0x11a8] sm:$0xff]
      %v852 = vld [vmem:[%s277 + $0x11b0] sm:$0xff]
      %v853 = vld [vmem:[%s277 + $0x11b8] sm:$0xff]
      %v854 = vld [vmem:[%s277 + $0x11c0] sm:$0xff]
      %v855 = vld [vmem:[%s277 + $0x11c8] sm:$0xff]
      %v856 = vld [vmem:[%s277 + $0x11d0] sm:$0xff]
      %v857 = vld [vmem:[%s277 + $0x11d8] sm:$0xff]
      %v858 = vld [vmem:[%s277 + $0x11e0] sm:$0xff]
      %v859 = vld [vmem:[%s277 + $0x11e8] sm:$0xff]
      %v860 = vld [vmem:[%s277 + $0x11f0] sm:$0xff]
      %v861 = vld [vmem:[%s277 + $0x11f8] sm:$0xff]
      %v862 = vld [vmem:[%s277 + $0x1200] sm:$0xff]
      %v863 = vld [vmem:[%s277 + $0x1208] sm:$0xff]
      %v864 = vld [vmem:[%s277 + $0x1210] sm:$0xff]
      %v865 = vld [vmem:[%s277 + $0x1218] sm:$0xff]
      %v866 = vld [vmem:[%s277 + $0x1220] sm:$0xff]
      %v867 = vld [vmem:[%s277 + $0x1228] sm:$0xff]
      %v868 = vld [vmem:[%s277 + $0x1230] sm:$0xff]
      %v869 = vld [vmem:[%s277 + $0x1238] sm:$0xff]
      %v870 = vld [vmem:[%s277 + $0x1240] sm:$0xff]
      %v871 = vld [vmem:[%s277 + $0x1248] sm:$0xff]
      %v872 = vld [vmem:[%s277 + $0x1250] sm:$0xff]
      %v873 = vld [vmem:[%s277 + $0x1258] sm:$0xff]
      %v874 = vld [vmem:[%s277 + $0x1260] sm:$0xff]
      %v875 = vld [vmem:[%s277 + $0x1268] sm:$0xff]
      %v876 = vld [vmem:[%s277 + $0x1270] sm:$0xff]
      %v877 = vld [vmem:[%s277 + $0x1278] sm:$0xff]
      %v878 = vld [vmem:[%s277 + $0x1280] sm:$0xff]
      %v879 = vld [vmem:[%s277 + $0x1288] sm:$0xff]
      %v880 = vld [vmem:[%s277 + $0x1290] sm:$0xff]
      %v881 = vld [vmem:[%s277 + $0x1298] sm:$0xff]
      %v882 = vld [vmem:[%s277 + $0x12a0] sm:$0xff]
      %v883 = vld [vmem:[%s277 + $0x12a8] sm:$0xff]
      %v884 = vld [vmem:[%s277 + $0x12b0] sm:$0xff]
      %v885 = vld [vmem:[%s277 + $0x12b8] sm:$0xff]
      %v886 = vld [vmem:[%s277 + $0x12c0] sm:$0xff]
      %v887 = vld [vmem:[%s277 + $0x12c8] sm:$0xff]
      %v888 = vld [vmem:[%s277 + $0x12d0] sm:$0xff]
      %v889 = vld [vmem:[%s277 + $0x12d8] sm:$0xff]
      %v890 = vld [vmem:[%s277 + $0x12e0] sm:$0xff]
      %v891 = vld [vmem:[%s277 + $0x12e8] sm:$0xff]
      %v892 = vld [vmem:[%s277 + $0x12f0] sm:$0xff]
      %v893 = vld [vmem:[%s277 + $0x12f8] sm:$0xff]
      %v894 = vld [vmem:[%s277 + $0x1300] sm:$0xff]
      %v895 = vld [vmem:[%s277 + $0x1308] sm:$0xff]
      %v896 = vld [vmem:[%s277 + $0x1310] sm:$0xff]
      %v897 = vld [vmem:[%s277 + $0x1318] sm:$0xff]
      %v898 = vld [vmem:[%s277 + $0x1320] sm:$0xff]
      %v899 = vld [vmem:[%s277 + $0x1328] sm:$0xff]
      %v900 = vld [vmem:[%s277 + $0x1330] sm:$0xff]
      %v901 = vld [vmem:[%s277 + $0x1338] sm:$0xff]
      %v902 = vld [vmem:[%s277 + $0x1340] sm:$0xff]
      %v903 = vld [vmem:[%s277 + $0x1348] sm:$0xff]
      %v904 = vld [vmem:[%s277 + $0x1350] sm:$0xff]
      %v905 = vld [vmem:[%s277 + $0x1358] sm:$0xff]
      %v906 = vld [vmem:[%s277 + $0x1360] sm:$0xff]
      %v907 = vld [vmem:[%s277 + $0x1368] sm:$0xff]
      %v908 = vld [vmem:[%s277 + $0x1370] sm:$0xff]
      %v909 = vld [vmem:[%s277 + $0x1378] sm:$0xff]
      %v910 = vld [vmem:[%s277 + $0x1380] sm:$0xff]
      %v911 = vld [vmem:[%s277 + $0x1388] sm:$0xff]
      %v912 = vld [vmem:[%s277 + $0x1390] sm:$0xff]
      %v913 = vld [vmem:[%s277 + $0x1398] sm:$0xff]
      %v914 = vld [vmem:[%s277 + $0x13a0] sm:$0xff]
      %v915 = vld [vmem:[%s277 + $0x13a8] sm:$0xff]
      %v916 = vld [vmem:[%s277 + $0x13b0] sm:$0xff]
      %v917 = vld [vmem:[%s277 + $0x13b8] sm:$0xff]
      %v918 = vld [vmem:[%s277 + $0x13c0] sm:$0xff]
      %v919 = vld [vmem:[%s277 + $0x13c8] sm:$0xff]
      %v920 = vld [vmem:[%s277 + $0x13d0] sm:$0xff]
      %v921 = vld [vmem:[%s277 + $0x13d8] sm:$0xff]
      %v922 = vld [vmem:[%s277 + $0x13e0] sm:$0xff]
      %v923 = vld [vmem:[%s277 + $0x13e8] sm:$0xff]
      %v924 = vld [vmem:[%s277 + $0x13f0] sm:$0xff]
      %v925 = vld [vmem:[%s277 + $0x13f8] sm:$0xff]
      %v926 = vld [vmem:[%s277 + $0x1400] sm:$0xff]
      %v927 = vld [vmem:[%s277 + $0x1408] sm:$0xff]
      %v928 = vld [vmem:[%s277 + $0x1410] sm:$0xff]
      %v929 = vld [vmem:[%s277 + $0x1418] sm:$0xff]
      %v930 = vld [vmem:[%s277 + $0x1420] sm:$0xff]
      %v931 = vld [vmem:[%s277 + $0x1428] sm:$0xff]
      %v932 = vld [vmem:[%s277 + $0x1430] sm:$0xff]
      %v933 = vld [vmem:[%s277 + $0x1438] sm:$0xff]
      %v934 = vld [vmem:[%s277 + $0x1440] sm:$0xff]
      %v935 = vld [vmem:[%s277 + $0x1448] sm:$0xff]
      %v936 = vld [vmem:[%s277 + $0x1450] sm:$0xff]
      %v937 = vld [vmem:[%s277 + $0x1458] sm:$0xff]
      %v938 = vld [vmem:[%s277 + $0x1460] sm:$0xff]
      %v939 = vld [vmem:[%s277 + $0x1468] sm:$0xff]
      %v940 = vld [vmem:[%s277 + $0x1470] sm:$0xff]
      %v941 = vld [vmem:[%s277 + $0x1478] sm:$0xff]
      %v942 = vld [vmem:[%s277 + $0x1480] sm:$0xff]
      %v943 = vld [vmem:[%s277 + $0x1488] sm:$0xff]
      %v944 = vld [vmem:[%s277 + $0x1490] sm:$0xff]
      %v945 = vld [vmem:[%s277 + $0x1498] sm:$0xff]
      %v946 = vld [vmem:[%s277 + $0x14a0] sm:$0xff]
      %v947 = vld [vmem:[%s277 + $0x14a8] sm:$0xff]
      %v948 = vld [vmem:[%s277 + $0x14b0] sm:$0xff]
      %v949 = vld [vmem:[%s277 + $0x14b8] sm:$0xff]
      %v950 = vld [vmem:[%s277 + $0x14c0] sm:$0xff]
      %v951 = vld [vmem:[%s277 + $0x14c8] sm:$0xff]
      %v952 = vld [vmem:[%s277 + $0x14d0] sm:$0xff]
      %v953 = vld [vmem:[%s277 + $0x14d8] sm:$0xff]
      %v954 = vld [vmem:[%s277 + $0x14e0] sm:$0xff]
      %v955 = vld [vmem:[%s277 + $0x14e8] sm:$0xff]
      %v956 = vld [vmem:[%s277 + $0x14f0] sm:$0xff]
      %v957 = vld [vmem:[%s277 + $0x14f8] sm:$0xff]
      %v958 = vpack.c.bf16 %v307, %v286
      %v959 = vpack.c.bf16 %v308, %v287
      %v960 = vpack.c.bf16 %v309, %v288
      %v961 = vpack.c.bf16 %v310, %v289
      %v962 = vpack.c.bf16 %v311, %v290
      %v963 = vpack.c.bf16 %v312, %v291
      %v964 = vpack.c.bf16 %v313, %v292
      %v965 = vpack.c.bf16 %v314, %v293
      %v966 = vpack.c.bf16 %v315, %v294
      %v967 = vpack.c.bf16 %v316, %v295
      %v968 = vpack.c.bf16 %v317, %v296
      %v969 = vpack.c.bf16 %v318, %v297
      %v970 = vpack.c.bf16 %v319, %v298
      %v971 = vpack.c.bf16 %v320, %v299
      %v972 = vpack.c.bf16 %v321, %v300
      %v973 = vpack.c.bf16 %v322, %v301
      %v974 = vpack.c.bf16 %v323, %v302
      %v975 = vpack.c.bf16 %v324, %v303
      %v976 = vpack.c.bf16 %v325, %v304
      %v977 = vpack.c.bf16 %v326, %v305
      %v978 = vpack.c.bf16 %v327, %v306
      %v979 = vpack.c.bf16 %v349, %v328
      %v980 = vpack.c.bf16 %v350, %v329
      %v981 = vpack.c.bf16 %v351, %v330
      %v982 = vpack.c.bf16 %v352, %v331
      %v983 = vpack.c.bf16 %v353, %v332
      %v984 = vpack.c.bf16 %v354, %v333
      %v985 = vpack.c.bf16 %v355, %v334
      %v986 = vpack.c.bf16 %v356, %v335
      %v987 = vpack.c.bf16 %v357, %v336
      %v988 = vpack.c.bf16 %v358, %v337
      %v989 = vpack.c.bf16 %v359, %v338
      %v990 = vpack.c.bf16 %v360, %v339
      %v991 = vpack.c.bf16 %v361, %v340
      %v992 = vpack.c.bf16 %v362, %v341
      %v993 = vpack.c.bf16 %v363, %v342
      %v994 = vpack.c.bf16 %v364, %v343
      %v995 = vpack.c.bf16 %v365, %v344
      %v996 = vpack.c.bf16 %v366, %v345
      %v997 = vpack.c.bf16 %v367, %v346
      %v998 = vpack.c.bf16 %v368, %v347
      %v999 = vpack.c.bf16 %v369, %v348
      %v1000 = vpack.c.bf16 %v391, %v370
      %v1001 = vpack.c.bf16 %v392, %v371
      %v1002 = vpack.c.bf16 %v393, %v372
      %v1003 = vpack.c.bf16 %v394, %v373
      %v1004 = vpack.c.bf16 %v395, %v374
      %v1005 = vpack.c.bf16 %v396, %v375
      %v1006 = vpack.c.bf16 %v397, %v376
      %v1007 = vpack.c.bf16 %v398, %v377
      %v1008 = vpack.c.bf16 %v399, %v378
      %v1009 = vpack.c.bf16 %v400, %v379
      %v1010 = vpack.c.bf16 %v401, %v380
      %v1011 = vpack.c.bf16 %v402, %v381
      %v1012 = vpack.c.bf16 %v403, %v382
      %v1013 = vpack.c.bf16 %v404, %v383
      %v1014 = vpack.c.bf16 %v405, %v384
      %v1015 = vpack.c.bf16 %v406, %v385
      %v1016 = vpack.c.bf16 %v407, %v386
      %v1017 = vpack.c.bf16 %v408, %v387
      %v1018 = vpack.c.bf16 %v409, %v388
      %v1019 = vpack.c.bf16 %v410, %v389
      %v1020 = vpack.c.bf16 %v411, %v390
      %v1021 = vpack.c.bf16 %v433, %v412
      %v1022 = vpack.c.bf16 %v434, %v413
      %v1023 = vpack.c.bf16 %v435, %v414
      %v1024 = vpack.c.bf16 %v436, %v415
      %v1025 = vpack.c.bf16 %v437, %v416
      %v1026 = vpack.c.bf16 %v438, %v417
      %v1027 = vpack.c.bf16 %v439, %v418
      %v1028 = vpack.c.bf16 %v440, %v419
      %v1029 = vpack.c.bf16 %v441, %v420
      %v1030 = vpack.c.bf16 %v442, %v421
      %v1031 = vpack.c.bf16 %v443, %v422
      %v1032 = vpack.c.bf16 %v444, %v423
      %v1033 = vpack.c.bf16 %v445, %v424
      %v1034 = vpack.c.bf16 %v446, %v425
      %v1035 = vpack.c.bf16 %v447, %v426
      %v1036 = vpack.c.bf16 %v448, %v427
      %v1037 = vpack.c.bf16 %v449, %v428
      %v1038 = vpack.c.bf16 %v450, %v429
      %v1039 = vpack.c.bf16 %v451, %v430
      %v1040 = vpack.c.bf16 %v452, %v431
      %v1041 = vpack.c.bf16 %v453, %v432
      %v1042 = vpack.c.bf16 %v475, %v454
      %v1043 = vpack.c.bf16 %v476, %v455
      %v1044 = vpack.c.bf16 %v477, %v456
      %v1045 = vpack.c.bf16 %v478, %v457
      %v1046 = vpack.c.bf16 %v479, %v458
      %v1047 = vpack.c.bf16 %v480, %v459
      %v1048 = vpack.c.bf16 %v481, %v460
      %v1049 = vpack.c.bf16 %v482, %v461
      %v1050 = vpack.c.bf16 %v483, %v462
      %v1051 = vpack.c.bf16 %v484, %v463
      %v1052 = vpack.c.bf16 %v485, %v464
      %v1053 = vpack.c.bf16 %v486, %v465
      %v1054 = vpack.c.bf16 %v487, %v466
      %v1055 = vpack.c.bf16 %v488, %v467
      %v1056 = vpack.c.bf16 %v489, %v468
      %v1057 = vpack.c.bf16 %v490, %v469
      %v1058 = vpack.c.bf16 %v491, %v470
      %v1059 = vpack.c.bf16 %v492, %v471
      %v1060 = vpack.c.bf16 %v493, %v472
      %v1061 = vpack.c.bf16 %v494, %v473
      %v1062 = vpack.c.bf16 %v495, %v474
      %v1063 = vpack.c.bf16 %v517, %v496
      %v1064 = vpack.c.bf16 %v518, %v497
      %v1065 = vpack.c.bf16 %v519, %v498
      %v1066 = vpack.c.bf16 %v520, %v499
      %v1067 = vpack.c.bf16 %v521, %v500
      %v1068 = vpack.c.bf16 %v522, %v501
      %v1069 = vpack.c.bf16 %v523, %v502
      %v1070 = vpack.c.bf16 %v524, %v503
      %v1071 = vpack.c.bf16 %v525, %v504
      %v1072 = vpack.c.bf16 %v526, %v505
      %v1073 = vpack.c.bf16 %v527, %v506
      %v1074 = vpack.c.bf16 %v528, %v507
      %v1075 = vpack.c.bf16 %v529, %v508
      %v1076 = vpack.c.bf16 %v530, %v509
      %v1077 = vpack.c.bf16 %v531, %v510
      %v1078 = vpack.c.bf16 %v532, %v511
      %v1079 = vpack.c.bf16 %v533, %v512
      %v1080 = vpack.c.bf16 %v534, %v513
      %v1081 = vpack.c.bf16 %v535, %v514
      %v1082 = vpack.c.bf16 %v536, %v515
      %v1083 = vpack.c.bf16 %v537, %v516
      %v1084 = vpack.c.bf16 %v559, %v538
      %v1085 = vpack.c.bf16 %v560, %v539
      %v1086 = vpack.c.bf16 %v561, %v540
      %v1087 = vpack.c.bf16 %v562, %v541
      %v1088 = vpack.c.bf16 %v563, %v542
      %v1089 = vpack.c.bf16 %v564, %v543
      %v1090 = vpack.c.bf16 %v565, %v544
      %v1091 = vpack.c.bf16 %v566, %v545
      %v1092 = vpack.c.bf16 %v567, %v546
      %v1093 = vpack.c.bf16 %v568, %v547
      %v1094 = vpack.c.bf16 %v569, %v548
      %v1095 = vpack.c.bf16 %v570, %v549
      %v1096 = vpack.c.bf16 %v571, %v550
      %v1097 = vpack.c.bf16 %v572, %v551
      %v1098 = vpack.c.bf16 %v573, %v552
      %v1099 = vpack.c.bf16 %v574, %v553
      %v1100 = vpack.c.bf16 %v575, %v554
      %v1101 = vpack.c.bf16 %v576, %v555
      %v1102 = vpack.c.bf16 %v577, %v556
      %v1103 = vpack.c.bf16 %v578, %v557
      %v1104 = vpack.c.bf16 %v579, %v558
      %v1105 = vpack.c.bf16 %v601, %v580
      %v1106 = vpack.c.bf16 %v602, %v581
      %v1107 = vpack.c.bf16 %v603, %v582
      %v1108 = vpack.c.bf16 %v604, %v583
      %v1109 = vpack.c.bf16 %v605, %v584
      %v1110 = vpack.c.bf16 %v606, %v585
      %v1111 = vpack.c.bf16 %v607, %v586
      %v1112 = vpack.c.bf16 %v608, %v587
      %v1113 = vpack.c.bf16 %v609, %v588
      %v1114 = vpack.c.bf16 %v610, %v589
      %v1115 = vpack.c.bf16 %v611, %v590
      %v1116 = vpack.c.bf16 %v612, %v591
      %v1117 = vpack.c.bf16 %v613, %v592
      %v1118 = vpack.c.bf16 %v614, %v593
      %v1119 = vpack.c.bf16 %v615, %v594
      %v1120 = vpack.c.bf16 %v616, %v595
      %v1121 = vpack.c.bf16 %v617, %v596
      %v1122 = vpack.c.bf16 %v618, %v597
      %v1123 = vpack.c.bf16 %v619, %v598
      %v1124 = vpack.c.bf16 %v620, %v599
      %v1125 = vpack.c.bf16 %v621, %v600
      %v1126 = vpack.c.bf16 %v643, %v622
      %v1127 = vpack.c.bf16 %v644, %v623
      %v1128 = vpack.c.bf16 %v645, %v624
      %v1129 = vpack.c.bf16 %v646, %v625
      %v1130 = vpack.c.bf16 %v647, %v626
      %v1131 = vpack.c.bf16 %v648, %v627
      %v1132 = vpack.c.bf16 %v649, %v628
      %v1133 = vpack.c.bf16 %v650, %v629
      %v1134 = vpack.c.bf16 %v651, %v630
      %v1135 = vpack.c.bf16 %v652, %v631
      %v1136 = vpack.c.bf16 %v653, %v632
      %v1137 = vpack.c.bf16 %v654, %v633
      %v1138 = vpack.c.bf16 %v655, %v634
      %v1139 = vpack.c.bf16 %v656, %v635
      %v1140 = vpack.c.bf16 %v657, %v636
      %v1141 = vpack.c.bf16 %v658, %v637
      %v1142 = vpack.c.bf16 %v659, %v638
      %v1143 = vpack.c.bf16 %v660, %v639
      %v1144 = vpack.c.bf16 %v661, %v640
      %v1145 = vpack.c.bf16 %v662, %v641
      %v1146 = vpack.c.bf16 %v663, %v642
      %v1147 = vpack.c.bf16 %v685, %v664
      %v1148 = vpack.c.bf16 %v686, %v665
      %v1149 = vpack.c.bf16 %v687, %v666
      %v1150 = vpack.c.bf16 %v688, %v667
      %v1151 = vpack.c.bf16 %v689, %v668
      %v1152 = vpack.c.bf16 %v690, %v669
      %v1153 = vpack.c.bf16 %v691, %v670
      %v1154 = vpack.c.bf16 %v692, %v671
      %v1155 = vpack.c.bf16 %v693, %v672
      %v1156 = vpack.c.bf16 %v694, %v673
      %v1157 = vpack.c.bf16 %v695, %v674
      %v1158 = vpack.c.bf16 %v696, %v675
      %v1159 = vpack.c.bf16 %v697, %v676
      %v1160 = vpack.c.bf16 %v698, %v677
      %v1161 = vpack.c.bf16 %v699, %v678
      %v1162 = vpack.c.bf16 %v700, %v679
      %v1163 = vpack.c.bf16 %v701, %v680
      %v1164 = vpack.c.bf16 %v702, %v681
      %v1165 = vpack.c.bf16 %v703, %v682
      %v1166 = vpack.c.bf16 %v704, %v683
      %v1167 = vpack.c.bf16 %v705, %v684
      %v1168 = vpack.c.bf16 %v727, %v706
      %v1169 = vpack.c.bf16 %v728, %v707
      %v1170 = vpack.c.bf16 %v729, %v708
      %v1171 = vpack.c.bf16 %v730, %v709
      %v1172 = vpack.c.bf16 %v731, %v710
      %v1173 = vpack.c.bf16 %v732, %v711
      %v1174 = vpack.c.bf16 %v733, %v712
      %v1175 = vpack.c.bf16 %v734, %v713
      %v1176 = vpack.c.bf16 %v735, %v714
      %v1177 = vpack.c.bf16 %v736, %v715
      %v1178 = vpack.c.bf16 %v737, %v716
      %v1179 = vpack.c.bf16 %v738, %v717
      %v1180 = vpack.c.bf16 %v739, %v718
      %v1181 = vpack.c.bf16 %v740, %v719
      %v1182 = vpack.c.bf16 %v741, %v720
      %v1183 = vpack.c.bf16 %v742, %v721
      %v1184 = vpack.c.bf16 %v743, %v722
      %v1185 = vpack.c.bf16 %v744, %v723
      %v1186 = vpack.c.bf16 %v745, %v724
      %v1187 = vpack.c.bf16 %v746, %v725
      %v1188 = vpack.c.bf16 %v747, %v726
      %v1189 = vpack.c.bf16 %v769, %v748
      %v1190 = vpack.c.bf16 %v770, %v749
      %v1191 = vpack.c.bf16 %v771, %v750
      %v1192 = vpack.c.bf16 %v772, %v751
      %v1193 = vpack.c.bf16 %v773, %v752
      %v1194 = vpack.c.bf16 %v774, %v753
      %v1195 = vpack.c.bf16 %v775, %v754
      %v1196 = vpack.c.bf16 %v776, %v755
      %v1197 = vpack.c.bf16 %v777, %v756
      %v1198 = vpack.c.bf16 %v778, %v757
      %v1199 = vpack.c.bf16 %v779, %v758
      %v1200 = vpack.c.bf16 %v780, %v759
      %v1201 = vpack.c.bf16 %v781, %v760
      %v1202 = vpack.c.bf16 %v782, %v761
      %v1203 = vpack.c.bf16 %v783, %v762
      %v1204 = vpack.c.bf16 %v784, %v763
      %v1205 = vpack.c.bf16 %v785, %v764
      %v1206 = vpack.c.bf16 %v786, %v765
      %v1207 = vpack.c.bf16 %v787, %v766
      %v1208 = vpack.c.bf16 %v788, %v767
      %v1209 = vpack.c.bf16 %v789, %v768
      %v1210 = vpack.c.bf16 %v811, %v790
      %v1211 = vpack.c.bf16 %v812, %v791
      %v1212 = vpack.c.bf16 %v813, %v792
      %v1213 = vpack.c.bf16 %v814, %v793
      %v1214 = vpack.c.bf16 %v815, %v794
      %v1215 = vpack.c.bf16 %v816, %v795
      %v1216 = vpack.c.bf16 %v817, %v796
      %v1217 = vpack.c.bf16 %v818, %v797
      %v1218 = vpack.c.bf16 %v819, %v798
      %v1219 = vpack.c.bf16 %v820, %v799
      %v1220 = vpack.c.bf16 %v821, %v800
      %v1221 = vpack.c.bf16 %v822, %v801
      %v1222 = vpack.c.bf16 %v823, %v802
      %v1223 = vpack.c.bf16 %v824, %v803
      %v1224 = vpack.c.bf16 %v825, %v804
      %v1225 = vpack.c.bf16 %v826, %v805
      %v1226 = vpack.c.bf16 %v827, %v806
      %v1227 = vpack.c.bf16 %v828, %v807
      %v1228 = vpack.c.bf16 %v829, %v808
      %v1229 = vpack.c.bf16 %v830, %v809
      %v1230 = vpack.c.bf16 %v831, %v810
      %v1231 = vpack.c.bf16 %v853, %v832
      %v1232 = vpack.c.bf16 %v854, %v833
      %v1233 = vpack.c.bf16 %v855, %v834
      %v1234 = vpack.c.bf16 %v856, %v835
      %v1235 = vpack.c.bf16 %v857, %v836
      %v1236 = vpack.c.bf16 %v858, %v837
      %v1237 = vpack.c.bf16 %v859, %v838
      %v1238 = vpack.c.bf16 %v860, %v839
      %v1239 = vpack.c.bf16 %v861, %v840
      %v1240 = vpack.c.bf16 %v862, %v841
      %v1241 = vpack.c.bf16 %v863, %v842
      %v1242 = vpack.c.bf16 %v864, %v843
      %v1243 = vpack.c.bf16 %v865, %v844
      %v1244 = vpack.c.bf16 %v866, %v845
      %v1245 = vpack.c.bf16 %v867, %v846
      %v1246 = vpack.c.bf16 %v868, %v847
      %v1247 = vpack.c.bf16 %v869, %v848
      %v1248 = vpack.c.bf16 %v870, %v849
      %v1249 = vpack.c.bf16 %v871, %v850
      %v1250 = vpack.c.bf16 %v872, %v851
      %v1251 = vpack.c.bf16 %v873, %v852
      %v1252 = vpack.c.bf16 %v895, %v874
      %v1253 = vpack.c.bf16 %v896, %v875
      %v1254 = vpack.c.bf16 %v897, %v876
      %v1255 = vpack.c.bf16 %v898, %v877
      %v1256 = vpack.c.bf16 %v899, %v878
      %v1257 = vpack.c.bf16 %v900, %v879
      %v1258 = vpack.c.bf16 %v901, %v880
      %v1259 = vpack.c.bf16 %v902, %v881
      %v1260 = vpack.c.bf16 %v903, %v882
      %v1261 = vpack.c.bf16 %v904, %v883
      %v1262 = vpack.c.bf16 %v905, %v884
      %v1263 = vpack.c.bf16 %v906, %v885
      %v1264 = vpack.c.bf16 %v907, %v886
      %v1265 = vpack.c.bf16 %v908, %v887
      %v1266 = vpack.c.bf16 %v909, %v888
      %v1267 = vpack.c.bf16 %v910, %v889
      %v1268 = vpack.c.bf16 %v911, %v890
      %v1269 = vpack.c.bf16 %v912, %v891
      %v1270 = vpack.c.bf16 %v913, %v892
      %v1271 = vpack.c.bf16 %v914, %v893
      %v1272 = vpack.c.bf16 %v915, %v894
      %v1273 = vpack.c.bf16 %v937, %v916
      %v1274 = vpack.c.bf16 %v938, %v917
      %v1275 = vpack.c.bf16 %v939, %v918
      %v1276 = vpack.c.bf16 %v940, %v919
      %v1277 = vpack.c.bf16 %v941, %v920
      %v1278 = vpack.c.bf16 %v942, %v921
      %v1279 = vpack.c.bf16 %v943, %v922
      %v1280 = vpack.c.bf16 %v944, %v923
      %v1281 = vpack.c.bf16 %v945, %v924
      %v1282 = vpack.c.bf16 %v946, %v925
      %v1283 = vpack.c.bf16 %v947, %v926
      %v1284 = vpack.c.bf16 %v948, %v927
      %v1285 = vpack.c.bf16 %v949, %v928
      %v1286 = vpack.c.bf16 %v950, %v929
      %v1287 = vpack.c.bf16 %v951, %v930
      %v1288 = vpack.c.bf16 %v952, %v931
      %v1289 = vpack.c.bf16 %v953, %v932
      %v1290 = vpack.c.bf16 %v954, %v933
      %v1291 = vpack.c.bf16 %v955, %v934
      %v1292 = vpack.c.bf16 %v956, %v935
      %v1293 = vpack.c.bf16 %v957, %v936
      %v1294 = vld [vmem:[%s1] sm:$0xf]
      %v1295 = vld [vmem:[%s1 + $0x4] sm:$0xf]
      %v1296 = vld [vmem:[%s1 + $0x8] sm:$0xf]
      %v1297 = vld [vmem:[%s1 + $0xc] sm:$0xf]
      %v1298 = vld [vmem:[%s1 + $0x10] sm:$0xf]
      %v1299 = vld [vmem:[%s1 + $0x14] sm:$0xf]
      %v1300 = vld [vmem:[%s1 + $0x18] sm:$0xf]
      %v1301 = vld [vmem:[%s1 + $0x1c] sm:$0xf]
      %v1302 = vld [vmem:[%s1 + $0x20] sm:$0xf]
      %v1303 = vld [vmem:[%s1 + $0x24] sm:$0xf]
      %v1304 = vld [vmem:[%s1 + $0x28] sm:$0xf]
      %v1305 = vld [vmem:[%s1 + $0x2c] sm:$0xf]
      %v1306 = vld [vmem:[%s1 + $0x30] sm:$0xf]
      %v1307 = vld [vmem:[%s1 + $0x34] sm:$0xf]
      %v1308 = vld [vmem:[%s1 + $0x38] sm:$0xf]
      %v1309 = vld [vmem:[%s1 + $0x3c] sm:$0xf]
      %v1310 = vld [vmem:[%s1 + $0x40] sm:$0xf]
      %v1311 = vld [vmem:[%s1 + $0x44] sm:$0xf]
      %v1312 = vld [vmem:[%s1 + $0x48] sm:$0xf]
      %v1313 = vld [vmem:[%s1 + $0x4c] sm:$0xf]
      %v1314 = vld [vmem:[%s1 + $0x50] sm:$0xf]
      %v1315 = vld [vmem:[%s1 + $0x54] sm:$0xf]
      %v1316 = vld [vmem:[%s1 + $0x58] sm:$0xf]
      %v1317 = vld [vmem:[%s1 + $0x5c] sm:$0xf]
      %v1318 = vld [vmem:[%s1 + $0x60] sm:$0xf]
      %v1319 = vld [vmem:[%s1 + $0x64] sm:$0xf]
      %v1320 = vld [vmem:[%s1 + $0x68] sm:$0xf]
      %v1321 = vld [vmem:[%s1 + $0x6c] sm:$0xf]
      %v1322 = vld [vmem:[%s1 + $0x70] sm:$0xf]
      %v1323 = vld [vmem:[%s1 + $0x74] sm:$0xf]
      %v1324 = vld [vmem:[%s1 + $0x78] sm:$0xf]
      %v1325 = vld [vmem:[%s1 + $0x7c] sm:$0xf]
      %v1326 = vld [vmem:[%s1 + $0x80] sm:$0xf]
      %v1327 = vld [vmem:[%s1 + $0x84] sm:$0xf]
      %v1328 = vld [vmem:[%s1 + $0x88] sm:$0xf]
      %v1329 = vld [vmem:[%s1 + $0x8c] sm:$0xf]
      %v1330 = vld [vmem:[%s1 + $0x90] sm:$0xf]
      %v1331 = vld [vmem:[%s1 + $0x94] sm:$0xf]
      %v1332 = vld [vmem:[%s1 + $0x98] sm:$0xf]
      %v1333 = vld [vmem:[%s1 + $0x9c] sm:$0xf]
      %v1334 = vld [vmem:[%s1 + $0xa0] sm:$0xf]
      %v1335 = vld [vmem:[%s1 + $0xa4] sm:$0xf]
      %v1336 = vld [vmem:[%s1 + $0xa8] sm:$0xf]
      %v1337 = vld [vmem:[%s1 + $0xac] sm:$0xf]
      %v1338 = vld [vmem:[%s1 + $0xb0] sm:$0xf]
      %v1339 = vld [vmem:[%s1 + $0xb4] sm:$0xf]
      %v1340 = vld [vmem:[%s1 + $0xb8] sm:$0xf]
      %v1341 = vld [vmem:[%s1 + $0xbc] sm:$0xf]
      %v1342 = vld [vmem:[%s1 + $0xc0] sm:$0xf]
      %v1343 = vld [vmem:[%s1 + $0xc4] sm:$0xf]
      %v1344 = vld [vmem:[%s1 + $0xc8] sm:$0xf]
      %v1345 = vld [vmem:[%s1 + $0xcc] sm:$0xf]
      %v1346 = vld [vmem:[%s1 + $0xd0] sm:$0xf]
      %v1347 = vld [vmem:[%s1 + $0xd4] sm:$0xf]
      %v1348 = vld [vmem:[%s1 + $0xd8] sm:$0xf]
      %v1349 = vld [vmem:[%s1 + $0xdc] sm:$0xf]
      %v1350 = vld [vmem:[%s1 + $0xe0] sm:$0xf]
      %v1351 = vld [vmem:[%s1 + $0xe4] sm:$0xf]
      %v1352 = vld [vmem:[%s1 + $0xe8] sm:$0xf]
      %v1353 = vld [vmem:[%s1 + $0xec] sm:$0xf]
      %v1354 = vld [vmem:[%s1 + $0xf0] sm:$0xf]
      %v1355 = vld [vmem:[%s1 + $0xf4] sm:$0xf]
      %v1356 = vld [vmem:[%s1 + $0xf8] sm:$0xf]
      %v1357 = vld [vmem:[%s1 + $0xfc] sm:$0xf]
      %v1358 = vld [vmem:[%s1 + $0x100] sm:$0xf]
      %v1359 = vld [vmem:[%s1 + $0x104] sm:$0xf]
      %v1360 = vld [vmem:[%s1 + $0x108] sm:$0xf]
      %v1361 = vld [vmem:[%s1 + $0x10c] sm:$0xf]
      %v1362 = vld [vmem:[%s1 + $0x110] sm:$0xf]
      %v1363 = vld [vmem:[%s1 + $0x114] sm:$0xf]
      %v1364 = vld [vmem:[%s1 + $0x118] sm:$0xf]
      %v1365 = vld [vmem:[%s1 + $0x11c] sm:$0xf]
      %v1366 = vld [vmem:[%s1 + $0x120] sm:$0xf]
      %v1367 = vld [vmem:[%s1 + $0x124] sm:$0xf]
      %v1368 = vld [vmem:[%s1 + $0x128] sm:$0xf]
      %v1369 = vld [vmem:[%s1 + $0x12c] sm:$0xf]
      %v1370 = vld [vmem:[%s1 + $0x130] sm:$0xf]
      %v1371 = vld [vmem:[%s1 + $0x134] sm:$0xf]
      %v1372 = vld [vmem:[%s1 + $0x138] sm:$0xf]
      %v1373 = vld [vmem:[%s1 + $0x13c] sm:$0xf]
      %v1374 = vld [vmem:[%s1 + $0x140] sm:$0xf]
      %v1375 = vld [vmem:[%s1 + $0x144] sm:$0xf]
      %v1376 = vld [vmem:[%s1 + $0x148] sm:$0xf]
      %v1377 = vld [vmem:[%s1 + $0x14c] sm:$0xf]
      %v1378 = vld [vmem:[%s1 + $0x150] sm:$0xf]
      %v1379 = vld [vmem:[%s1 + $0x154] sm:$0xf]
      %v1380 = vld [vmem:[%s1 + $0x158] sm:$0xf]
      %v1381 = vld [vmem:[%s1 + $0x15c] sm:$0xf]
      %v1382 = vld [vmem:[%s1 + $0x160] sm:$0xf]
      %v1383 = vld [vmem:[%s1 + $0x164] sm:$0xf]
      %v1384 = vld [vmem:[%s1 + $0x168] sm:$0xf]
      %v1385 = vld [vmem:[%s1 + $0x16c] sm:$0xf]
      %v1386 = vld [vmem:[%s1 + $0x170] sm:$0xf]
      %v1387 = vld [vmem:[%s1 + $0x174] sm:$0xf]
      %v1388 = vld [vmem:[%s1 + $0x178] sm:$0xf]
      %v1389 = vld [vmem:[%s1 + $0x17c] sm:$0xf]
      %v1390 = vld [vmem:[%s1 + $0x180] sm:$0xf]
      %v1391 = vld [vmem:[%s1 + $0x184] sm:$0xf]
      %v1392 = vld [vmem:[%s1 + $0x188] sm:$0xf]
      %v1393 = vld [vmem:[%s1 + $0x18c] sm:$0xf]
      %v1394 = vld [vmem:[%s1 + $0x190] sm:$0xf]
      %v1395 = vld [vmem:[%s1 + $0x194] sm:$0xf]
      %v1396 = vld [vmem:[%s1 + $0x198] sm:$0xf]
      %v1397 = vld [vmem:[%s1 + $0x19c] sm:$0xf]
      %v1398 = vld [vmem:[%s1 + $0x1a0] sm:$0xf]
      %v1399 = vld [vmem:[%s1 + $0x1a4] sm:$0xf]
      %v1400 = vld [vmem:[%s1 + $0x1a8] sm:$0xf]
      %v1401 = vld [vmem:[%s1 + $0x1ac] sm:$0xf]
      %v1402 = vld [vmem:[%s1 + $0x1b0] sm:$0xf]
      %v1403 = vld [vmem:[%s1 + $0x1b4] sm:$0xf]
      %v1404 = vld [vmem:[%s1 + $0x1b8] sm:$0xf]
      %v1405 = vld [vmem:[%s1 + $0x1bc] sm:$0xf]
      %v1406 = vld [vmem:[%s1 + $0x1c0] sm:$0xf]
      %v1407 = vld [vmem:[%s1 + $0x1c4] sm:$0xf]
      %v1408 = vld [vmem:[%s1 + $0x1c8] sm:$0xf]
      %v1409 = vld [vmem:[%s1 + $0x1cc] sm:$0xf]
      %v1410 = vld [vmem:[%s1 + $0x1d0] sm:$0xf]
      %v1411 = vld [vmem:[%s1 + $0x1d4] sm:$0xf]
      %v1412 = vld [vmem:[%s1 + $0x1d8] sm:$0xf]
      %v1413 = vld [vmem:[%s1 + $0x1dc] sm:$0xf]
      %v1414 = vld [vmem:[%s1 + $0x1e0] sm:$0xf]
      %v1415 = vld [vmem:[%s1 + $0x1e4] sm:$0xf]
      %v1416 = vld [vmem:[%s1 + $0x1e8] sm:$0xf]
      %v1417 = vld [vmem:[%s1 + $0x1ec] sm:$0xf]
      %v1418 = vld [vmem:[%s1 + $0x1f0] sm:$0xf]
      %v1419 = vld [vmem:[%s1 + $0x1f4] sm:$0xf]
      %v1420 = vld [vmem:[%s1 + $0x1f8] sm:$0xf]
      %v1421 = vld [vmem:[%s1 + $0x1fc] sm:$0xf]
      %v1422 = vld [vmem:[%s1 + $0x200] sm:$0xf]
      %v1423 = vld [vmem:[%s1 + $0x204] sm:$0xf]
      %v1424 = vld [vmem:[%s1 + $0x208] sm:$0xf]
      %v1425 = vld [vmem:[%s1 + $0x20c] sm:$0xf]
      %v1426 = vld [vmem:[%s1 + $0x210] sm:$0xf]
      %v1427 = vld [vmem:[%s1 + $0x214] sm:$0xf]
      %v1428 = vld [vmem:[%s1 + $0x218] sm:$0xf]
      %v1429 = vld [vmem:[%s1 + $0x21c] sm:$0xf]
      %v1430 = vld [vmem:[%s1 + $0x220] sm:$0xf]
      %v1431 = vld [vmem:[%s1 + $0x224] sm:$0xf]
      %v1432 = vld [vmem:[%s1 + $0x228] sm:$0xf]
      %v1433 = vld [vmem:[%s1 + $0x22c] sm:$0xf]
      %v1434 = vld [vmem:[%s1 + $0x230] sm:$0xf]
      %v1435 = vld [vmem:[%s1 + $0x234] sm:$0xf]
      %v1436 = vld [vmem:[%s1 + $0x238] sm:$0xf]
      %v1437 = vld [vmem:[%s1 + $0x23c] sm:$0xf]
      %v1438 = vld [vmem:[%s1 + $0x240] sm:$0xf]
      %v1439 = vld [vmem:[%s1 + $0x244] sm:$0xf]
      %v1440 = vld [vmem:[%s1 + $0x248] sm:$0xf]
      %v1441 = vld [vmem:[%s1 + $0x24c] sm:$0xf]
      %v1442 = vld [vmem:[%s1 + $0x250] sm:$0xf]
      %v1443 = vld [vmem:[%s1 + $0x254] sm:$0xf]
      %v1444 = vld [vmem:[%s1 + $0x258] sm:$0xf]
      %v1445 = vld [vmem:[%s1 + $0x25c] sm:$0xf]
      %v1446 = vld [vmem:[%s1 + $0x260] sm:$0xf]
      %v1447 = vld [vmem:[%s1 + $0x264] sm:$0xf]
      %v1448 = vld [vmem:[%s1 + $0x268] sm:$0xf]
      %v1449 = vld [vmem:[%s1 + $0x26c] sm:$0xf]
      %v1450 = vld [vmem:[%s1 + $0x270] sm:$0xf]
      %v1451 = vld [vmem:[%s1 + $0x274] sm:$0xf]
      %v1452 = vld [vmem:[%s1 + $0x278] sm:$0xf]
      %v1453 = vld [vmem:[%s1 + $0x27c] sm:$0xf]
      %v1454 = vld [vmem:[%s1 + $0x280] sm:$0xf]
      %v1455 = vld [vmem:[%s1 + $0x284] sm:$0xf]
      %v1456 = vld [vmem:[%s1 + $0x288] sm:$0xf]
      %v1457 = vld [vmem:[%s1 + $0x28c] sm:$0xf]
      %v1458 = vld [vmem:[%s1 + $0x290] sm:$0xf]
      %v1459 = vld [vmem:[%s1 + $0x294] sm:$0xf]
      %v1460 = vld [vmem:[%s1 + $0x298] sm:$0xf]
      %v1461 = vld [vmem:[%s1 + $0x29c] sm:$0xf]
      %v1462 = vld [vmem:[%s1 + $0x2a0] sm:$0xf]
      %v1463 = vld [vmem:[%s1 + $0x2a4] sm:$0xf]
      %v1464 = vld [vmem:[%s1 + $0x2a8] sm:$0xf]
      %v1465 = vld [vmem:[%s1 + $0x2ac] sm:$0xf]
      %v1466 = vld [vmem:[%s1 + $0x2b0] sm:$0xf]
      %v1467 = vld [vmem:[%s1 + $0x2b4] sm:$0xf]
      %v1468 = vld [vmem:[%s1 + $0x2b8] sm:$0xf]
      %v1469 = vld [vmem:[%s1 + $0x2bc] sm:$0xf]
      %v1470 = vld [vmem:[%s1 + $0x2c0] sm:$0xf]
      %v1471 = vld [vmem:[%s1 + $0x2c4] sm:$0xf]
      %v1472 = vld [vmem:[%s1 + $0x2c8] sm:$0xf]
      %v1473 = vld [vmem:[%s1 + $0x2cc] sm:$0xf]
      %v1474 = vld [vmem:[%s1 + $0x2d0] sm:$0xf]
      %v1475 = vld [vmem:[%s1 + $0x2d4] sm:$0xf]
      %v1476 = vld [vmem:[%s1 + $0x2d8] sm:$0xf]
      %v1477 = vld [vmem:[%s1 + $0x2dc] sm:$0xf]
      %v1478 = vld [vmem:[%s1 + $0x2e0] sm:$0xf]
      %v1479 = vld [vmem:[%s1 + $0x2e4] sm:$0xf]
      %v1480 = vld [vmem:[%s1 + $0x2e8] sm:$0xf]
      %v1481 = vld [vmem:[%s1 + $0x2ec] sm:$0xf]
      %v1482 = vld [vmem:[%s1 + $0x2f0] sm:$0xf]
      %v1483 = vld [vmem:[%s1 + $0x2f4] sm:$0xf]
      %v1484 = vld [vmem:[%s1 + $0x2f8] sm:$0xf]
      %v1485 = vld [vmem:[%s1 + $0x2fc] sm:$0xf]
      %v1486 = vld [vmem:[%s1 + $0x300] sm:$0xf]
      %v1487 = vld [vmem:[%s1 + $0x304] sm:$0xf]
      %v1488 = vld [vmem:[%s1 + $0x308] sm:$0xf]
      %v1489 = vld [vmem:[%s1 + $0x30c] sm:$0xf]
      %v1490 = vld [vmem:[%s1 + $0x310] sm:$0xf]
      %v1491 = vld [vmem:[%s1 + $0x314] sm:$0xf]
      %v1492 = vld [vmem:[%s1 + $0x318] sm:$0xf]
      %v1493 = vld [vmem:[%s1 + $0x31c] sm:$0xf]
      %v1494 = vld [vmem:[%s1 + $0x320] sm:$0xf]
      %v1495 = vld [vmem:[%s1 + $0x324] sm:$0xf]
      %v1496 = vld [vmem:[%s1 + $0x328] sm:$0xf]
      %v1497 = vld [vmem:[%s1 + $0x32c] sm:$0xf]
      %v1498 = vld [vmem:[%s1 + $0x330] sm:$0xf]
      %v1499 = vld [vmem:[%s1 + $0x334] sm:$0xf]
      %v1500 = vld [vmem:[%s1 + $0x338] sm:$0xf]
      %v1501 = vld [vmem:[%s1 + $0x33c] sm:$0xf]
      %v1502 = vld [vmem:[%s1 + $0x340] sm:$0xf]
      %v1503 = vld [vmem:[%s1 + $0x344] sm:$0xf]
      %v1504 = vld [vmem:[%s1 + $0x348] sm:$0xf]
      %v1505 = vld [vmem:[%s1 + $0x34c] sm:$0xf]
      %v1506 = vld [vmem:[%s1 + $0x350] sm:$0xf]
      %v1507 = vld [vmem:[%s1 + $0x354] sm:$0xf]
      %v1508 = vld [vmem:[%s1 + $0x358] sm:$0xf]
      %v1509 = vld [vmem:[%s1 + $0x35c] sm:$0xf]
      %v1510 = vld [vmem:[%s1 + $0x360] sm:$0xf]
      %v1511 = vld [vmem:[%s1 + $0x364] sm:$0xf]
      %v1512 = vld [vmem:[%s1 + $0x368] sm:$0xf]
      %v1513 = vld [vmem:[%s1 + $0x36c] sm:$0xf]
      %v1514 = vld [vmem:[%s1 + $0x370] sm:$0xf]
      %v1515 = vld [vmem:[%s1 + $0x374] sm:$0xf]
      %v1516 = vld [vmem:[%s1 + $0x378] sm:$0xf]
      %v1517 = vld [vmem:[%s1 + $0x37c] sm:$0xf]
      %v1518 = vld [vmem:[%s1 + $0x380] sm:$0xf]
      %v1519 = vld [vmem:[%s1 + $0x384] sm:$0xf]
      %v1520 = vld [vmem:[%s1 + $0x388] sm:$0xf]
      %v1521 = vld [vmem:[%s1 + $0x38c] sm:$0xf]
      %v1522 = vld [vmem:[%s1 + $0x390] sm:$0xf]
      %v1523 = vld [vmem:[%s1 + $0x394] sm:$0xf]
      %v1524 = vld [vmem:[%s1 + $0x398] sm:$0xf]
      %v1525 = vld [vmem:[%s1 + $0x39c] sm:$0xf]
      %v1526 = vld [vmem:[%s1 + $0x3a0] sm:$0xf]
      %v1527 = vld [vmem:[%s1 + $0x3a4] sm:$0xf]
      %v1528 = vld [vmem:[%s1 + $0x3a8] sm:$0xf]
      %v1529 = vld [vmem:[%s1 + $0x3ac] sm:$0xf]
      %v1530 = vld [vmem:[%s1 + $0x3b0] sm:$0xf]
      %v1531 = vld [vmem:[%s1 + $0x3b4] sm:$0xf]
      %v1532 = vld [vmem:[%s1 + $0x3b8] sm:$0xf]
      %v1533 = vld [vmem:[%s1 + $0x3bc] sm:$0xf]
      %v1534 = vld [vmem:[%s1 + $0x3c0] sm:$0xf]
      %v1535 = vld [vmem:[%s1 + $0x3c4] sm:$0xf]
      %v1536 = vld [vmem:[%s1 + $0x3c8] sm:$0xf]
      %v1537 = vld [vmem:[%s1 + $0x3cc] sm:$0xf]
      %v1538 = vld [vmem:[%s1 + $0x3d0] sm:$0xf]
      %v1539 = vld [vmem:[%s1 + $0x3d4] sm:$0xf]
      %v1540 = vld [vmem:[%s1 + $0x3d8] sm:$0xf]
      %v1541 = vld [vmem:[%s1 + $0x3dc] sm:$0xf]
      %v1542 = vld [vmem:[%s1 + $0x3e0] sm:$0xf]
      %v1543 = vld [vmem:[%s1 + $0x3e4] sm:$0xf]
      %v1544 = vld [vmem:[%s1 + $0x3e8] sm:$0xf]
      %v1545 = vld [vmem:[%s1 + $0x3ec] sm:$0xf]
      %v1546 = vld [vmem:[%s1 + $0x3f0] sm:$0xf]
      %v1547 = vld [vmem:[%s1 + $0x3f4] sm:$0xf]
      %v1548 = vld [vmem:[%s1 + $0x3f8] sm:$0xf]
      %v1549 = vld [vmem:[%s1 + $0x3fc] sm:$0xf]
      %v1550 = vld [vmem:[%s1 + $0x400] sm:$0xf]
      %v1551 = vld [vmem:[%s1 + $0x404] sm:$0xf]
      %v1552 = vld [vmem:[%s1 + $0x408] sm:$0xf]
      %v1553 = vld [vmem:[%s1 + $0x40c] sm:$0xf]
      %v1554 = vld [vmem:[%s1 + $0x410] sm:$0xf]
      %v1555 = vld [vmem:[%s1 + $0x414] sm:$0xf]
      %v1556 = vld [vmem:[%s1 + $0x418] sm:$0xf]
      %v1557 = vld [vmem:[%s1 + $0x41c] sm:$0xf]
      %v1558 = vld [vmem:[%s1 + $0x420] sm:$0xf]
      %v1559 = vld [vmem:[%s1 + $0x424] sm:$0xf]
      %v1560 = vld [vmem:[%s1 + $0x428] sm:$0xf]
      %v1561 = vld [vmem:[%s1 + $0x42c] sm:$0xf]
      %v1562 = vld [vmem:[%s1 + $0x430] sm:$0xf]
      %v1563 = vld [vmem:[%s1 + $0x434] sm:$0xf]
      %v1564 = vld [vmem:[%s1 + $0x438] sm:$0xf]
      %v1565 = vld [vmem:[%s1 + $0x43c] sm:$0xf]
      %v1566 = vld [vmem:[%s1 + $0x440] sm:$0xf]
      %v1567 = vld [vmem:[%s1 + $0x444] sm:$0xf]
      %v1568 = vld [vmem:[%s1 + $0x448] sm:$0xf]
      %v1569 = vld [vmem:[%s1 + $0x44c] sm:$0xf]
      %v1570 = vld [vmem:[%s1 + $0x450] sm:$0xf]
      %v1571 = vld [vmem:[%s1 + $0x454] sm:$0xf]
      %v1572 = vld [vmem:[%s1 + $0x458] sm:$0xf]
      %v1573 = vld [vmem:[%s1 + $0x45c] sm:$0xf]
      %v1574 = vld [vmem:[%s1 + $0x460] sm:$0xf]
      %v1575 = vld [vmem:[%s1 + $0x464] sm:$0xf]
      %v1576 = vld [vmem:[%s1 + $0x468] sm:$0xf]
      %v1577 = vld [vmem:[%s1 + $0x46c] sm:$0xf]
      %v1578 = vld [vmem:[%s1 + $0x470] sm:$0xf]
      %v1579 = vld [vmem:[%s1 + $0x474] sm:$0xf]
      %v1580 = vld [vmem:[%s1 + $0x478] sm:$0xf]
      %v1581 = vld [vmem:[%s1 + $0x47c] sm:$0xf]
      %v1582 = vld [vmem:[%s1 + $0x480] sm:$0xf]
      %v1583 = vld [vmem:[%s1 + $0x484] sm:$0xf]
      %v1584 = vld [vmem:[%s1 + $0x488] sm:$0xf]
      %v1585 = vld [vmem:[%s1 + $0x48c] sm:$0xf]
      %v1586 = vld [vmem:[%s1 + $0x490] sm:$0xf]
      %v1587 = vld [vmem:[%s1 + $0x494] sm:$0xf]
      %v1588 = vld [vmem:[%s1 + $0x498] sm:$0xf]
      %v1589 = vld [vmem:[%s1 + $0x49c] sm:$0xf]
      %v1590 = vld [vmem:[%s1 + $0x4a0] sm:$0xf]
      %v1591 = vld [vmem:[%s1 + $0x4a4] sm:$0xf]
      %v1592 = vld [vmem:[%s1 + $0x4a8] sm:$0xf]
      %v1593 = vld [vmem:[%s1 + $0x4ac] sm:$0xf]
      %v1594 = vld [vmem:[%s1 + $0x4b0] sm:$0xf]
      %v1595 = vld [vmem:[%s1 + $0x4b4] sm:$0xf]
      %v1596 = vld [vmem:[%s1 + $0x4b8] sm:$0xf]
      %v1597 = vld [vmem:[%s1 + $0x4bc] sm:$0xf]
      %v1598 = vld [vmem:[%s1 + $0x4c0] sm:$0xf]
      %v1599 = vld [vmem:[%s1 + $0x4c4] sm:$0xf]
      %v1600 = vld [vmem:[%s1 + $0x4c8] sm:$0xf]
      %v1601 = vld [vmem:[%s1 + $0x4cc] sm:$0xf]
      %v1602 = vld [vmem:[%s1 + $0x4d0] sm:$0xf]
      %v1603 = vld [vmem:[%s1 + $0x4d4] sm:$0xf]
      %v1604 = vld [vmem:[%s1 + $0x4d8] sm:$0xf]
      %v1605 = vld [vmem:[%s1 + $0x4dc] sm:$0xf]
      %v1606 = vld [vmem:[%s1 + $0x4e0] sm:$0xf]
      %v1607 = vld [vmem:[%s1 + $0x4e4] sm:$0xf]
      %v1608 = vld [vmem:[%s1 + $0x4e8] sm:$0xf]
      %v1609 = vld [vmem:[%s1 + $0x4ec] sm:$0xf]
      %v1610 = vld [vmem:[%s1 + $0x4f0] sm:$0xf]
      %v1611 = vld [vmem:[%s1 + $0x4f4] sm:$0xf]
      %v1612 = vld [vmem:[%s1 + $0x4f8] sm:$0xf]
      %v1613 = vld [vmem:[%s1 + $0x4fc] sm:$0xf]
      %v1614 = vld [vmem:[%s1 + $0x500] sm:$0xf]
      %v1615 = vld [vmem:[%s1 + $0x504] sm:$0xf]
      %v1616 = vld [vmem:[%s1 + $0x508] sm:$0xf]
      %v1617 = vld [vmem:[%s1 + $0x50c] sm:$0xf]
      %v1618 = vld [vmem:[%s1 + $0x510] sm:$0xf]
      %v1619 = vld [vmem:[%s1 + $0x514] sm:$0x3]
      %v1620 = vld [vmem:[%s2] sm:$0x1]
      %v1622 = vlaneseq
      %v1623 = vshrl.u32 %v1622, 7
      %v1624 = vsub.s32 0, %v1623
      %v1625 = vrot.slane %v1620, %v1624
      %v1953 = vunpack.c.l.b16 %v1294
      %v1954 = vunpack.c.l.b16 %v1295
      %v1955 = vunpack.c.l.b16 %v1296
      %v1956 = vunpack.c.l.b16 %v1297
      %v1957 = vunpack.c.l.b16 %v1298
      %v1958 = vunpack.c.l.b16 %v1299
      %v1959 = vunpack.c.l.b16 %v1300
      %v1960 = vunpack.c.l.b16 %v1301
      %v1961 = vunpack.c.l.b16 %v1302
      %v1962 = vunpack.c.l.b16 %v1303
      %v1963 = vunpack.c.l.b16 %v1304
      %v1964 = vunpack.c.l.b16 %v1305
      %v1965 = vunpack.c.l.b16 %v1306
      %v1966 = vunpack.c.l.b16 %v1307
      %v1967 = vunpack.c.l.b16 %v1308
      %v1968 = vunpack.c.l.b16 %v1309
      %v1969 = vunpack.c.l.b16 %v1310
      %v1970 = vunpack.c.l.b16 %v1311
      %v1971 = vunpack.c.l.b16 %v1312
      %v1972 = vunpack.c.l.b16 %v1313
      %v1973 = vunpack.c.l.b16 %v1314
      %v1974 = vunpack.c.l.b16 %v1315
      %v1975 = vunpack.c.l.b16 %v1316
      %v1976 = vunpack.c.l.b16 %v1317
      %v1977 = vunpack.c.l.b16 %v1318
      %v1978 = vunpack.c.l.b16 %v1319
      %v1979 = vunpack.c.l.b16 %v1320
      %v1980 = vunpack.c.l.b16 %v1321
      %v1981 = vunpack.c.l.b16 %v1322
      %v1982 = vunpack.c.l.b16 %v1323
      %v1983 = vunpack.c.l.b16 %v1324
      %v1984 = vunpack.c.l.b16 %v1325
      %v1985 = vunpack.c.l.b16 %v1326
      %v1986 = vunpack.c.l.b16 %v1327
      %v1987 = vunpack.c.l.b16 %v1328
      %v1988 = vunpack.c.l.b16 %v1329
      %v1989 = vunpack.c.l.b16 %v1330
      %v1990 = vunpack.c.l.b16 %v1331
      %v1991 = vunpack.c.l.b16 %v1332
      %v1992 = vunpack.c.l.b16 %v1333
      %v1993 = vunpack.c.l.b16 %v1334
      %v1994 = vunpack.c.l.b16 %v1335
      %v1995 = vunpack.c.l.b16 %v1336
      %v1996 = vunpack.c.l.b16 %v1337
      %v1997 = vunpack.c.l.b16 %v1338
      %v1998 = vunpack.c.l.b16 %v1339
      %v1999 = vunpack.c.l.b16 %v1340
      %v2000 = vunpack.c.l.b16 %v1341
      %v2001 = vunpack.c.l.b16 %v1342
      %v2002 = vunpack.c.l.b16 %v1343
      %v2003 = vunpack.c.l.b16 %v1344
      %v2004 = vunpack.c.l.b16 %v1345
      %v2005 = vunpack.c.l.b16 %v1346
      %v2006 = vunpack.c.l.b16 %v1347
      %v2007 = vunpack.c.l.b16 %v1348
      %v2008 = vunpack.c.l.b16 %v1349
      %v2009 = vunpack.c.l.b16 %v1350
      %v2010 = vunpack.c.l.b16 %v1351
      %v2011 = vunpack.c.l.b16 %v1352
      %v2012 = vunpack.c.l.b16 %v1353
      %v2013 = vunpack.c.l.b16 %v1354
      %v2014 = vunpack.c.l.b16 %v1355
      %v2015 = vunpack.c.l.b16 %v1356
      %v2016 = vunpack.c.l.b16 %v1357
      %v2017 = vunpack.c.l.b16 %v1358
      %v2018 = vunpack.c.l.b16 %v1359
      %v2019 = vunpack.c.l.b16 %v1360
      %v2020 = vunpack.c.l.b16 %v1361
      %v2021 = vunpack.c.l.b16 %v1362
      %v2022 = vunpack.c.l.b16 %v1363
      %v2023 = vunpack.c.l.b16 %v1364
      %v2024 = vunpack.c.l.b16 %v1365
      %v2025 = vunpack.c.l.b16 %v1366
      %v2026 = vunpack.c.l.b16 %v1367
      %v2027 = vunpack.c.l.b16 %v1368
      %v2028 = vunpack.c.l.b16 %v1369
      %v2029 = vunpack.c.l.b16 %v1370
      %v2030 = vunpack.c.l.b16 %v1371
      %v2031 = vunpack.c.l.b16 %v1372
      %v2032 = vunpack.c.l.b16 %v1373
      %v2033 = vunpack.c.l.b16 %v1374
      %v2034 = vunpack.c.l.b16 %v1375
      %v2035 = vunpack.c.l.b16 %v1376
      %v2036 = vunpack.c.l.b16 %v1377
      %v2037 = vunpack.c.l.b16 %v1378
      %v2038 = vunpack.c.l.b16 %v1379
      %v2039 = vunpack.c.l.b16 %v1380
      %v2040 = vunpack.c.l.b16 %v1381
      %v2041 = vunpack.c.l.b16 %v1382
      %v2042 = vunpack.c.l.b16 %v1383
      %v2043 = vunpack.c.l.b16 %v1384
      %v2044 = vunpack.c.l.b16 %v1385
      %v2045 = vunpack.c.l.b16 %v1386
      %v2046 = vunpack.c.l.b16 %v1387
      %v2047 = vunpack.c.l.b16 %v1388
      %v2048 = vunpack.c.l.b16 %v1389
      %v2049 = vunpack.c.l.b16 %v1390
      %v2050 = vunpack.c.l.b16 %v1391
      %v2051 = vunpack.c.l.b16 %v1392
      %v2052 = vunpack.c.l.b16 %v1393
      %v2053 = vunpack.c.l.b16 %v1394
      %v2054 = vunpack.c.l.b16 %v1395
      %v2055 = vunpack.c.l.b16 %v1396
      %v2056 = vunpack.c.l.b16 %v1397
      %v2057 = vunpack.c.l.b16 %v1398
      %v2058 = vunpack.c.l.b16 %v1399
      %v2059 = vunpack.c.l.b16 %v1400
      %v2060 = vunpack.c.l.b16 %v1401
      %v2061 = vunpack.c.l.b16 %v1402
      %v2062 = vunpack.c.l.b16 %v1403
      %v2063 = vunpack.c.l.b16 %v1404
      %v2064 = vunpack.c.l.b16 %v1405
      %v2065 = vunpack.c.l.b16 %v1406
      %v2066 = vunpack.c.l.b16 %v1407
      %v2067 = vunpack.c.l.b16 %v1408
      %v2068 = vunpack.c.l.b16 %v1409
      %v2069 = vunpack.c.l.b16 %v1410
      %v2070 = vunpack.c.l.b16 %v1411
      %v2071 = vunpack.c.l.b16 %v1412
      %v2072 = vunpack.c.l.b16 %v1413
      %v2073 = vunpack.c.l.b16 %v1414
      %v2074 = vunpack.c.l.b16 %v1415
      %v2075 = vunpack.c.l.b16 %v1416
      %v2076 = vunpack.c.l.b16 %v1417
      %v2077 = vunpack.c.l.b16 %v1418
      %v2078 = vunpack.c.l.b16 %v1419
      %v2079 = vunpack.c.l.b16 %v1420
      %v2080 = vunpack.c.l.b16 %v1421
      %v2081 = vunpack.c.l.b16 %v1422
      %v2082 = vunpack.c.l.b16 %v1423
      %v2083 = vunpack.c.l.b16 %v1424
      %v2084 = vunpack.c.l.b16 %v1425
      %v2085 = vunpack.c.l.b16 %v1426
      %v2086 = vunpack.c.l.b16 %v1427
      %v2087 = vunpack.c.l.b16 %v1428
      %v2088 = vunpack.c.l.b16 %v1429
      %v2089 = vunpack.c.l.b16 %v1430
      %v2090 = vunpack.c.l.b16 %v1431
      %v2091 = vunpack.c.l.b16 %v1432
      %v2092 = vunpack.c.l.b16 %v1433
      %v2093 = vunpack.c.l.b16 %v1434
      %v2094 = vunpack.c.l.b16 %v1435
      %v2095 = vunpack.c.l.b16 %v1436
      %v2096 = vunpack.c.l.b16 %v1437
      %v2097 = vunpack.c.l.b16 %v1438
      %v2098 = vunpack.c.l.b16 %v1439
      %v2099 = vunpack.c.l.b16 %v1440
      %v2100 = vunpack.c.l.b16 %v1441
      %v2101 = vunpack.c.l.b16 %v1442
      %v2102 = vunpack.c.l.b16 %v1443
      %v2103 = vunpack.c.l.b16 %v1444
      %v2104 = vunpack.c.l.b16 %v1445
      %v2105 = vunpack.c.l.b16 %v1446
      %v2106 = vunpack.c.l.b16 %v1447
      %v2107 = vunpack.c.l.b16 %v1448
      %v2108 = vunpack.c.l.b16 %v1449
      %v2109 = vunpack.c.l.b16 %v1450
      %v2110 = vunpack.c.l.b16 %v1451
      %v2111 = vunpack.c.l.b16 %v1452
      %v2112 = vunpack.c.l.b16 %v1453
      %v2113 = vunpack.c.l.b16 %v1454
      %v2114 = vunpack.c.l.b16 %v1455
      %v2115 = vunpack.c.l.b16 %v1456
      %v2116 = vunpack.c.l.b16 %v1457
      %v2117 = vunpack.c.l.b16 %v1458
      %v2118 = vunpack.c.l.b16 %v1459
      %v2119 = vunpack.c.l.b16 %v1460
      %v2120 = vunpack.c.l.b16 %v1461
      %v2121 = vunpack.c.l.b16 %v1462
      %v2122 = vunpack.c.l.b16 %v1463
      %v2123 = vunpack.c.l.b16 %v1464
      %v2124 = vunpack.c.l.b16 %v1465
      %v2125 = vunpack.c.l.b16 %v1466
      %v2126 = vunpack.c.l.b16 %v1467
      %v2127 = vunpack.c.l.b16 %v1468
      %v2128 = vunpack.c.l.b16 %v1469
      %v2129 = vunpack.c.l.b16 %v1470
      %v2130 = vunpack.c.l.b16 %v1471
      %v2131 = vunpack.c.l.b16 %v1472
      %v2132 = vunpack.c.l.b16 %v1473
      %v2133 = vunpack.c.l.b16 %v1474
      %v2134 = vunpack.c.l.b16 %v1475
      %v2135 = vunpack.c.l.b16 %v1476
      %v2136 = vunpack.c.l.b16 %v1477
      %v2137 = vunpack.c.l.b16 %v1478
      %v2138 = vunpack.c.l.b16 %v1479
      %v2139 = vunpack.c.l.b16 %v1480
      %v2140 = vunpack.c.l.b16 %v1481
      %v2141 = vunpack.c.l.b16 %v1482
      %v2142 = vunpack.c.l.b16 %v1483
      %v2143 = vunpack.c.l.b16 %v1484
      %v2144 = vunpack.c.l.b16 %v1485
      %v2145 = vunpack.c.l.b16 %v1486
      %v2146 = vunpack.c.l.b16 %v1487
      %v2147 = vunpack.c.l.b16 %v1488
      %v2148 = vunpack.c.l.b16 %v1489
      %v2149 = vunpack.c.l.b16 %v1490
      %v2150 = vunpack.c.l.b16 %v1491
      %v2151 = vunpack.c.l.b16 %v1492
      %v2152 = vunpack.c.l.b16 %v1493
      %v2153 = vunpack.c.l.b16 %v1494
      %v2154 = vunpack.c.l.b16 %v1495
      %v2155 = vunpack.c.l.b16 %v1496
      %v2156 = vunpack.c.l.b16 %v1497
      %v2157 = vunpack.c.l.b16 %v1498
      %v2158 = vunpack.c.l.b16 %v1499
      %v2159 = vunpack.c.l.b16 %v1500
      %v2160 = vunpack.c.l.b16 %v1501
      %v2161 = vunpack.c.l.b16 %v1502
      %v2162 = vunpack.c.l.b16 %v1503
      %v2163 = vunpack.c.l.b16 %v1504
      %v2164 = vunpack.c.l.b16 %v1505
      %v2165 = vunpack.c.l.b16 %v1506
      %v2166 = vunpack.c.l.b16 %v1507
      %v2167 = vunpack.c.l.b16 %v1508
      %v2168 = vunpack.c.l.b16 %v1509
      %v2169 = vunpack.c.l.b16 %v1510
      %v2170 = vunpack.c.l.b16 %v1511
      %v2171 = vunpack.c.l.b16 %v1512
      %v2172 = vunpack.c.l.b16 %v1513
      %v2173 = vunpack.c.l.b16 %v1514
      %v2174 = vunpack.c.l.b16 %v1515
      %v2175 = vunpack.c.l.b16 %v1516
      %v2176 = vunpack.c.l.b16 %v1517
      %v2177 = vunpack.c.l.b16 %v1518
      %v2178 = vunpack.c.l.b16 %v1519
      %v2179 = vunpack.c.l.b16 %v1520
      %v2180 = vunpack.c.l.b16 %v1521
      %v2181 = vunpack.c.l.b16 %v1522
      %v2182 = vunpack.c.l.b16 %v1523
      %v2183 = vunpack.c.l.b16 %v1524
      %v2184 = vunpack.c.l.b16 %v1525
      %v2185 = vunpack.c.l.b16 %v1526
      %v2186 = vunpack.c.l.b16 %v1527
      %v2187 = vunpack.c.l.b16 %v1528
      %v2188 = vunpack.c.l.b16 %v1529
      %v2189 = vunpack.c.l.b16 %v1530
      %v2190 = vunpack.c.l.b16 %v1531
      %v2191 = vunpack.c.l.b16 %v1532
      %v2192 = vunpack.c.l.b16 %v1533
      %v2193 = vunpack.c.l.b16 %v1534
      %v2194 = vunpack.c.l.b16 %v1535
      %v2195 = vunpack.c.l.b16 %v1536
      %v2196 = vunpack.c.l.b16 %v1537
      %v2197 = vunpack.c.l.b16 %v1538
      %v2198 = vunpack.c.l.b16 %v1539
      %v2199 = vunpack.c.l.b16 %v1540
      %v2200 = vunpack.c.l.b16 %v1541
      %v2201 = vunpack.c.l.b16 %v1542
      %v2202 = vunpack.c.l.b16 %v1543
      %v2203 = vunpack.c.l.b16 %v1544
      %v2204 = vunpack.c.l.b16 %v1545
      %v2205 = vunpack.c.l.b16 %v1546
      %v2206 = vunpack.c.l.b16 %v1547
      %v2207 = vunpack.c.l.b16 %v1548
      %v2208 = vunpack.c.l.b16 %v1549
      %v2209 = vunpack.c.l.b16 %v1550
      %v2210 = vunpack.c.l.b16 %v1551
      %v2211 = vunpack.c.l.b16 %v1552
      %v2212 = vunpack.c.l.b16 %v1553
      %v2213 = vunpack.c.l.b16 %v1554
      %v2214 = vunpack.c.l.b16 %v1555
      %v2215 = vunpack.c.l.b16 %v1556
      %v2216 = vunpack.c.l.b16 %v1557
      %v2217 = vunpack.c.l.b16 %v1558
      %v2218 = vunpack.c.l.b16 %v1559
      %v2219 = vunpack.c.l.b16 %v1560
      %v2220 = vunpack.c.l.b16 %v1561
      %v2221 = vunpack.c.l.b16 %v1562
      %v2222 = vunpack.c.l.b16 %v1563
      %v2223 = vunpack.c.l.b16 %v1564
      %v2224 = vunpack.c.l.b16 %v1565
      %v2225 = vunpack.c.l.b16 %v1566
      %v2226 = vunpack.c.l.b16 %v1567
      %v2227 = vunpack.c.l.b16 %v1568
      %v2228 = vunpack.c.l.b16 %v1569
      %v2229 = vunpack.c.l.b16 %v1570
      %v2230 = vunpack.c.l.b16 %v1571
      %v2231 = vunpack.c.l.b16 %v1572
      %v2232 = vunpack.c.l.b16 %v1573
      %v2233 = vunpack.c.l.b16 %v1574
      %v2234 = vunpack.c.l.b16 %v1575
      %v2235 = vunpack.c.l.b16 %v1576
      %v2236 = vunpack.c.l.b16 %v1577
      %v2237 = vunpack.c.l.b16 %v1578
      %v2238 = vunpack.c.l.b16 %v1579
      %v2239 = vunpack.c.l.b16 %v1580
      %v2240 = vunpack.c.l.b16 %v1581
      %v2241 = vunpack.c.l.b16 %v1582
      %v2242 = vunpack.c.l.b16 %v1583
      %v2243 = vunpack.c.l.b16 %v1584
      %v2244 = vunpack.c.l.b16 %v1585
      %v2245 = vunpack.c.l.b16 %v1586
      %v2246 = vunpack.c.l.b16 %v1587
      %v2247 = vunpack.c.l.b16 %v1588
      %v2248 = vunpack.c.l.b16 %v1589
      %v2249 = vunpack.c.l.b16 %v1590
      %v2250 = vunpack.c.l.b16 %v1591
      %v2251 = vunpack.c.l.b16 %v1592
      %v2252 = vunpack.c.l.b16 %v1593
      %v2253 = vunpack.c.l.b16 %v1594
      %v2254 = vunpack.c.l.b16 %v1595
      %v2255 = vunpack.c.l.b16 %v1596
      %v2256 = vunpack.c.l.b16 %v1597
      %v2257 = vunpack.c.l.b16 %v1598
      %v2258 = vunpack.c.l.b16 %v1599
      %v2259 = vunpack.c.l.b16 %v1600
      %v2260 = vunpack.c.l.b16 %v1601
      %v2261 = vunpack.c.l.b16 %v1602
      %v2262 = vunpack.c.l.b16 %v1603
      %v2263 = vunpack.c.l.b16 %v1604
      %v2264 = vunpack.c.l.b16 %v1605
      %v2265 = vunpack.c.l.b16 %v1606
      %v2266 = vunpack.c.l.b16 %v1607
      %v2267 = vunpack.c.l.b16 %v1608
      %v2268 = vunpack.c.l.b16 %v1609
      %v2269 = vunpack.c.l.b16 %v1610
      %v2270 = vunpack.c.l.b16 %v1611
      %v2271 = vunpack.c.l.b16 %v1612
      %v2272 = vunpack.c.l.b16 %v1613
      %v2273 = vunpack.c.l.b16 %v1614
      %v2274 = vunpack.c.l.b16 %v1615
      %v2275 = vunpack.c.l.b16 %v1616
      %v2276 = vunpack.c.l.b16 %v1617
      %v2277 = vunpack.c.l.b16 %v1618
      %v2278 = vunpack.c.l.b16 %v1619
      %v2279 = vpack.c.b16 %v1954, %v1953
      %v2280 = vpack.c.b16 %v1956, %v1955
      %v2281 = vpack.c.b16 %v1958, %v1957
      %v2282 = vpack.c.b16 %v1960, %v1959
      %v2283 = vpack.c.b16 %v1962, %v1961
      %v2284 = vpack.c.b16 %v1964, %v1963
      %v2285 = vpack.c.b16 %v1966, %v1965
      %v2286 = vpack.c.b16 %v1968, %v1967
      %v2287 = vpack.c.b16 %v1970, %v1969
      %v2288 = vpack.c.b16 %v1972, %v1971
      %v2289 = vpack.c.b16 %v1974, %v1973
      %v2290 = vpack.c.b16 %v1976, %v1975
      %v2291 = vpack.c.b16 %v1978, %v1977
      %v2292 = vpack.c.b16 %v1980, %v1979
      %v2293 = vpack.c.b16 %v1982, %v1981
      %v2294 = vpack.c.b16 %v1984, %v1983
      %v2295 = vpack.c.b16 %v1986, %v1985
      %v2296 = vpack.c.b16 %v1988, %v1987
      %v2297 = vpack.c.b16 %v1990, %v1989
      %v2298 = vpack.c.b16 %v1992, %v1991
      %v2299 = vpack.c.b16 %v1994, %v1993
      %v2300 = vpack.c.b16 %v1996, %v1995
      %v2301 = vpack.c.b16 %v1998, %v1997
      %v2302 = vpack.c.b16 %v2000, %v1999
      %v2303 = vpack.c.b16 %v2002, %v2001
      %v2304 = vpack.c.b16 %v2004, %v2003
      %v2305 = vpack.c.b16 %v2006, %v2005
      %v2306 = vpack.c.b16 %v2008, %v2007
      %v2307 = vpack.c.b16 %v2010, %v2009
      %v2308 = vpack.c.b16 %v2012, %v2011
      %v2309 = vpack.c.b16 %v2014, %v2013
      %v2310 = vpack.c.b16 %v2016, %v2015
      %v2311 = vpack.c.b16 %v2018, %v2017
      %v2312 = vpack.c.b16 %v2020, %v2019
      %v2313 = vpack.c.b16 %v2022, %v2021
      %v2314 = vpack.c.b16 %v2024, %v2023
      %v2315 = vpack.c.b16 %v2026, %v2025
      %v2316 = vpack.c.b16 %v2028, %v2027
      %v2317 = vpack.c.b16 %v2030, %v2029
      %v2318 = vpack.c.b16 %v2032, %v2031
      %v2319 = vpack.c.b16 %v2034, %v2033
      %v2320 = vpack.c.b16 %v2036, %v2035
      %v2321 = vpack.c.b16 %v2038, %v2037
      %v2322 = vpack.c.b16 %v2040, %v2039
      %v2323 = vpack.c.b16 %v2042, %v2041
      %v2324 = vpack.c.b16 %v2044, %v2043
      %v2325 = vpack.c.b16 %v2046, %v2045
      %v2326 = vpack.c.b16 %v2048, %v2047
      %v2327 = vpack.c.b16 %v2050, %v2049
      %v2328 = vpack.c.b16 %v2052, %v2051
      %v2329 = vpack.c.b16 %v2054, %v2053
      %v2330 = vpack.c.b16 %v2056, %v2055
      %v2331 = vpack.c.b16 %v2058, %v2057
      %v2332 = vpack.c.b16 %v2060, %v2059
      %v2333 = vpack.c.b16 %v2062, %v2061
      %v2334 = vpack.c.b16 %v2064, %v2063
      %v2335 = vpack.c.b16 %v2066, %v2065
      %v2336 = vpack.c.b16 %v2068, %v2067
      %v2337 = vpack.c.b16 %v2070, %v2069
      %v2338 = vpack.c.b16 %v2072, %v2071
      %v2339 = vpack.c.b16 %v2074, %v2073
      %v2340 = vpack.c.b16 %v2076, %v2075
      %v2341 = vpack.c.b16 %v2078, %v2077
      %v2342 = vpack.c.b16 %v2080, %v2079
      %v2343 = vpack.c.b16 %v2082, %v2081
      %v2344 = vpack.c.b16 %v2084, %v2083
      %v2345 = vpack.c.b16 %v2086, %v2085
      %v2346 = vpack.c.b16 %v2088, %v2087
      %v2347 = vpack.c.b16 %v2090, %v2089
      %v2348 = vpack.c.b16 %v2092, %v2091
      %v2349 = vpack.c.b16 %v2094, %v2093
      %v2350 = vpack.c.b16 %v2096, %v2095
      %v2351 = vpack.c.b16 %v2098, %v2097
      %v2352 = vpack.c.b16 %v2100, %v2099
      %v2353 = vpack.c.b16 %v2102, %v2101
      %v2354 = vpack.c.b16 %v2104, %v2103
      %v2355 = vpack.c.b16 %v2106, %v2105
      %v2356 = vpack.c.b16 %v2108, %v2107
      %v2357 = vpack.c.b16 %v2110, %v2109
      %v2358 = vpack.c.b16 %v2112, %v2111
      %v2359 = vpack.c.b16 %v2114, %v2113
      %v2360 = vpack.c.b16 %v2116, %v2115
      %v2361 = vpack.c.b16 %v2118, %v2117
      %v2362 = vpack.c.b16 %v2120, %v2119
      %v2363 = vpack.c.b16 %v2122, %v2121
      %v2364 = vpack.c.b16 %v2124, %v2123
      %v2365 = vpack.c.b16 %v2126, %v2125
      %v2366 = vpack.c.b16 %v2128, %v2127
      %v2367 = vpack.c.b16 %v2130, %v2129
      %v2368 = vpack.c.b16 %v2132, %v2131
      %v2369 = vpack.c.b16 %v2134, %v2133
      %v2370 = vpack.c.b16 %v2136, %v2135
      %v2371 = vpack.c.b16 %v2138, %v2137
      %v2372 = vpack.c.b16 %v2140, %v2139
      %v2373 = vpack.c.b16 %v2142, %v2141
      %v2374 = vpack.c.b16 %v2144, %v2143
      %v2375 = vpack.c.b16 %v2146, %v2145
      %v2376 = vpack.c.b16 %v2148, %v2147
      %v2377 = vpack.c.b16 %v2150, %v2149
      %v2378 = vpack.c.b16 %v2152, %v2151
      %v2379 = vpack.c.b16 %v2154, %v2153
      %v2380 = vpack.c.b16 %v2156, %v2155
      %v2381 = vpack.c.b16 %v2158, %v2157
      %v2382 = vpack.c.b16 %v2160, %v2159
      %v2383 = vpack.c.b16 %v2162, %v2161
      %v2384 = vpack.c.b16 %v2164, %v2163
      %v2385 = vpack.c.b16 %v2166, %v2165
      %v2386 = vpack.c.b16 %v2168, %v2167
      %v2387 = vpack.c.b16 %v2170, %v2169
      %v2388 = vpack.c.b16 %v2172, %v2171
      %v2389 = vpack.c.b16 %v2174, %v2173
      %v2390 = vpack.c.b16 %v2176, %v2175
      %v2391 = vpack.c.b16 %v2178, %v2177
      %v2392 = vpack.c.b16 %v2180, %v2179
      %v2393 = vpack.c.b16 %v2182, %v2181
      %v2394 = vpack.c.b16 %v2184, %v2183
      %v2395 = vpack.c.b16 %v2186, %v2185
      %v2396 = vpack.c.b16 %v2188, %v2187
      %v2397 = vpack.c.b16 %v2190, %v2189
      %v2398 = vpack.c.b16 %v2192, %v2191
      %v2399 = vpack.c.b16 %v2194, %v2193
      %v2400 = vpack.c.b16 %v2196, %v2195
      %v2401 = vpack.c.b16 %v2198, %v2197
      %v2402 = vpack.c.b16 %v2200, %v2199
      %v2403 = vpack.c.b16 %v2202, %v2201
      %v2404 = vpack.c.b16 %v2204, %v2203
      %v2405 = vpack.c.b16 %v2206, %v2205
      %v2406 = vpack.c.b16 %v2208, %v2207
      %v2407 = vpack.c.b16 %v2210, %v2209
      %v2408 = vpack.c.b16 %v2212, %v2211
      %v2409 = vpack.c.b16 %v2214, %v2213
      %v2410 = vpack.c.b16 %v2216, %v2215
      %v2411 = vpack.c.b16 %v2218, %v2217
      %v2412 = vpack.c.b16 %v2220, %v2219
      %v2413 = vpack.c.b16 %v2222, %v2221
      %v2414 = vpack.c.b16 %v2224, %v2223
      %v2415 = vpack.c.b16 %v2226, %v2225
      %v2416 = vpack.c.b16 %v2228, %v2227
      %v2417 = vpack.c.b16 %v2230, %v2229
      %v2418 = vpack.c.b16 %v2232, %v2231
      %v2419 = vpack.c.b16 %v2234, %v2233
      %v2420 = vpack.c.b16 %v2236, %v2235
      %v2421 = vpack.c.b16 %v2238, %v2237
      %v2422 = vpack.c.b16 %v2240, %v2239
      %v2423 = vpack.c.b16 %v2242, %v2241
      %v2424 = vpack.c.b16 %v2244, %v2243
      %v2425 = vpack.c.b16 %v2246, %v2245
      %v2426 = vpack.c.b16 %v2248, %v2247
      %v2427 = vpack.c.b16 %v2250, %v2249
      %v2428 = vpack.c.b16 %v2252, %v2251
      %v2429 = vpack.c.b16 %v2254, %v2253
      %v2430 = vpack.c.b16 %v2256, %v2255
      %v2431 = vpack.c.b16 %v2258, %v2257
      %v2432 = vpack.c.b16 %v2260, %v2259
      %v2433 = vpack.c.b16 %v2262, %v2261
      %v2434 = vpack.c.b16 %v2264, %v2263
      %v2435 = vpack.c.b16 %v2266, %v2265
      %v2436 = vpack.c.b16 %v2268, %v2267
      %v2437 = vpack.c.b16 %v2270, %v2269
      %v2438 = vpack.c.b16 %v2272, %v2271
      %v2439 = vpack.c.b16 %v2274, %v2273
      %v2440 = vpack.c.b16 %v2276, %v2275
      %v2441 = vpack.c.b16 %v2278, %v2277
      %vm2604 = vcmask 359424
      %v2606 = vsel %vm2604, %v978, 0
      %v2609 = vsel %vm2604, %v999, 0
      %v2612 = vsel %vm2604, %v1020, 0
      %v2615 = vsel %vm2604, %v1041, 0
      %v2618 = vsel %vm2604, %v1062, 0
      %v2621 = vsel %vm2604, %v1083, 0
      %v2624 = vsel %vm2604, %v1104, 0
      %v2627 = vsel %vm2604, %v1125, 0
      %v2630 = vsel %vm2604, %v1146, 0
      %v2633 = vsel %vm2604, %v1167, 0
      %v2636 = vsel %vm2604, %v1188, 0
      %v2639 = vsel %vm2604, %v1209, 0
      %v2642 = vsel %vm2604, %v1230, 0
      %v2645 = vsel %vm2604, %v1251, 0
      %v2648 = vsel %vm2604, %v1272, 0
      %v2651 = vsel %vm2604, %v1293, 0
      %vm2653 = vcmask 1045504
      %v2655 = vsel %vm2653, %v2441, 0
      %2657 = vmatprep.subr.bf16.mxu0 0
      %2658 = vmatpush1.bf16.msra.mxu0 %v2279
      %2659 = vmatprep.subr.bf16.mxu0 0
      %2660 = vmatpush1.bf16.msra.mxu0 %v2280
      %2661 = vmatprep.subr.bf16.mxu0 0
      %2662 = vmatpush1.bf16.msra.mxu0 %v2281
      %2663 = vmatprep.subr.bf16.mxu0 0
      %2664 = vmatpush1.bf16.msra.mxu0 %v2282
      %2665 = vmatprep.subr.bf16.mxu0 0
      %2666 = vmatpush1.bf16.msra.mxu0 %v2283
      %2667 = vmatprep.subr.bf16.mxu0 0
      %2668 = vmatpush1.bf16.msra.mxu0 %v2284
      %2669 = vmatprep.subr.bf16.mxu0 0
      %2670 = vmatpush1.bf16.msra.mxu0 %v2285
      %2671 = vmatprep.subr.bf16.mxu0 0
      %2672 = vmatpush1.bf16.msra.mxu0 %v2286
      %2673 = vmatprep.subr.bf16.mxu0 0
      %2674 = vmatpush1.bf16.msra.mxu0 %v2287
      %2675 = vmatprep.subr.bf16.mxu0 0
      %2676 = vmatpush1.bf16.msra.mxu0 %v2288
      %2677 = vmatprep.subr.bf16.mxu0 0
      %2678 = vmatpush1.bf16.msra.mxu0 %v2289
      %2679 = vmatprep.subr.bf16.mxu0 0
      %2680 = vmatpush1.bf16.msra.mxu0 %v2290
      %2681 = vmatprep.subr.bf16.mxu0 0
      %2682 = vmatpush1.bf16.msra.mxu0 %v2291
      %2683 = vmatprep.subr.bf16.mxu0 0
      %2684 = vmatpush1.bf16.msra.mxu0 %v2292
      %2685 = vmatprep.subr.bf16.mxu0 0
      %2686 = vmatpush1.bf16.msra.mxu0 %v2293
      %2687 = vmatprep.subr.bf16.mxu0 0
      %2688 = vmatpush1.bf16.msra.mxu0 %v2294
      %2689 = vmatprep.mubr.bf16.mxu0 %v959
      %2690 = vmatmul.mubr.bf16.gmra.mrb[0].mxu0 %v958
      %v2691 = vpop.f32.mrb[0].mxu0
      %v2692 = vadd.f32 %v1625, %v2691
      %v2693 = vpop.f32.mrb[0].mxu0
      %v2694 = vpop.f32.mrb[0].mxu0
      %v2695 = vadd.f32 %v1625, %v2694
      %v2696 = vpop.f32.mrb[0].mxu0
      %2697 = vmatprep.mubr.bf16.mxu0 %v980
      %2698 = vmatmul.mubr.bf16.gmra.mrb[0].mxu0 %v979
      %v2699 = vpop.f32.mrb[0].mxu0
      %v2700 = vadd.f32 %v1625, %v2699
      %v2701 = vpop.f32.mrb[0].mxu0
      %v2702 = vpop.f32.mrb[0].mxu0
      %v2703 = vadd.f32 %v1625, %v2702
      %v2704 = vpop.f32.mrb[0].mxu0
      %2705 = vmatprep.mubr.bf16.mxu0 %v1001
      %2706 = vmatmul.mubr.bf16.gmra.mrb[0].mxu0 %v1000
      %v2707 = vpop.f32.mrb[0].mxu0
      %v2708 = vadd.f32 %v1625, %v2707
      %v2709 = vpop.f32.mrb[0].mxu0
      %v2710 = vpop.f32.mrb[0].mxu0
      %v2711 = vadd.f32 %v1625, %v2710
      %v2712 = vpop.f32.mrb[0].mxu0
      %2713 = vmatprep.mubr.bf16.mxu0 %v1022
      %2714 = vmatmul.mubr.bf16.gmra.mrb[0].mxu0 %v1021
      %v2715 = vpop.f32.mrb[0].mxu0
      %v2716 = vadd.f32 %v1625, %v2715
      %v2717 = vpop.f32.mrb[0].mxu0
      %v2718 = vpop.f32.mrb[0].mxu0
      %v2719 = vadd.f32 %v1625, %v2718
      %v2720 = vpop.f32.mrb[0].mxu0
      %2721 = vmatprep.mubr.bf16.mxu0 %v1043
      %2722 = vmatmul.mubr.bf16.gmra.mrb[0].mxu0 %v1042
      %v2723 = vpop.f32.mrb[0].mxu0
      %v2724 = vadd.f32 %v1625, %v2723
      %v2725 = vpop.f32.mrb[0].mxu0
      %v2726 = vpop.f32.mrb[0].mxu0
      %v2727 = vadd.f32 %v1625, %v2726
      %v2728 = vpop.f32.mrb[0].mxu0
      %2729 = vmatprep.mubr.bf16.mxu0 %v1064
      %2730 = vmatmul.mubr.bf16.gmra.mrb[0].mxu0 %v1063
      %v2731 = vpop.f32.mrb[0].mxu0
      %v2732 = vadd.f32 %v1625, %v2731
      %v2733 = vpop.f32.mrb[0].mxu0
      %v2734 = vpop.f32.mrb[0].mxu0
      %v2735 = vadd.f32 %v1625, %v2734
      %v2736 = vpop.f32.mrb[0].mxu0
      %2737 = vmatprep.mubr.bf16.mxu0 %v1085
      %2738 = vmatmul.mubr.bf16.gmra.mrb[0].mxu0 %v1084
      %v2739 = vpop.f32.mrb[0].mxu0
      %v2740 = vadd.f32 %v1625, %v2739
      %v2741 = vpop.f32.mrb[0].mxu0
      %v2742 = vpop.f32.mrb[0].mxu0
      %v2743 = vadd.f32 %v1625, %v2742
      %v2744 = vpop.f32.mrb[0].mxu0
      %2745 = vmatprep.mubr.bf16.mxu0 %v1106
      %2746 = vmatmul.mubr.bf16.gmra.mrb[0].mxu0 %v1105
      %v2747 = vpop.f32.mrb[0].mxu0
      %v2748 = vadd.f32 %v1625, %v2747
      %v2749 = vpop.f32.mrb[0].mxu0
      %v2750 = vpop.f32.mrb[0].mxu0
      %v2751 = vadd.f32 %v1625, %v2750
      %v2752 = vpop.f32.mrb[0].mxu0
      %2753 = vmatprep.mubr.bf16.mxu0 %v1127
      %2754 = vmatmul.mubr.bf16.gmra.mrb[0].mxu0 %v1126
      %v2755 = vpop.f32.mrb[0].mxu0
      %v2756 = vadd.f32 %v1625, %v2755
      %v2757 = vpop.f32.mrb[0].mxu0
      %v2758 = vpop.f32.mrb[0].mxu0
      %v2759 = vadd.f32 %v1625, %v2758
      %v2760 = vpop.f32.mrb[0].mxu0
      %2761 = vmatprep.mubr.bf16.mxu0 %v1148
      %2762 = vmatmul.mubr.bf16.gmra.mrb[0].mxu0 %v1147
      %v2763 = vpop.f32.mrb[0].mxu0
      %v2764 = vadd.f32 %v1625, %v2763
      %v2765 = vpop.f32.mrb[0].mxu0
      %v2766 = vpop.f32.mrb[0].mxu0
      %v2767 = vadd.f32 %v1625, %v2766
      %v2768 = vpop.f32.mrb[0].mxu0
      %2769 = vmatprep.mubr.bf16.mxu0 %v1169
      %2770 = vmatmul.mubr.bf16.gmra.mrb[0].mxu0 %v1168
      %v2771 = vpop.f32.mrb[0].mxu0
      %v2772 = vadd.f32 %v1625, %v2771
      %v2773 = vpop.f32.mrb[0].mxu0
      %v2774 = vpop.f32.mrb[0].mxu0
      %v2775 = vadd.f32 %v1625, %v2774
      %v2776 = vpop.f32.mrb[0].mxu0
      %2777 = vmatprep.mubr.bf16.mxu0 %v1190
      %2778 = vmatmul.mubr.bf16.gmra.mrb[0].mxu0 %v1189
      %v2779 = vpop.f32.mrb[0].mxu0
      %v2780 = vadd.f32 %v1625, %v2779
      %v2781 = vpop.f32.mrb[0].mxu0
      %v2782 = vpop.f32.mrb[0].mxu0
      %v2783 = vadd.f32 %v1625, %v2782
      %v2784 = vpop.f32.mrb[0].mxu0
      %2785 = vmatprep.mubr.bf16.mxu0 %v1211
      %2786 = vmatmul.mubr.bf16.gmra.mrb[0].mxu0 %v1210
      %v2787 = vpop.f32.mrb[0].mxu0
      %v2788 = vadd.f32 %v1625, %v2787
      %v2789 = vpop.f32.mrb[0].mxu0
      %v2790 = vpop.f32.mrb[0].mxu0
      %v2791 = vadd.f32 %v1625, %v2790
      %v2792 = vpop.f32.mrb[0].mxu0
      %2793 = vmatprep.mubr.bf16.mxu0 %v1232
      %2794 = vmatmul.mubr.bf16.gmra.mrb[0].mxu0 %v1231
      %v2795 = vpop.f32.mrb[0].mxu0
      %v2796 = vadd.f32 %v1625, %v2795
      %v2797 = vpop.f32.mrb[0].mxu0
      %v2798 = vpop.f32.mrb[0].mxu0
      %v2799 = vadd.f32 %v1625, %v2798
      %v2800 = vpop.f32.mrb[0].mxu0
      %2801 = vmatprep.mubr.bf16.mxu0 %v1253
      %2802 = vmatmul.mubr.bf16.gmra.mrb[0].mxu0 %v1252
      %v2803 = vpop.f32.mrb[0].mxu0
      %v2804 = vadd.f32 %v1625, %v2803
      %v2805 = vpop.f32.mrb[0].mxu0
      %v2806 = vpop.f32.mrb[0].mxu0
      %v2807 = vadd.f32 %v1625, %v2806
      %v2808 = vpop.f32.mrb[0].mxu0
      %2809 = vmatprep.mubr.bf16.mxu0 %v1274
      %2810 = vmatmul.mubr.bf16.gmra.mrb[0].mxu0 %v1273
      %v2811 = vpop.f32.mrb[0].mxu0
      %v2812 = vadd.f32 %v1625, %v2811
      %v2813 = vpop.f32.mrb[0].mxu0
      %v2814 = vpop.f32.mrb[0].mxu0
      %v2815 = vadd.f32 %v1625, %v2814
      %v2816 = vpop.f32.mrb[0].mxu0
      %2817 = vdwg.mxu0
      %2818 = vmatprep.subr.bf16.mxu0 0
      %2819 = vmatpush1.bf16.msra.mxu0 %v2295
      %2820 = vmatprep.subr.bf16.mxu0 0
      %2821 = vmatpush1.bf16.msra.mxu0 %v2296
      %2822 = vmatprep.subr.bf16.mxu0 0
      %2823 = vmatpush1.bf16.msra.mxu0 %v2297
      %2824 = vmatprep.subr.bf16.mxu0 0
      %2825 = vmatpush1.bf16.msra.mxu0 %v2298
      %2826 = vmatprep.subr.bf16.mxu0 0
      %2827 = vmatpush1.bf16.msra.mxu0 %v2299
      %2828 = vmatprep.subr.bf16.mxu0 0
      %2829 = vmatpush1.bf16.msra.mxu0 %v2300
      %2830 = vmatprep.subr.bf16.mxu0 0
      %2831 = vmatpush1.bf16.msra.mxu0 %v2301
      %2832 = vmatprep.subr.bf16.mxu0 0
      %2833 = vmatpush1.bf16.msra.mxu0 %v2302
      %2834 = vmatprep.subr.bf16.mxu0 0
      %2835 = vmatpush1.bf16.msra.mxu0 %v2303
      %2836 = vmatprep.subr.bf16.mxu0 0
      %2837 = vmatpush1.bf16.msra.mxu0 %v2304
      %2838 = vmatprep.subr.bf16.mxu0 0
      %2839 = vmatpush1.bf16.msra.mxu0 %v2305
      %2840 = vmatprep.subr.bf16.mxu0 0
      %2841 = vmatpush1.bf16.msra.mxu0 %v2306
      %2842 = vmatprep.subr.bf16.mxu0 0
      %2843 = vmatpush1.bf16.msra.mxu0 %v2307
      %2844 = vmatprep.subr.bf16.mxu0 0
      %2845 = vmatpush1.bf16.msra.mxu0 %v2308
      %2846 = vmatprep.subr.bf16.mxu0 0
      %2847 = vmatpush1.bf16.msra.mxu0 %v2309
      %2848 = vmatprep.subr.bf16.mxu0 0
      %2849 = vmatpush1.bf16.msra.mxu0 %v2310
      %2850 = vmatprep.mubr.bf16.mxu0 %v961
      %2851 = vmatmul.mubr.bf16.gmra.mrb[0].mxu0 %v960
      %v2852 = vpop.f32.mrb[0].mxu0
      %v2853 = vadd.f32 %v2692, %v2852
      %v2854 = vpop.f32.mrb[0].mxu0
      %v2855 = vpop.f32.mrb[0].mxu0
      %v2856 = vadd.f32 %v2695, %v2855
      %v2857 = vpop.f32.mrb[0].mxu0
      %2858 = vmatprep.mubr.bf16.mxu0 %v982
      %2859 = vmatmul.mubr.bf16.gmra.mrb[0].mxu0 %v981
      %v2860 = vpop.f32.mrb[0].mxu0
      %v2861 = vadd.f32 %v2700, %v2860
      %v2862 = vpop.f32.mrb[0].mxu0
      %v2863 = vpop.f32.mrb[0].mxu0
      %v2864 = vadd.f32 %v2703, %v2863
      %v2865 = vpop.f32.mrb[0].mxu0
      %2866 = vmatprep.mubr.bf16.mxu0 %v1003
      %2867 = vmatmul.mubr.bf16.gmra.mrb[0].mxu0 %v1002
      %v2868 = vpop.f32.mrb[0].mxu0
      %v2869 = vadd.f32 %v2708, %v2868
      %v2870 = vpop.f32.mrb[0].mxu0
      %v2871 = vpop.f32.mrb[0].mxu0
      %v2872 = vadd.f32 %v2711, %v2871
      %v2873 = vpop.f32.mrb[0].mxu0
      %2874 = vmatprep.mubr.bf16.mxu0 %v1024
      %2875 = vmatmul.mubr.bf16.gmra.mrb[0].mxu0 %v1023
      %v2876 = vpop.f32.mrb[0].mxu0
      %v2877 = vadd.f32 %v2716, %v2876
      %v2878 = vpop.f32.mrb[0].mxu0
      %v2879 = vpop.f32.mrb[0].mxu0
      %v2880 = vadd.f32 %v2719, %v2879
      %v2881 = vpop.f32.mrb[0].mxu0
      %2882 = vmatprep.mubr.bf16.mxu0 %v1045
      %2883 = vmatmul.mubr.bf16.gmra.mrb[0].mxu0 %v1044
      %v2884 = vpop.f32.mrb[0].mxu0
      %v2885 = vadd.f32 %v2724, %v2884
      %v2886 = vpop.f32.mrb[0].mxu0
      %v2887 = vpop.f32.mrb[0].mxu0
      %v2888 = vadd.f32 %v2727, %v2887
      %v2889 = vpop.f32.mrb[0].mxu0
      %2890 = vmatprep.mubr.bf16.mxu0 %v1066
      %2891 = vmatmul.mubr.bf16.gmra.mrb[0].mxu0 %v1065
      %v2892 = vpop.f32.mrb[0].mxu0
      %v2893 = vadd.f32 %v2732, %v2892
      %v2894 = vpop.f32.mrb[0].mxu0
      %v2895 = vpop.f32.mrb[0].mxu0
      %v2896 = vadd.f32 %v2735, %v2895
      %v2897 = vpop.f32.mrb[0].mxu0
      %2898 = vmatprep.mubr.bf16.mxu0 %v1087
      %2899 = vmatmul.mubr.bf16.gmra.mrb[0].mxu0 %v1086
      %v2900 = vpop.f32.mrb[0].mxu0
      %v2901 = vadd.f32 %v2740, %v2900
      %v2902 = vpop.f32.mrb[0].mxu0
      %v2903 = vpop.f32.mrb[0].mxu0
      %v2904 = vadd.f32 %v2743, %v2903
      %v2905 = vpop.f32.mrb[0].mxu0
      %2906 = vmatprep.mubr.bf16.mxu0 %v1108
      %2907 = vmatmul.mubr.bf16.gmra.mrb[0].mxu0 %v1107
      %v2908 = vpop.f32.mrb[0].mxu0
      %v2909 = vadd.f32 %v2748, %v2908
      %v2910 = vpop.f32.mrb[0].mxu0
      %v2911 = vpop.f32.mrb[0].mxu0
      %v2912 = vadd.f32 %v2751, %v2911
      %v2913 = vpop.f32.mrb[0].mxu0
      %2914 = vmatprep.mubr.bf16.mxu0 %v1129
      %2915 = vmatmul.mubr.bf16.gmra.mrb[0].mxu0 %v1128
      %v2916 = vpop.f32.mrb[0].mxu0
      %v2917 = vadd.f32 %v2756, %v2916
      %v2918 = vpop.f32.mrb[0].mxu0
      %v2919 = vpop.f32.mrb[0].mxu0
      %v2920 = vadd.f32 %v2759, %v2919
      %v2921 = vpop.f32.mrb[0].mxu0
      %2922 = vmatprep.mubr.bf16.mxu0 %v1150
      %2923 = vmatmul.mubr.bf16.gmra.mrb[0].mxu0 %v1149
      %v2924 = vpop.f32.mrb[0].mxu0
      %v2925 = vadd.f32 %v2764, %v2924
      %v2926 = vpop.f32.mrb[0].mxu0
      %v2927 = vpop.f32.mrb[0].mxu0
      %v2928 = vadd.f32 %v2767, %v2927
      %v2929 = vpop.f32.mrb[0].mxu0
      %2930 = vmatprep.mubr.bf16.mxu0 %v1171
      %2931 = vmatmul.mubr.bf16.gmra.mrb[0].mxu0 %v1170
      %v2932 = vpop.f32.mrb[0].mxu0
      %v2933 = vadd.f32 %v2772, %v2932
      %v2934 = vpop.f32.mrb[0].mxu0
      %v2935 = vpop.f32.mrb[0].mxu0
      %v2936 = vadd.f32 %v2775, %v2935
      %v2937 = vpop.f32.mrb[0].mxu0
      %2938 = vmatprep.mubr.bf16.mxu0 %v1192
      %2939 = vmatmul.mubr.bf16.gmra.mrb[0].mxu0 %v1191
      %v2940 = vpop.f32.mrb[0].mxu0
      %v2941 = vadd.f32 %v2780, %v2940
      %v2942 = vpop.f32.mrb[0].mxu0
      %v2943 = vpop.f32.mrb[0].mxu0
      %v2944 = vadd.f32 %v2783, %v2943
      %v2945 = vpop.f32.mrb[0].mxu0
      %2946 = vmatprep.mubr.bf16.mxu0 %v1213
      %2947 = vmatmul.mubr.bf16.gmra.mrb[0].mxu0 %v1212
      %v2948 = vpop.f32.mrb[0].mxu0
      %v2949 = vadd.f32 %v2788, %v2948
      %v2950 = vpop.f32.mrb[0].mxu0
      %v2951 = vpop.f32.mrb[0].mxu0
      %v2952 = vadd.f32 %v2791, %v2951
      %v2953 = vpop.f32.mrb[0].mxu0
      %2954 = vmatprep.mubr.bf16.mxu0 %v1234
      %2955 = vmatmul.mubr.bf16.gmra.mrb[0].mxu0 %v1233
      %v2956 = vpop.f32.mrb[0].mxu0
      %v2957 = vadd.f32 %v2796, %v2956
      %v2958 = vpop.f32.mrb[0].mxu0
      %v2959 = vpop.f32.mrb[0].mxu0
      %v2960 = vadd.f32 %v2799, %v2959
      %v2961 = vpop.f32.mrb[0].mxu0
      %2962 = vmatprep.mubr.bf16.mxu0 %v1255
      %2963 = vmatmul.mubr.bf16.gmra.mrb[0].mxu0 %v1254
      %v2964 = vpop.f32.mrb[0].mxu0
      %v2965 = vadd.f32 %v2804, %v2964
      %v2966 = vpop.f32.mrb[0].mxu0
      %v2967 = vpop.f32.mrb[0].mxu0
      %v2968 = vadd.f32 %v2807, %v2967
      %v2969 = vpop.f32.mrb[0].mxu0
      %2970 = vmatprep.mubr.bf16.mxu0 %v1276
      %2971 = vmatmul.mubr.bf16.gmra.mrb[0].mxu0 %v1275
      %v2972 = vpop.f32.mrb[0].mxu0
      %v2973 = vadd.f32 %v2812, %v2972
      %v2974 = vpop.f32.mrb[0].mxu0
      %v2975 = vpop.f32.mrb[0].mxu0
      %v2976 = vadd.f32 %v2815, %v2975
      %v2977 = vpop.f32.mrb[0].mxu0
      %2978 = vdwg.mxu0
      %2979 = vmatprep.subr.bf16.mxu0 0
      %2980 = vmatpush1.bf16.msra.mxu0 %v2311
      %2981 = vmatprep.subr.bf16.mxu0 0
      %2982 = vmatpush1.bf16.msra.mxu0 %v2312
      %2983 = vmatprep.subr.bf16.mxu0 0
      %2984 = vmatpush1.bf16.msra.mxu0 %v2313
      %2985 = vmatprep.subr.bf16.mxu0 0
      %2986 = vmatpush1.bf16.msra.mxu0 %v2314
      %2987 = vmatprep.subr.bf16.mxu0 0
      %2988 = vmatpush1.bf16.msra.mxu0 %v2315
      %2989 = vmatprep.subr.bf16.mxu0 0
      %2990 = vmatpush1.bf16.msra.mxu0 %v2316
      %2991 = vmatprep.subr.bf16.mxu0 0
      %2992 = vmatpush1.bf16.msra.mxu0 %v2317
      %2993 = vmatprep.subr.bf16.mxu0 0
      %2994 = vmatpush1.bf16.msra.mxu0 %v2318
      %2995 = vmatprep.subr.bf16.mxu0 0
      %2996 = vmatpush1.bf16.msra.mxu0 %v2319
      %2997 = vmatprep.subr.bf16.mxu0 0
      %2998 = vmatpush1.bf16.msra.mxu0 %v2320
      %2999 = vmatprep.subr.bf16.mxu0 0
      %3000 = vmatpush1.bf16.msra.mxu0 %v2321
      %3001 = vmatprep.subr.bf16.mxu0 0
      %3002 = vmatpush1.bf16.msra.mxu0 %v2322
      %3003 = vmatprep.subr.bf16.mxu0 0
      %3004 = vmatpush1.bf16.msra.mxu0 %v2323
      %3005 = vmatprep.subr.bf16.mxu0 0
      %3006 = vmatpush1.bf16.msra.mxu0 %v2324
      %3007 = vmatprep.subr.bf16.mxu0 0
      %3008 = vmatpush1.bf16.msra.mxu0 %v2325
      %3009 = vmatprep.subr.bf16.mxu0 0
      %3010 = vmatpush1.bf16.msra.mxu0 %v2326
      %3011 = vmatprep.mubr.bf16.mxu0 %v963
      %3012 = vmatmul.mubr.bf16.gmra.mrb[0].mxu0 %v962
      %v3013 = vpop.f32.mrb[0].mxu0
      %v3014 = vadd.f32 %v2853, %v3013
      %v3015 = vpop.f32.mrb[0].mxu0
      %v3016 = vpop.f32.mrb[0].mxu0
      %v3017 = vadd.f32 %v2856, %v3016
      %v3018 = vpop.f32.mrb[0].mxu0
      %3019 = vmatprep.mubr.bf16.mxu0 %v984
      %3020 = vmatmul.mubr.bf16.gmra.mrb[0].mxu0 %v983
      %v3021 = vpop.f32.mrb[0].mxu0
      %v3022 = vadd.f32 %v2861, %v3021
      %v3023 = vpop.f32.mrb[0].mxu0
      %v3024 = vpop.f32.mrb[0].mxu0
      %v3025 = vadd.f32 %v2864, %v3024
      %v3026 = vpop.f32.mrb[0].mxu0
      %3027 = vmatprep.mubr.bf16.mxu0 %v1005
      %3028 = vmatmul.mubr.bf16.gmra.mrb[0].mxu0 %v1004
      %v3029 = vpop.f32.mrb[0].mxu0
      %v3030 = vadd.f32 %v2869, %v3029
      %v3031 = vpop.f32.mrb[0].mxu0
      %v3032 = vpop.f32.mrb[0].mxu0
      %v3033 = vadd.f32 %v2872, %v3032
      %v3034 = vpop.f32.mrb[0].mxu0
      %3035 = vmatprep.mubr.bf16.mxu0 %v1026
      %3036 = vmatmul.mubr.bf16.gmra.mrb[0].mxu0 %v1025
      %v3037 = vpop.f32.mrb[0].mxu0
      %v3038 = vadd.f32 %v2877, %v3037
      %v3039 = vpop.f32.mrb[0].mxu0
      %v3040 = vpop.f32.mrb[0].mxu0
      %v3041 = vadd.f32 %v2880, %v3040
      %v3042 = vpop.f32.mrb[0].mxu0
      %3043 = vmatprep.mubr.bf16.mxu0 %v1047
      %3044 = vmatmul.mubr.bf16.gmra.mrb[0].mxu0 %v1046
      %v3045 = vpop.f32.mrb[0].mxu0
      %v3046 = vadd.f32 %v2885, %v3045
      %v3047 = vpop.f32.mrb[0].mxu0
      %v3048 = vpop.f32.mrb[0].mxu0
      %v3049 = vadd.f32 %v2888, %v3048
      %v3050 = vpop.f32.mrb[0].mxu0
      %3051 = vmatprep.mubr.bf16.mxu0 %v1068
      %3052 = vmatmul.mubr.bf16.gmra.mrb[0].mxu0 %v1067
      %v3053 = vpop.f32.mrb[0].mxu0
      %v3054 = vadd.f32 %v2893, %v3053
      %v3055 = vpop.f32.mrb[0].mxu0
      %v3056 = vpop.f32.mrb[0].mxu0
      %v3057 = vadd.f32 %v2896, %v3056
      %v3058 = vpop.f32.mrb[0].mxu0
      %3059 = vmatprep.mubr.bf16.mxu0 %v1089
      %3060 = vmatmul.mubr.bf16.gmra.mrb[0].mxu0 %v1088
      %v3061 = vpop.f32.mrb[0].mxu0
      %v3062 = vadd.f32 %v2901, %v3061
      %v3063 = vpop.f32.mrb[0].mxu0
      %v3064 = vpop.f32.mrb[0].mxu0
      %v3065 = vadd.f32 %v2904, %v3064
      %v3066 = vpop.f32.mrb[0].mxu0
      %3067 = vmatprep.mubr.bf16.mxu0 %v1110
      %3068 = vmatmul.mubr.bf16.gmra.mrb[0].mxu0 %v1109
      %v3069 = vpop.f32.mrb[0].mxu0
      %v3070 = vadd.f32 %v2909, %v3069
      %v3071 = vpop.f32.mrb[0].mxu0
      %v3072 = vpop.f32.mrb[0].mxu0
      %v3073 = vadd.f32 %v2912, %v3072
      %v3074 = vpop.f32.mrb[0].mxu0
      %3075 = vmatprep.mubr.bf16.mxu0 %v1131
      %3076 = vmatmul.mubr.bf16.gmra.mrb[0].mxu0 %v1130
      %v3077 = vpop.f32.mrb[0].mxu0
      %v3078 = vadd.f32 %v2917, %v3077
      %v3079 = vpop.f32.mrb[0].mxu0
      %v3080 = vpop.f32.mrb[0].mxu0
      %v3081 = vadd.f32 %v2920, %v3080
      %v3082 = vpop.f32.mrb[0].mxu0
      %3083 = vmatprep.mubr.bf16.mxu0 %v1152
      %3084 = vmatmul.mubr.bf16.gmra.mrb[0].mxu0 %v1151
      %v3085 = vpop.f32.mrb[0].mxu0
      %v3086 = vadd.f32 %v2925, %v3085
      %v3087 = vpop.f32.mrb[0].mxu0
      %v3088 = vpop.f32.mrb[0].mxu0
      %v3089 = vadd.f32 %v2928, %v3088
      %v3090 = vpop.f32.mrb[0].mxu0
      %3091 = vmatprep.mubr.bf16.mxu0 %v1173
      %3092 = vmatmul.mubr.bf16.gmra.mrb[0].mxu0 %v1172
      %v3093 = vpop.f32.mrb[0].mxu0
      %v3094 = vadd.f32 %v2933, %v3093
      %v3095 = vpop.f32.mrb[0].mxu0
      %v3096 = vpop.f32.mrb[0].mxu0
      %v3097 = vadd.f32 %v2936, %v3096
      %v3098 = vpop.f32.mrb[0].mxu0
      %3099 = vmatprep.mubr.bf16.mxu0 %v1194
      %3100 = vmatmul.mubr.bf16.gmra.mrb[0].mxu0 %v1193
      %v3101 = vpop.f32.mrb[0].mxu0
      %v3102 = vadd.f32 %v2941, %v3101
      %v3103 = vpop.f32.mrb[0].mxu0
      %v3104 = vpop.f32.mrb[0].mxu0
      %v3105 = vadd.f32 %v2944, %v3104
      %v3106 = vpop.f32.mrb[0].mxu0
      %3107 = vmatprep.mubr.bf16.mxu0 %v1215
      %3108 = vmatmul.mubr.bf16.gmra.mrb[0].mxu0 %v1214
      %v3109 = vpop.f32.mrb[0].mxu0
      %v3110 = vadd.f32 %v2949, %v3109
      %v3111 = vpop.f32.mrb[0].mxu0
      %v3112 = vpop.f32.mrb[0].mxu0
      %v3113 = vadd.f32 %v2952, %v3112
      %v3114 = vpop.f32.mrb[0].mxu0
      %3115 = vmatprep.mubr.bf16.mxu0 %v1236
      %3116 = vmatmul.mubr.bf16.gmra.mrb[0].mxu0 %v1235
      %v3117 = vpop.f32.mrb[0].mxu0
      %v3118 = vadd.f32 %v2957, %v3117
      %v3119 = vpop.f32.mrb[0].mxu0
      %v3120 = vpop.f32.mrb[0].mxu0
      %v3121 = vadd.f32 %v2960, %v3120
      %v3122 = vpop.f32.mrb[0].mxu0
      %3123 = vmatprep.mubr.bf16.mxu0 %v1257
      %3124 = vmatmul.mubr.bf16.gmra.mrb[0].mxu0 %v1256
      %v3125 = vpop.f32.mrb[0].mxu0
      %v3126 = vadd.f32 %v2965, %v3125
      %v3127 = vpop.f32.mrb[0].mxu0
      %v3128 = vpop.f32.mrb[0].mxu0
      %v3129 = vadd.f32 %v2968, %v3128
      %v3130 = vpop.f32.mrb[0].mxu0
      %3131 = vmatprep.mubr.bf16.mxu0 %v1278
      %3132 = vmatmul.mubr.bf16.gmra.mrb[0].mxu0 %v1277
      %v3133 = vpop.f32.mrb[0].mxu0
      %v3134 = vadd.f32 %v2973, %v3133
      %v3135 = vpop.f32.mrb[0].mxu0
      %v3136 = vpop.f32.mrb[0].mxu0
      %v3137 = vadd.f32 %v2976, %v3136
      %v3138 = vpop.f32.mrb[0].mxu0
      %3139 = vdwg.mxu0
      %3140 = vmatprep.subr.bf16.mxu0 0
      %3141 = vmatpush1.bf16.msra.mxu0 %v2327
      %3142 = vmatprep.subr.bf16.mxu0 0
      %3143 = vmatpush1.bf16.msra.mxu0 %v2328
      %3144 = vmatprep.subr.bf16.mxu0 0
      %3145 = vmatpush1.bf16.msra.mxu0 %v2329
      %3146 = vmatprep.subr.bf16.mxu0 0
      %3147 = vmatpush1.bf16.msra.mxu0 %v2330
      %3148 = vmatprep.subr.bf16.mxu0 0
      %3149 = vmatpush1.bf16.msra.mxu0 %v2331
      %3150 = vmatprep.subr.bf16.mxu0 0
      %3151 = vmatpush1.bf16.msra.mxu0 %v2332
      %3152 = vmatprep.subr.bf16.mxu0 0
      %3153 = vmatpush1.bf16.msra.mxu0 %v2333
      %3154 = vmatprep.subr.bf16.mxu0 0
      %3155 = vmatpush1.bf16.msra.mxu0 %v2334
      %3156 = vmatprep.subr.bf16.mxu0 0
      %3157 = vmatpush1.bf16.msra.mxu0 %v2335
      %3158 = vmatprep.subr.bf16.mxu0 0
      %3159 = vmatpush1.bf16.msra.mxu0 %v2336
      %3160 = vmatprep.subr.bf16.mxu0 0
      %3161 = vmatpush1.bf16.msra.mxu0 %v2337
      %3162 = vmatprep.subr.bf16.mxu0 0
      %3163 = vmatpush1.bf16.msra.mxu0 %v2338
      %3164 = vmatprep.subr.bf16.mxu0 0
      %3165 = vmatpush1.bf16.msra.mxu0 %v2339
      %3166 = vmatprep.subr.bf16.mxu0 0
      %3167 = vmatpush1.bf16.msra.mxu0 %v2340
      %3168 = vmatprep.subr.bf16.mxu0 0
      %3169 = vmatpush1.bf16.msra.mxu0 %v2341
      %3170 = vmatprep.subr.bf16.mxu0 0
      %3171 = vmatpush1.bf16.msra.mxu0 %v2342
      %3172 = vmatprep.mubr.bf16.mxu0 %v965
      %3173 = vmatmul.mubr.bf16.gmra.mrb[0].mxu0 %v964
      %v3174 = vpop.f32.mrb[0].mxu0
      %v3175 = vadd.f32 %v3014, %v3174
      %v3176 = vpop.f32.mrb[0].mxu0
      %v3177 = vpop.f32.mrb[0].mxu0
      %v3178 = vadd.f32 %v3017, %v3177
      %v3179 = vpop.f32.mrb[0].mxu0
      %3180 = vmatprep.mubr.bf16.mxu0 %v986
      %3181 = vmatmul.mubr.bf16.gmra.mrb[0].mxu0 %v985
      %v3182 = vpop.f32.mrb[0].mxu0
      %v3183 = vadd.f32 %v3022, %v3182
      %v3184 = vpop.f32.mrb[0].mxu0
      %v3185 = vpop.f32.mrb[0].mxu0
      %v3186 = vadd.f32 %v3025, %v3185
      %v3187 = vpop.f32.mrb[0].mxu0
      %3188 = vmatprep.mubr.bf16.mxu0 %v1007
      %3189 = vmatmul.mubr.bf16.gmra.mrb[0].mxu0 %v1006
      %v3190 = vpop.f32.mrb[0].mxu0
      %v3191 = vadd.f32 %v3030, %v3190
      %v3192 = vpop.f32.mrb[0].mxu0
      %v3193 = vpop.f32.mrb[0].mxu0
      %v3194 = vadd.f32 %v3033, %v3193
      %v3195 = vpop.f32.mrb[0].mxu0
      %3196 = vmatprep.mubr.bf16.mxu0 %v1028
      %3197 = vmatmul.mubr.bf16.gmra.mrb[0].mxu0 %v1027
      %v3198 = vpop.f32.mrb[0].mxu0
      %v3199 = vadd.f32 %v3038, %v3198
      %v3200 = vpop.f32.mrb[0].mxu0
      %v3201 = vpop.f32.mrb[0].mxu0
      %v3202 = vadd.f32 %v3041, %v3201
      %v3203 = vpop.f32.mrb[0].mxu0
      %3204 = vmatprep.mubr.bf16.mxu0 %v1049
      %3205 = vmatmul.mubr.bf16.gmra.mrb[0].mxu0 %v1048
      %v3206 = vpop.f32.mrb[0].mxu0
      %v3207 = vadd.f32 %v3046, %v3206
      %v3208 = vpop.f32.mrb[0].mxu0
      %v3209 = vpop.f32.mrb[0].mxu0
      %v3210 = vadd.f32 %v3049, %v3209
      %v3211 = vpop.f32.mrb[0].mxu0
      %3212 = vmatprep.mubr.bf16.mxu0 %v1070
      %3213 = vmatmul.mubr.bf16.gmra.mrb[0].mxu0 %v1069
      %v3214 = vpop.f32.mrb[0].mxu0
      %v3215 = vadd.f32 %v3054, %v3214
      %v3216 = vpop.f32.mrb[0].mxu0
      %v3217 = vpop.f32.mrb[0].mxu0
      %v3218 = vadd.f32 %v3057, %v3217
      %v3219 = vpop.f32.mrb[0].mxu0
      %3220 = vmatprep.mubr.bf16.mxu0 %v1091
      %3221 = vmatmul.mubr.bf16.gmra.mrb[0].mxu0 %v1090
      %v3222 = vpop.f32.mrb[0].mxu0
      %v3223 = vadd.f32 %v3062, %v3222
      %v3224 = vpop.f32.mrb[0].mxu0
      %v3225 = vpop.f32.mrb[0].mxu0
      %v3226 = vadd.f32 %v3065, %v3225
      %v3227 = vpop.f32.mrb[0].mxu0
      %3228 = vmatprep.mubr.bf16.mxu0 %v1112
      %3229 = vmatmul.mubr.bf16.gmra.mrb[0].mxu0 %v1111
      %v3230 = vpop.f32.mrb[0].mxu0
      %v3231 = vadd.f32 %v3070, %v3230
      %v3232 = vpop.f32.mrb[0].mxu0
      %v3233 = vpop.f32.mrb[0].mxu0
      %v3234 = vadd.f32 %v3073, %v3233
      %v3235 = vpop.f32.mrb[0].mxu0
      %3236 = vmatprep.mubr.bf16.mxu0 %v1133
      %3237 = vmatmul.mubr.bf16.gmra.mrb[0].mxu0 %v1132
      %v3238 = vpop.f32.mrb[0].mxu0
      %v3239 = vadd.f32 %v3078, %v3238
      %v3240 = vpop.f32.mrb[0].mxu0
      %v3241 = vpop.f32.mrb[0].mxu0
      %v3242 = vadd.f32 %v3081, %v3241
      %v3243 = vpop.f32.mrb[0].mxu0
      %3244 = vmatprep.mubr.bf16.mxu0 %v1154
      %3245 = vmatmul.mubr.bf16.gmra.mrb[0].mxu0 %v1153
      %v3246 = vpop.f32.mrb[0].mxu0
      %v3247 = vadd.f32 %v3086, %v3246
      %v3248 = vpop.f32.mrb[0].mxu0
      %v3249 = vpop.f32.mrb[0].mxu0
      %v3250 = vadd.f32 %v3089, %v3249
      %v3251 = vpop.f32.mrb[0].mxu0
      %3252 = vmatprep.mubr.bf16.mxu0 %v1175
      %3253 = vmatmul.mubr.bf16.gmra.mrb[0].mxu0 %v1174
      %v3254 = vpop.f32.mrb[0].mxu0
      %v3255 = vadd.f32 %v3094, %v3254
      %v3256 = vpop.f32.mrb[0].mxu0
      %v3257 = vpop.f32.mrb[0].mxu0
      %v3258 = vadd.f32 %v3097, %v3257
      %v3259 = vpop.f32.mrb[0].mxu0
      %3260 = vmatprep.mubr.bf16.mxu0 %v1196
      %3261 = vmatmul.mubr.bf16.gmra.mrb[0].mxu0 %v1195
      %v3262 = vpop.f32.mrb[0].mxu0
      %v3263 = vadd.f32 %v3102, %v3262
      %v3264 = vpop.f32.mrb[0].mxu0
      %v3265 = vpop.f32.mrb[0].mxu0
      %v3266 = vadd.f32 %v3105, %v3265
      %v3267 = vpop.f32.mrb[0].mxu0
      %3268 = vmatprep.mubr.bf16.mxu0 %v1217
      %3269 = vmatmul.mubr.bf16.gmra.mrb[0].mxu0 %v1216
      %v3270 = vpop.f32.mrb[0].mxu0
      %v3271 = vadd.f32 %v3110, %v3270
      %v3272 = vpop.f32.mrb[0].mxu0
      %v3273 = vpop.f32.mrb[0].mxu0
      %v3274 = vadd.f32 %v3113, %v3273
      %v3275 = vpop.f32.mrb[0].mxu0
      %3276 = vmatprep.mubr.bf16.mxu0 %v1238
      %3277 = vmatmul.mubr.bf16.gmra.mrb[0].mxu0 %v1237
      %v3278 = vpop.f32.mrb[0].mxu0
      %v3279 = vadd.f32 %v3118, %v3278
      %v3280 = vpop.f32.mrb[0].mxu0
      %v3281 = vpop.f32.mrb[0].mxu0
      %v3282 = vadd.f32 %v3121, %v3281
      %v3283 = vpop.f32.mrb[0].mxu0
      %3284 = vmatprep.mubr.bf16.mxu0 %v1259
      %3285 = vmatmul.mubr.bf16.gmra.mrb[0].mxu0 %v1258
      %v3286 = vpop.f32.mrb[0].mxu0
      %v3287 = vadd.f32 %v3126, %v3286
      %v3288 = vpop.f32.mrb[0].mxu0
      %v3289 = vpop.f32.mrb[0].mxu0
      %v3290 = vadd.f32 %v3129, %v3289
      %v3291 = vpop.f32.mrb[0].mxu0
      %3292 = vmatprep.mubr.bf16.mxu0 %v1280
      %3293 = vmatmul.mubr.bf16.gmra.mrb[0].mxu0 %v1279
      %v3294 = vpop.f32.mrb[0].mxu0
      %v3295 = vadd.f32 %v3134, %v3294
      %v3296 = vpop.f32.mrb[0].mxu0
      %v3297 = vpop.f32.mrb[0].mxu0
      %v3298 = vadd.f32 %v3137, %v3297
      %v3299 = vpop.f32.mrb[0].mxu0
      %3300 = vdwg.mxu0
      %3301 = vmatprep.subr.bf16.mxu0 0
      %3302 = vmatpush1.bf16.msra.mxu0 %v2343
      %3303 = vmatprep.subr.bf16.mxu0 0
      %3304 = vmatpush1.bf16.msra.mxu0 %v2344
      %3305 = vmatprep.subr.bf16.mxu0 0
      %3306 = vmatpush1.bf16.msra.mxu0 %v2345
      %3307 = vmatprep.subr.bf16.mxu0 0
      %3308 = vmatpush1.bf16.msra.mxu0 %v2346
      %3309 = vmatprep.subr.bf16.mxu0 0
      %3310 = vmatpush1.bf16.msra.mxu0 %v2347
      %3311 = vmatprep.subr.bf16.mxu0 0
      %3312 = vmatpush1.bf16.msra.mxu0 %v2348
      %3313 = vmatprep.subr.bf16.mxu0 0
      %3314 = vmatpush1.bf16.msra.mxu0 %v2349
      %3315 = vmatprep.subr.bf16.mxu0 0
      %3316 = vmatpush1.bf16.msra.mxu0 %v2350
      %3317 = vmatprep.subr.bf16.mxu0 0
      %3318 = vmatpush1.bf16.msra.mxu0 %v2351
      %3319 = vmatprep.subr.bf16.mxu0 0
      %3320 = vmatpush1.bf16.msra.mxu0 %v2352
      %3321 = vmatprep.subr.bf16.mxu0 0
      %3322 = vmatpush1.bf16.msra.mxu0 %v2353
      %3323 = vmatprep.subr.bf16.mxu0 0
      %3324 = vmatpush1.bf16.msra.mxu0 %v2354
      %3325 = vmatprep.subr.bf16.mxu0 0
      %3326 = vmatpush1.bf16.msra.mxu0 %v2355
      %3327 = vmatprep.subr.bf16.mxu0 0
      %3328 = vmatpush1.bf16.msra.mxu0 %v2356
      %3329 = vmatprep.subr.bf16.mxu0 0
      %3330 = vmatpush1.bf16.msra.mxu0 %v2357
      %3331 = vmatprep.subr.bf16.mxu0 0
      %3332 = vmatpush1.bf16.msra.mxu0 %v2358
      %3333 = vmatprep.mubr.bf16.mxu0 %v967
      %3334 = vmatmul.mubr.bf16.gmra.mrb[0].mxu0 %v966
      %v3335 = vpop.f32.mrb[0].mxu0
      %v3336 = vadd.f32 %v3175, %v3335
      %v3337 = vpop.f32.mrb[0].mxu0
      %v3338 = vpop.f32.mrb[0].mxu0
      %v3339 = vadd.f32 %v3178, %v3338
      %v3340 = vpop.f32.mrb[0].mxu0
      %3341 = vmatprep.mubr.bf16.mxu0 %v988
      %3342 = vmatmul.mubr.bf16.gmra.mrb[0].mxu0 %v987
      %v3343 = vpop.f32.mrb[0].mxu0
      %v3344 = vadd.f32 %v3183, %v3343
      %v3345 = vpop.f32.mrb[0].mxu0
      %v3346 = vpop.f32.mrb[0].mxu0
      %v3347 = vadd.f32 %v3186, %v3346
      %v3348 = vpop.f32.mrb[0].mxu0
      %3349 = vmatprep.mubr.bf16.mxu0 %v1009
      %3350 = vmatmul.mubr.bf16.gmra.mrb[0].mxu0 %v1008
      %v3351 = vpop.f32.mrb[0].mxu0
      %v3352 = vadd.f32 %v3191, %v3351
      %v3353 = vpop.f32.mrb[0].mxu0
      %v3354 = vpop.f32.mrb[0].mxu0
      %v3355 = vadd.f32 %v3194, %v3354
      %v3356 = vpop.f32.mrb[0].mxu0
      %3357 = vmatprep.mubr.bf16.mxu0 %v1030
      %3358 = vmatmul.mubr.bf16.gmra.mrb[0].mxu0 %v1029
      %v3359 = vpop.f32.mrb[0].mxu0
      %v3360 = vadd.f32 %v3199, %v3359
      %v3361 = vpop.f32.mrb[0].mxu0
      %v3362 = vpop.f32.mrb[0].mxu0
      %v3363 = vadd.f32 %v3202, %v3362
      %v3364 = vpop.f32.mrb[0].mxu0
      %3365 = vmatprep.mubr.bf16.mxu0 %v1051
      %3366 = vmatmul.mubr.bf16.gmra.mrb[0].mxu0 %v1050
      %v3367 = vpop.f32.mrb[0].mxu0
      %v3368 = vadd.f32 %v3207, %v3367
      %v3369 = vpop.f32.mrb[0].mxu0
      %v3370 = vpop.f32.mrb[0].mxu0
      %v3371 = vadd.f32 %v3210, %v3370
      %v3372 = vpop.f32.mrb[0].mxu0
      %3373 = vmatprep.mubr.bf16.mxu0 %v1072
      %3374 = vmatmul.mubr.bf16.gmra.mrb[0].mxu0 %v1071
      %v3375 = vpop.f32.mrb[0].mxu0
      %v3376 = vadd.f32 %v3215, %v3375
      %v3377 = vpop.f32.mrb[0].mxu0
      %v3378 = vpop.f32.mrb[0].mxu0
      %v3379 = vadd.f32 %v3218, %v3378
      %v3380 = vpop.f32.mrb[0].mxu0
      %3381 = vmatprep.mubr.bf16.mxu0 %v1093
      %3382 = vmatmul.mubr.bf16.gmra.mrb[0].mxu0 %v1092
      %v3383 = vpop.f32.mrb[0].mxu0
      %v3384 = vadd.f32 %v3223, %v3383
      %v3385 = vpop.f32.mrb[0].mxu0
      %v3386 = vpop.f32.mrb[0].mxu0
      %v3387 = vadd.f32 %v3226, %v3386
      %v3388 = vpop.f32.mrb[0].mxu0
      %3389 = vmatprep.mubr.bf16.mxu0 %v1114
      %3390 = vmatmul.mubr.bf16.gmra.mrb[0].mxu0 %v1113
      %v3391 = vpop.f32.mrb[0].mxu0
      %v3392 = vadd.f32 %v3231, %v3391
      %v3393 = vpop.f32.mrb[0].mxu0
      %v3394 = vpop.f32.mrb[0].mxu0
      %v3395 = vadd.f32 %v3234, %v3394
      %v3396 = vpop.f32.mrb[0].mxu0
      %3397 = vmatprep.mubr.bf16.mxu0 %v1135
      %3398 = vmatmul.mubr.bf16.gmra.mrb[0].mxu0 %v1134
      %v3399 = vpop.f32.mrb[0].mxu0
      %v3400 = vadd.f32 %v3239, %v3399
      %v3401 = vpop.f32.mrb[0].mxu0
      %v3402 = vpop.f32.mrb[0].mxu0
      %v3403 = vadd.f32 %v3242, %v3402
      %v3404 = vpop.f32.mrb[0].mxu0
      %3405 = vmatprep.mubr.bf16.mxu0 %v1156
      %3406 = vmatmul.mubr.bf16.gmra.mrb[0].mxu0 %v1155
      %v3407 = vpop.f32.mrb[0].mxu0
      %v3408 = vadd.f32 %v3247, %v3407
      %v3409 = vpop.f32.mrb[0].mxu0
      %v3410 = vpop.f32.mrb[0].mxu0
      %v3411 = vadd.f32 %v3250, %v3410
      %v3412 = vpop.f32.mrb[0].mxu0
      %3413 = vmatprep.mubr.bf16.mxu0 %v1177
      %3414 = vmatmul.mubr.bf16.gmra.mrb[0].mxu0 %v1176
      %v3415 = vpop.f32.mrb[0].mxu0
      %v3416 = vadd.f32 %v3255, %v3415
      %v3417 = vpop.f32.mrb[0].mxu0
      %v3418 = vpop.f32.mrb[0].mxu0
      %v3419 = vadd.f32 %v3258, %v3418
      %v3420 = vpop.f32.mrb[0].mxu0
      %3421 = vmatprep.mubr.bf16.mxu0 %v1198
      %3422 = vmatmul.mubr.bf16.gmra.mrb[0].mxu0 %v1197
      %v3423 = vpop.f32.mrb[0].mxu0
      %v3424 = vadd.f32 %v3263, %v3423
      %v3425 = vpop.f32.mrb[0].mxu0
      %v3426 = vpop.f32.mrb[0].mxu0
      %v3427 = vadd.f32 %v3266, %v3426
      %v3428 = vpop.f32.mrb[0].mxu0
      %3429 = vmatprep.mubr.bf16.mxu0 %v1219
      %3430 = vmatmul.mubr.bf16.gmra.mrb[0].mxu0 %v1218
      %v3431 = vpop.f32.mrb[0].mxu0
      %v3432 = vadd.f32 %v3271, %v3431
      %v3433 = vpop.f32.mrb[0].mxu0
      %v3434 = vpop.f32.mrb[0].mxu0
      %v3435 = vadd.f32 %v3274, %v3434
      %v3436 = vpop.f32.mrb[0].mxu0
      %3437 = vmatprep.mubr.bf16.mxu0 %v1240
      %3438 = vmatmul.mubr.bf16.gmra.mrb[0].mxu0 %v1239
      %v3439 = vpop.f32.mrb[0].mxu0
      %v3440 = vadd.f32 %v3279, %v3439
      %v3441 = vpop.f32.mrb[0].mxu0
      %v3442 = vpop.f32.mrb[0].mxu0
      %v3443 = vadd.f32 %v3282, %v3442
      %v3444 = vpop.f32.mrb[0].mxu0
      %3445 = vmatprep.mubr.bf16.mxu0 %v1261
      %3446 = vmatmul.mubr.bf16.gmra.mrb[0].mxu0 %v1260
      %v3447 = vpop.f32.mrb[0].mxu0
      %v3448 = vadd.f32 %v3287, %v3447
      %v3449 = vpop.f32.mrb[0].mxu0
      %v3450 = vpop.f32.mrb[0].mxu0
      %v3451 = vadd.f32 %v3290, %v3450
      %v3452 = vpop.f32.mrb[0].mxu0
      %3453 = vmatprep.mubr.bf16.mxu0 %v1282
      %3454 = vmatmul.mubr.bf16.gmra.mrb[0].mxu0 %v1281
      %v3455 = vpop.f32.mrb[0].mxu0
      %v3456 = vadd.f32 %v3295, %v3455
      %v3457 = vpop.f32.mrb[0].mxu0
      %v3458 = vpop.f32.mrb[0].mxu0
      %v3459 = vadd.f32 %v3298, %v3458
      %v3460 = vpop.f32.mrb[0].mxu0
      %3461 = vdwg.mxu0
      %3462 = vmatprep.subr.bf16.mxu0 0
      %3463 = vmatpush1.bf16.msra.mxu0 %v2359
      %3464 = vmatprep.subr.bf16.mxu0 0
      %3465 = vmatpush1.bf16.msra.mxu0 %v2360
      %3466 = vmatprep.subr.bf16.mxu0 0
      %3467 = vmatpush1.bf16.msra.mxu0 %v2361
      %3468 = vmatprep.subr.bf16.mxu0 0
      %3469 = vmatpush1.bf16.msra.mxu0 %v2362
      %3470 = vmatprep.subr.bf16.mxu0 0
      %3471 = vmatpush1.bf16.msra.mxu0 %v2363
      %3472 = vmatprep.subr.bf16.mxu0 0
      %3473 = vmatpush1.bf16.msra.mxu0 %v2364
      %3474 = vmatprep.subr.bf16.mxu0 0
      %3475 = vmatpush1.bf16.msra.mxu0 %v2365
      %3476 = vmatprep.subr.bf16.mxu0 0
      %3477 = vmatpush1.bf16.msra.mxu0 %v2366
      %3478 = vmatprep.subr.bf16.mxu0 0
      %3479 = vmatpush1.bf16.msra.mxu0 %v2367
      %3480 = vmatprep.subr.bf16.mxu0 0
      %3481 = vmatpush1.bf16.msra.mxu0 %v2368
      %3482 = vmatprep.subr.bf16.mxu0 0
      %3483 = vmatpush1.bf16.msra.mxu0 %v2369
      %3484 = vmatprep.subr.bf16.mxu0 0
      %3485 = vmatpush1.bf16.msra.mxu0 %v2370
      %3486 = vmatprep.subr.bf16.mxu0 0
      %3487 = vmatpush1.bf16.msra.mxu0 %v2371
      %3488 = vmatprep.subr.bf16.mxu0 0
      %3489 = vmatpush1.bf16.msra.mxu0 %v2372
      %3490 = vmatprep.subr.bf16.mxu0 0
      %3491 = vmatpush1.bf16.msra.mxu0 %v2373
      %3492 = vmatprep.subr.bf16.mxu0 0
      %3493 = vmatpush1.bf16.msra.mxu0 %v2374
      %3494 = vmatprep.mubr.bf16.mxu0 %v969
      %3495 = vmatmul.mubr.bf16.gmra.mrb[0].mxu0 %v968
      %v3496 = vpop.f32.mrb[0].mxu0
      %v3497 = vadd.f32 %v3336, %v3496
      %v3498 = vpop.f32.mrb[0].mxu0
      %v3499 = vpop.f32.mrb[0].mxu0
      %v3500 = vadd.f32 %v3339, %v3499
      %v3501 = vpop.f32.mrb[0].mxu0
      %3502 = vmatprep.mubr.bf16.mxu0 %v990
      %3503 = vmatmul.mubr.bf16.gmra.mrb[0].mxu0 %v989
      %v3504 = vpop.f32.mrb[0].mxu0
      %v3505 = vadd.f32 %v3344, %v3504
      %v3506 = vpop.f32.mrb[0].mxu0
      %v3507 = vpop.f32.mrb[0].mxu0
      %v3508 = vadd.f32 %v3347, %v3507
      %v3509 = vpop.f32.mrb[0].mxu0
      %3510 = vmatprep.mubr.bf16.mxu0 %v1011
      %3511 = vmatmul.mubr.bf16.gmra.mrb[0].mxu0 %v1010
      %v3512 = vpop.f32.mrb[0].mxu0
      %v3513 = vadd.f32 %v3352, %v3512
      %v3514 = vpop.f32.mrb[0].mxu0
      %v3515 = vpop.f32.mrb[0].mxu0
      %v3516 = vadd.f32 %v3355, %v3515
      %v3517 = vpop.f32.mrb[0].mxu0
      %3518 = vmatprep.mubr.bf16.mxu0 %v1032
      %3519 = vmatmul.mubr.bf16.gmra.mrb[0].mxu0 %v1031
      %v3520 = vpop.f32.mrb[0].mxu0
      %v3521 = vadd.f32 %v3360, %v3520
      %v3522 = vpop.f32.mrb[0].mxu0
      %v3523 = vpop.f32.mrb[0].mxu0
      %v3524 = vadd.f32 %v3363, %v3523
      %v3525 = vpop.f32.mrb[0].mxu0
      %3526 = vmatprep.mubr.bf16.mxu0 %v1053
      %3527 = vmatmul.mubr.bf16.gmra.mrb[0].mxu0 %v1052
      %v3528 = vpop.f32.mrb[0].mxu0
      %v3529 = vadd.f32 %v3368, %v3528
      %v3530 = vpop.f32.mrb[0].mxu0
      %v3531 = vpop.f32.mrb[0].mxu0
      %v3532 = vadd.f32 %v3371, %v3531
      %v3533 = vpop.f32.mrb[0].mxu0
      %3534 = vmatprep.mubr.bf16.mxu0 %v1074
      %3535 = vmatmul.mubr.bf16.gmra.mrb[0].mxu0 %v1073
      %v3536 = vpop.f32.mrb[0].mxu0
      %v3537 = vadd.f32 %v3376, %v3536
      %v3538 = vpop.f32.mrb[0].mxu0
      %v3539 = vpop.f32.mrb[0].mxu0
      %v3540 = vadd.f32 %v3379, %v3539
      %v3541 = vpop.f32.mrb[0].mxu0
      %3542 = vmatprep.mubr.bf16.mxu0 %v1095
      %3543 = vmatmul.mubr.bf16.gmra.mrb[0].mxu0 %v1094
      %v3544 = vpop.f32.mrb[0].mxu0
      %v3545 = vadd.f32 %v3384, %v3544
      %v3546 = vpop.f32.mrb[0].mxu0
      %v3547 = vpop.f32.mrb[0].mxu0
      %v3548 = vadd.f32 %v3387, %v3547
      %v3549 = vpop.f32.mrb[0].mxu0
      %3550 = vmatprep.mubr.bf16.mxu0 %v1116
      %3551 = vmatmul.mubr.bf16.gmra.mrb[0].mxu0 %v1115
      %v3552 = vpop.f32.mrb[0].mxu0
      %v3553 = vadd.f32 %v3392, %v3552
      %v3554 = vpop.f32.mrb[0].mxu0
      %v3555 = vpop.f32.mrb[0].mxu0
      %v3556 = vadd.f32 %v3395, %v3555
      %v3557 = vpop.f32.mrb[0].mxu0
      %3558 = vmatprep.mubr.bf16.mxu0 %v1137
      %3559 = vmatmul.mubr.bf16.gmra.mrb[0].mxu0 %v1136
      %v3560 = vpop.f32.mrb[0].mxu0
      %v3561 = vadd.f32 %v3400, %v3560
      %v3562 = vpop.f32.mrb[0].mxu0
      %v3563 = vpop.f32.mrb[0].mxu0
      %v3564 = vadd.f32 %v3403, %v3563
      %v3565 = vpop.f32.mrb[0].mxu0
      %3566 = vmatprep.mubr.bf16.mxu0 %v1158
      %3567 = vmatmul.mubr.bf16.gmra.mrb[0].mxu0 %v1157
      %v3568 = vpop.f32.mrb[0].mxu0
      %v3569 = vadd.f32 %v3408, %v3568
      %v3570 = vpop.f32.mrb[0].mxu0
      %v3571 = vpop.f32.mrb[0].mxu0
      %v3572 = vadd.f32 %v3411, %v3571
      %v3573 = vpop.f32.mrb[0].mxu0
      %3574 = vmatprep.mubr.bf16.mxu0 %v1179
      %3575 = vmatmul.mubr.bf16.gmra.mrb[0].mxu0 %v1178
      %v3576 = vpop.f32.mrb[0].mxu0
      %v3577 = vadd.f32 %v3416, %v3576
      %v3578 = vpop.f32.mrb[0].mxu0
      %v3579 = vpop.f32.mrb[0].mxu0
      %v3580 = vadd.f32 %v3419, %v3579
      %v3581 = vpop.f32.mrb[0].mxu0
      %3582 = vmatprep.mubr.bf16.mxu0 %v1200
      %3583 = vmatmul.mubr.bf16.gmra.mrb[0].mxu0 %v1199
      %v3584 = vpop.f32.mrb[0].mxu0
      %v3585 = vadd.f32 %v3424, %v3584
      %v3586 = vpop.f32.mrb[0].mxu0
      %v3587 = vpop.f32.mrb[0].mxu0
      %v3588 = vadd.f32 %v3427, %v3587
      %v3589 = vpop.f32.mrb[0].mxu0
      %3590 = vmatprep.mubr.bf16.mxu0 %v1221
      %3591 = vmatmul.mubr.bf16.gmra.mrb[0].mxu0 %v1220
      %v3592 = vpop.f32.mrb[0].mxu0
      %v3593 = vadd.f32 %v3432, %v3592
      %v3594 = vpop.f32.mrb[0].mxu0
      %v3595 = vpop.f32.mrb[0].mxu0
      %v3596 = vadd.f32 %v3435, %v3595
      %v3597 = vpop.f32.mrb[0].mxu0
      %3598 = vmatprep.mubr.bf16.mxu0 %v1242
      %3599 = vmatmul.mubr.bf16.gmra.mrb[0].mxu0 %v1241
      %v3600 = vpop.f32.mrb[0].mxu0
      %v3601 = vadd.f32 %v3440, %v3600
      %v3602 = vpop.f32.mrb[0].mxu0
      %v3603 = vpop.f32.mrb[0].mxu0
      %v3604 = vadd.f32 %v3443, %v3603
      %v3605 = vpop.f32.mrb[0].mxu0
      %3606 = vmatprep.mubr.bf16.mxu0 %v1263
      %3607 = vmatmul.mubr.bf16.gmra.mrb[0].mxu0 %v1262
      %v3608 = vpop.f32.mrb[0].mxu0
      %v3609 = vadd.f32 %v3448, %v3608
      %v3610 = vpop.f32.mrb[0].mxu0
      %v3611 = vpop.f32.mrb[0].mxu0
      %v3612 = vadd.f32 %v3451, %v3611
      %v3613 = vpop.f32.mrb[0].mxu0
      %3614 = vmatprep.mubr.bf16.mxu0 %v1284
      %3615 = vmatmul.mubr.bf16.gmra.mrb[0].mxu0 %v1283
      %v3616 = vpop.f32.mrb[0].mxu0
      %v3617 = vadd.f32 %v3456, %v3616
      %v3618 = vpop.f32.mrb[0].mxu0
      %v3619 = vpop.f32.mrb[0].mxu0
      %v3620 = vadd.f32 %v3459, %v3619
      %v3621 = vpop.f32.mrb[0].mxu0
      %3622 = vdwg.mxu0
      %3623 = vmatprep.subr.bf16.mxu0 0
      %3624 = vmatpush1.bf16.msra.mxu0 %v2375
      %3625 = vmatprep.subr.bf16.mxu0 0
      %3626 = vmatpush1.bf16.msra.mxu0 %v2376
      %3627 = vmatprep.subr.bf16.mxu0 0
      %3628 = vmatpush1.bf16.msra.mxu0 %v2377
      %3629 = vmatprep.subr.bf16.mxu0 0
      %3630 = vmatpush1.bf16.msra.mxu0 %v2378
      %3631 = vmatprep.subr.bf16.mxu0 0
      %3632 = vmatpush1.bf16.msra.mxu0 %v2379
      %3633 = vmatprep.subr.bf16.mxu0 0
      %3634 = vmatpush1.bf16.msra.mxu0 %v2380
      %3635 = vmatprep.subr.bf16.mxu0 0
      %3636 = vmatpush1.bf16.msra.mxu0 %v2381
      %3637 = vmatprep.subr.bf16.mxu0 0
      %3638 = vmatpush1.bf16.msra.mxu0 %v2382
      %3639 = vmatprep.subr.bf16.mxu0 0
      %3640 = vmatpush1.bf16.msra.mxu0 %v2383
      %3641 = vmatprep.subr.bf16.mxu0 0
      %3642 = vmatpush1.bf16.msra.mxu0 %v2384
      %3643 = vmatprep.subr.bf16.mxu0 0
      %3644 = vmatpush1.bf16.msra.mxu0 %v2385
      %3645 = vmatprep.subr.bf16.mxu0 0
      %3646 = vmatpush1.bf16.msra.mxu0 %v2386
      %3647 = vmatprep.subr.bf16.mxu0 0
      %3648 = vmatpush1.bf16.msra.mxu0 %v2387
      %3649 = vmatprep.subr.bf16.mxu0 0
      %3650 = vmatpush1.bf16.msra.mxu0 %v2388
      %3651 = vmatprep.subr.bf16.mxu0 0
      %3652 = vmatpush1.bf16.msra.mxu0 %v2389
      %3653 = vmatprep.subr.bf16.mxu0 0
      %3654 = vmatpush1.bf16.msra.mxu0 %v2390
      %3655 = vmatprep.mubr.bf16.mxu0 %v971
      %3656 = vmatmul.mubr.bf16.gmra.mrb[0].mxu0 %v970
      %v3657 = vpop.f32.mrb[0].mxu0
      %v3658 = vadd.f32 %v3497, %v3657
      %v3659 = vpop.f32.mrb[0].mxu0
      %v3660 = vpop.f32.mrb[0].mxu0
      %v3661 = vadd.f32 %v3500, %v3660
      %v3662 = vpop.f32.mrb[0].mxu0
      %3663 = vmatprep.mubr.bf16.mxu0 %v992
      %3664 = vmatmul.mubr.bf16.gmra.mrb[0].mxu0 %v991
      %v3665 = vpop.f32.mrb[0].mxu0
      %v3666 = vadd.f32 %v3505, %v3665
      %v3667 = vpop.f32.mrb[0].mxu0
      %v3668 = vpop.f32.mrb[0].mxu0
      %v3669 = vadd.f32 %v3508, %v3668
      %v3670 = vpop.f32.mrb[0].mxu0
      %3671 = vmatprep.mubr.bf16.mxu0 %v1013
      %3672 = vmatmul.mubr.bf16.gmra.mrb[0].mxu0 %v1012
      %v3673 = vpop.f32.mrb[0].mxu0
      %v3674 = vadd.f32 %v3513, %v3673
      %v3675 = vpop.f32.mrb[0].mxu0
      %v3676 = vpop.f32.mrb[0].mxu0
      %v3677 = vadd.f32 %v3516, %v3676
      %v3678 = vpop.f32.mrb[0].mxu0
      %3679 = vmatprep.mubr.bf16.mxu0 %v1034
      %3680 = vmatmul.mubr.bf16.gmra.mrb[0].mxu0 %v1033
      %v3681 = vpop.f32.mrb[0].mxu0
      %v3682 = vadd.f32 %v3521, %v3681
      %v3683 = vpop.f32.mrb[0].mxu0
      %v3684 = vpop.f32.mrb[0].mxu0
      %v3685 = vadd.f32 %v3524, %v3684
      %v3686 = vpop.f32.mrb[0].mxu0
      %3687 = vmatprep.mubr.bf16.mxu0 %v1055
      %3688 = vmatmul.mubr.bf16.gmra.mrb[0].mxu0 %v1054
      %v3689 = vpop.f32.mrb[0].mxu0
      %v3690 = vadd.f32 %v3529, %v3689
      %v3691 = vpop.f32.mrb[0].mxu0
      %v3692 = vpop.f32.mrb[0].mxu0
      %v3693 = vadd.f32 %v3532, %v3692
      %v3694 = vpop.f32.mrb[0].mxu0
      %3695 = vmatprep.mubr.bf16.mxu0 %v1076
      %3696 = vmatmul.mubr.bf16.gmra.mrb[0].mxu0 %v1075
      %v3697 = vpop.f32.mrb[0].mxu0
      %v3698 = vadd.f32 %v3537, %v3697
      %v3699 = vpop.f32.mrb[0].mxu0
      %v3700 = vpop.f32.mrb[0].mxu0
      %v3701 = vadd.f32 %v3540, %v3700
      %v3702 = vpop.f32.mrb[0].mxu0
      %3703 = vmatprep.mubr.bf16.mxu0 %v1097
      %3704 = vmatmul.mubr.bf16.gmra.mrb[0].mxu0 %v1096
      %v3705 = vpop.f32.mrb[0].mxu0
      %v3706 = vadd.f32 %v3545, %v3705
      %v3707 = vpop.f32.mrb[0].mxu0
      %v3708 = vpop.f32.mrb[0].mxu0
      %v3709 = vadd.f32 %v3548, %v3708
      %v3710 = vpop.f32.mrb[0].mxu0
      %3711 = vmatprep.mubr.bf16.mxu0 %v1118
      %3712 = vmatmul.mubr.bf16.gmra.mrb[0].mxu0 %v1117
      %v3713 = vpop.f32.mrb[0].mxu0
      %v3714 = vadd.f32 %v3553, %v3713
      %v3715 = vpop.f32.mrb[0].mxu0
      %v3716 = vpop.f32.mrb[0].mxu0
      %v3717 = vadd.f32 %v3556, %v3716
      %v3718 = vpop.f32.mrb[0].mxu0
      %3719 = vmatprep.mubr.bf16.mxu0 %v1139
      %3720 = vmatmul.mubr.bf16.gmra.mrb[0].mxu0 %v1138
      %v3721 = vpop.f32.mrb[0].mxu0
      %v3722 = vadd.f32 %v3561, %v3721
      %v3723 = vpop.f32.mrb[0].mxu0
      %v3724 = vpop.f32.mrb[0].mxu0
      %v3725 = vadd.f32 %v3564, %v3724
      %v3726 = vpop.f32.mrb[0].mxu0
      %3727 = vmatprep.mubr.bf16.mxu0 %v1160
      %3728 = vmatmul.mubr.bf16.gmra.mrb[0].mxu0 %v1159
      %v3729 = vpop.f32.mrb[0].mxu0
      %v3730 = vadd.f32 %v3569, %v3729
      %v3731 = vpop.f32.mrb[0].mxu0
      %v3732 = vpop.f32.mrb[0].mxu0
      %v3733 = vadd.f32 %v3572, %v3732
      %v3734 = vpop.f32.mrb[0].mxu0
      %3735 = vmatprep.mubr.bf16.mxu0 %v1181
      %3736 = vmatmul.mubr.bf16.gmra.mrb[0].mxu0 %v1180
      %v3737 = vpop.f32.mrb[0].mxu0
      %v3738 = vadd.f32 %v3577, %v3737
      %v3739 = vpop.f32.mrb[0].mxu0
      %v3740 = vpop.f32.mrb[0].mxu0
      %v3741 = vadd.f32 %v3580, %v3740
      %v3742 = vpop.f32.mrb[0].mxu0
      %3743 = vmatprep.mubr.bf16.mxu0 %v1202
      %3744 = vmatmul.mubr.bf16.gmra.mrb[0].mxu0 %v1201
      %v3745 = vpop.f32.mrb[0].mxu0
      %v3746 = vadd.f32 %v3585, %v3745
      %v3747 = vpop.f32.mrb[0].mxu0
      %v3748 = vpop.f32.mrb[0].mxu0
      %v3749 = vadd.f32 %v3588, %v3748
      %v3750 = vpop.f32.mrb[0].mxu0
      %3751 = vmatprep.mubr.bf16.mxu0 %v1223
      %3752 = vmatmul.mubr.bf16.gmra.mrb[0].mxu0 %v1222
      %v3753 = vpop.f32.mrb[0].mxu0
      %v3754 = vadd.f32 %v3593, %v3753
      %v3755 = vpop.f32.mrb[0].mxu0
      %v3756 = vpop.f32.mrb[0].mxu0
      %v3757 = vadd.f32 %v3596, %v3756
      %v3758 = vpop.f32.mrb[0].mxu0
      %3759 = vmatprep.mubr.bf16.mxu0 %v1244
      %3760 = vmatmul.mubr.bf16.gmra.mrb[0].mxu0 %v1243
      %v3761 = vpop.f32.mrb[0].mxu0
      %v3762 = vadd.f32 %v3601, %v3761
      %v3763 = vpop.f32.mrb[0].mxu0
      %v3764 = vpop.f32.mrb[0].mxu0
      %v3765 = vadd.f32 %v3604, %v3764
      %v3766 = vpop.f32.mrb[0].mxu0
      %3767 = vmatprep.mubr.bf16.mxu0 %v1265
      %3768 = vmatmul.mubr.bf16.gmra.mrb[0].mxu0 %v1264
      %v3769 = vpop.f32.mrb[0].mxu0
      %v3770 = vadd.f32 %v3609, %v3769
      %v3771 = vpop.f32.mrb[0].mxu0
      %v3772 = vpop.f32.mrb[0].mxu0
      %v3773 = vadd.f32 %v3612, %v3772
      %v3774 = vpop.f32.mrb[0].mxu0
      %3775 = vmatprep.mubr.bf16.mxu0 %v1286
      %3776 = vmatmul.mubr.bf16.gmra.mrb[0].mxu0 %v1285
      %v3777 = vpop.f32.mrb[0].mxu0
      %v3778 = vadd.f32 %v3617, %v3777
      %v3779 = vpop.f32.mrb[0].mxu0
      %v3780 = vpop.f32.mrb[0].mxu0
      %v3781 = vadd.f32 %v3620, %v3780
      %v3782 = vpop.f32.mrb[0].mxu0
      %3783 = vdwg.mxu0
      %3784 = vmatprep.subr.bf16.mxu0 0
      %3785 = vmatpush1.bf16.msra.mxu0 %v2391
      %3786 = vmatprep.subr.bf16.mxu0 0
      %3787 = vmatpush1.bf16.msra.mxu0 %v2392
      %3788 = vmatprep.subr.bf16.mxu0 0
      %3789 = vmatpush1.bf16.msra.mxu0 %v2393
      %3790 = vmatprep.subr.bf16.mxu0 0
      %3791 = vmatpush1.bf16.msra.mxu0 %v2394
      %3792 = vmatprep.subr.bf16.mxu0 0
      %3793 = vmatpush1.bf16.msra.mxu0 %v2395
      %3794 = vmatprep.subr.bf16.mxu0 0
      %3795 = vmatpush1.bf16.msra.mxu0 %v2396
      %3796 = vmatprep.subr.bf16.mxu0 0
      %3797 = vmatpush1.bf16.msra.mxu0 %v2397
      %3798 = vmatprep.subr.bf16.mxu0 0
      %3799 = vmatpush1.bf16.msra.mxu0 %v2398
      %3800 = vmatprep.subr.bf16.mxu0 0
      %3801 = vmatpush1.bf16.msra.mxu0 %v2399
      %3802 = vmatprep.subr.bf16.mxu0 0
      %3803 = vmatpush1.bf16.msra.mxu0 %v2400
      %3804 = vmatprep.subr.bf16.mxu0 0
      %3805 = vmatpush1.bf16.msra.mxu0 %v2401
      %3806 = vmatprep.subr.bf16.mxu0 0
      %3807 = vmatpush1.bf16.msra.mxu0 %v2402
      %3808 = vmatprep.subr.bf16.mxu0 0
      %3809 = vmatpush1.bf16.msra.mxu0 %v2403
      %3810 = vmatprep.subr.bf16.mxu0 0
      %3811 = vmatpush1.bf16.msra.mxu0 %v2404
      %3812 = vmatprep.subr.bf16.mxu0 0
      %3813 = vmatpush1.bf16.msra.mxu0 %v2405
      %3814 = vmatprep.subr.bf16.mxu0 0
      %3815 = vmatpush1.bf16.msra.mxu0 %v2406
      %3816 = vmatprep.mubr.bf16.mxu0 %v973
      %3817 = vmatmul.mubr.bf16.gmra.mrb[0].mxu0 %v972
      %v3818 = vpop.f32.mrb[0].mxu0
      %v3819 = vadd.f32 %v3658, %v3818
      %v3820 = vpop.f32.mrb[0].mxu0
      %v3821 = vpop.f32.mrb[0].mxu0
      %v3822 = vadd.f32 %v3661, %v3821
      %v3823 = vpop.f32.mrb[0].mxu0
      %3824 = vmatprep.mubr.bf16.mxu0 %v994
      %3825 = vmatmul.mubr.bf16.gmra.mrb[0].mxu0 %v993
      %v3826 = vpop.f32.mrb[0].mxu0
      %v3827 = vadd.f32 %v3666, %v3826
      %v3828 = vpop.f32.mrb[0].mxu0
      %v3829 = vpop.f32.mrb[0].mxu0
      %v3830 = vadd.f32 %v3669, %v3829
      %v3831 = vpop.f32.mrb[0].mxu0
      %3832 = vmatprep.mubr.bf16.mxu0 %v1015
      %3833 = vmatmul.mubr.bf16.gmra.mrb[0].mxu0 %v1014
      %v3834 = vpop.f32.mrb[0].mxu0
      %v3835 = vadd.f32 %v3674, %v3834
      %v3836 = vpop.f32.mrb[0].mxu0
      %v3837 = vpop.f32.mrb[0].mxu0
      %v3838 = vadd.f32 %v3677, %v3837
      %v3839 = vpop.f32.mrb[0].mxu0
      %3840 = vmatprep.mubr.bf16.mxu0 %v1036
      %3841 = vmatmul.mubr.bf16.gmra.mrb[0].mxu0 %v1035
      %v3842 = vpop.f32.mrb[0].mxu0
      %v3843 = vadd.f32 %v3682, %v3842
      %v3844 = vpop.f32.mrb[0].mxu0
      %v3845 = vpop.f32.mrb[0].mxu0
      %v3846 = vadd.f32 %v3685, %v3845
      %v3847 = vpop.f32.mrb[0].mxu0
      %3848 = vmatprep.mubr.bf16.mxu0 %v1057
      %3849 = vmatmul.mubr.bf16.gmra.mrb[0].mxu0 %v1056
      %v3850 = vpop.f32.mrb[0].mxu0
      %v3851 = vadd.f32 %v3690, %v3850
      %v3852 = vpop.f32.mrb[0].mxu0
      %v3853 = vpop.f32.mrb[0].mxu0
      %v3854 = vadd.f32 %v3693, %v3853
      %v3855 = vpop.f32.mrb[0].mxu0
      %3856 = vmatprep.mubr.bf16.mxu0 %v1078
      %3857 = vmatmul.mubr.bf16.gmra.mrb[0].mxu0 %v1077
      %v3858 = vpop.f32.mrb[0].mxu0
      %v3859 = vadd.f32 %v3698, %v3858
      %v3860 = vpop.f32.mrb[0].mxu0
      %v3861 = vpop.f32.mrb[0].mxu0
      %v3862 = vadd.f32 %v3701, %v3861
      %v3863 = vpop.f32.mrb[0].mxu0
      %3864 = vmatprep.mubr.bf16.mxu0 %v1099
      %3865 = vmatmul.mubr.bf16.gmra.mrb[0].mxu0 %v1098
      %v3866 = vpop.f32.mrb[0].mxu0
      %v3867 = vadd.f32 %v3706, %v3866
      %v3868 = vpop.f32.mrb[0].mxu0
      %v3869 = vpop.f32.mrb[0].mxu0
      %v3870 = vadd.f32 %v3709, %v3869
      %v3871 = vpop.f32.mrb[0].mxu0
      %3872 = vmatprep.mubr.bf16.mxu0 %v1120
      %3873 = vmatmul.mubr.bf16.gmra.mrb[0].mxu0 %v1119
      %v3874 = vpop.f32.mrb[0].mxu0
      %v3875 = vadd.f32 %v3714, %v3874
      %v3876 = vpop.f32.mrb[0].mxu0
      %v3877 = vpop.f32.mrb[0].mxu0
      %v3878 = vadd.f32 %v3717, %v3877
      %v3879 = vpop.f32.mrb[0].mxu0
      %3880 = vmatprep.mubr.bf16.mxu0 %v1141
      %3881 = vmatmul.mubr.bf16.gmra.mrb[0].mxu0 %v1140
      %v3882 = vpop.f32.mrb[0].mxu0
      %v3883 = vadd.f32 %v3722, %v3882
      %v3884 = vpop.f32.mrb[0].mxu0
      %v3885 = vpop.f32.mrb[0].mxu0
      %v3886 = vadd.f32 %v3725, %v3885
      %v3887 = vpop.f32.mrb[0].mxu0
      %3888 = vmatprep.mubr.bf16.mxu0 %v1162
      %3889 = vmatmul.mubr.bf16.gmra.mrb[0].mxu0 %v1161
      %v3890 = vpop.f32.mrb[0].mxu0
      %v3891 = vadd.f32 %v3730, %v3890
      %v3892 = vpop.f32.mrb[0].mxu0
      %v3893 = vpop.f32.mrb[0].mxu0
      %v3894 = vadd.f32 %v3733, %v3893
      %v3895 = vpop.f32.mrb[0].mxu0
      %3896 = vmatprep.mubr.bf16.mxu0 %v1183
      %3897 = vmatmul.mubr.bf16.gmra.mrb[0].mxu0 %v1182
      %v3898 = vpop.f32.mrb[0].mxu0
      %v3899 = vadd.f32 %v3738, %v3898
      %v3900 = vpop.f32.mrb[0].mxu0
      %v3901 = vpop.f32.mrb[0].mxu0
      %v3902 = vadd.f32 %v3741, %v3901
      %v3903 = vpop.f32.mrb[0].mxu0
      %3904 = vmatprep.mubr.bf16.mxu0 %v1204
      %3905 = vmatmul.mubr.bf16.gmra.mrb[0].mxu0 %v1203
      %v3906 = vpop.f32.mrb[0].mxu0
      %v3907 = vadd.f32 %v3746, %v3906
      %v3908 = vpop.f32.mrb[0].mxu0
      %v3909 = vpop.f32.mrb[0].mxu0
      %v3910 = vadd.f32 %v3749, %v3909
      %v3911 = vpop.f32.mrb[0].mxu0
      %3912 = vmatprep.mubr.bf16.mxu0 %v1225
      %3913 = vmatmul.mubr.bf16.gmra.mrb[0].mxu0 %v1224
      %v3914 = vpop.f32.mrb[0].mxu0
      %v3915 = vadd.f32 %v3754, %v3914
      %v3916 = vpop.f32.mrb[0].mxu0
      %v3917 = vpop.f32.mrb[0].mxu0
      %v3918 = vadd.f32 %v3757, %v3917
      %v3919 = vpop.f32.mrb[0].mxu0
      %3920 = vmatprep.mubr.bf16.mxu0 %v1246
      %3921 = vmatmul.mubr.bf16.gmra.mrb[0].mxu0 %v1245
      %v3922 = vpop.f32.mrb[0].mxu0
      %v3923 = vadd.f32 %v3762, %v3922
      %v3924 = vpop.f32.mrb[0].mxu0
      %v3925 = vpop.f32.mrb[0].mxu0
      %v3926 = vadd.f32 %v3765, %v3925
      %v3927 = vpop.f32.mrb[0].mxu0
      %3928 = vmatprep.mubr.bf16.mxu0 %v1267
      %3929 = vmatmul.mubr.bf16.gmra.mrb[0].mxu0 %v1266
      %v3930 = vpop.f32.mrb[0].mxu0
      %v3931 = vadd.f32 %v3770, %v3930
      %v3932 = vpop.f32.mrb[0].mxu0
      %v3933 = vpop.f32.mrb[0].mxu0
      %v3934 = vadd.f32 %v3773, %v3933
      %v3935 = vpop.f32.mrb[0].mxu0
      %3936 = vmatprep.mubr.bf16.mxu0 %v1288
      %3937 = vmatmul.mubr.bf16.gmra.mrb[0].mxu0 %v1287
      %v3938 = vpop.f32.mrb[0].mxu0
      %v3939 = vadd.f32 %v3778, %v3938
      %v3940 = vpop.f32.mrb[0].mxu0
      %v3941 = vpop.f32.mrb[0].mxu0
      %v3942 = vadd.f32 %v3781, %v3941
      %v3943 = vpop.f32.mrb[0].mxu0
      %3944 = vdwg.mxu0
      %3945 = vmatprep.subr.bf16.mxu0 0
      %3946 = vmatpush1.bf16.msra.mxu0 %v2407
      %3947 = vmatprep.subr.bf16.mxu0 0
      %3948 = vmatpush1.bf16.msra.mxu0 %v2408
      %3949 = vmatprep.subr.bf16.mxu0 0
      %3950 = vmatpush1.bf16.msra.mxu0 %v2409
      %3951 = vmatprep.subr.bf16.mxu0 0
      %3952 = vmatpush1.bf16.msra.mxu0 %v2410
      %3953 = vmatprep.subr.bf16.mxu0 0
      %3954 = vmatpush1.bf16.msra.mxu0 %v2411
      %3955 = vmatprep.subr.bf16.mxu0 0
      %3956 = vmatpush1.bf16.msra.mxu0 %v2412
      %3957 = vmatprep.subr.bf16.mxu0 0
      %3958 = vmatpush1.bf16.msra.mxu0 %v2413
      %3959 = vmatprep.subr.bf16.mxu0 0
      %3960 = vmatpush1.bf16.msra.mxu0 %v2414
      %3961 = vmatprep.subr.bf16.mxu0 0
      %3962 = vmatpush1.bf16.msra.mxu0 %v2415
      %3963 = vmatprep.subr.bf16.mxu0 0
      %3964 = vmatpush1.bf16.msra.mxu0 %v2416
      %3965 = vmatprep.subr.bf16.mxu0 0
      %3966 = vmatpush1.bf16.msra.mxu0 %v2417
      %3967 = vmatprep.subr.bf16.mxu0 0
      %3968 = vmatpush1.bf16.msra.mxu0 %v2418
      %3969 = vmatprep.subr.bf16.mxu0 0
      %3970 = vmatpush1.bf16.msra.mxu0 %v2419
      %3971 = vmatprep.subr.bf16.mxu0 0
      %3972 = vmatpush1.bf16.msra.mxu0 %v2420
      %3973 = vmatprep.subr.bf16.mxu0 0
      %3974 = vmatpush1.bf16.msra.mxu0 %v2421
      %3975 = vmatprep.subr.bf16.mxu0 0
      %3976 = vmatpush1.bf16.msra.mxu0 %v2422
      %3977 = vmatprep.mubr.bf16.mxu0 %v975
      %3978 = vmatmul.mubr.bf16.gmra.mrb[0].mxu0 %v974
      %v3979 = vpop.f32.mrb[0].mxu0
      %v3980 = vadd.f32 %v3819, %v3979
      %v3981 = vpop.f32.mrb[0].mxu0
      %v3982 = vpop.f32.mrb[0].mxu0
      %v3983 = vadd.f32 %v3822, %v3982
      %v3984 = vpop.f32.mrb[0].mxu0
      %3985 = vmatprep.mubr.bf16.mxu0 %v996
      %3986 = vmatmul.mubr.bf16.gmra.mrb[0].mxu0 %v995
      %v3987 = vpop.f32.mrb[0].mxu0
      %v3988 = vadd.f32 %v3827, %v3987
      %v3989 = vpop.f32.mrb[0].mxu0
      %v3990 = vpop.f32.mrb[0].mxu0
      %v3991 = vadd.f32 %v3830, %v3990
      %v3992 = vpop.f32.mrb[0].mxu0
      %3993 = vmatprep.mubr.bf16.mxu0 %v1017
      %3994 = vmatmul.mubr.bf16.gmra.mrb[0].mxu0 %v1016
      %v3995 = vpop.f32.mrb[0].mxu0
      %v3996 = vadd.f32 %v3835, %v3995
      %v3997 = vpop.f32.mrb[0].mxu0
      %v3998 = vpop.f32.mrb[0].mxu0
      %v3999 = vadd.f32 %v3838, %v3998
      %v4000 = vpop.f32.mrb[0].mxu0
      %4001 = vmatprep.mubr.bf16.mxu0 %v1038
      %4002 = vmatmul.mubr.bf16.gmra.mrb[0].mxu0 %v1037
      %v4003 = vpop.f32.mrb[0].mxu0
      %v4004 = vadd.f32 %v3843, %v4003
      %v4005 = vpop.f32.mrb[0].mxu0
      %v4006 = vpop.f32.mrb[0].mxu0
      %v4007 = vadd.f32 %v3846, %v4006
      %v4008 = vpop.f32.mrb[0].mxu0
      %4009 = vmatprep.mubr.bf16.mxu0 %v1059
      %4010 = vmatmul.mubr.bf16.gmra.mrb[0].mxu0 %v1058
      %v4011 = vpop.f32.mrb[0].mxu0
      %v4012 = vadd.f32 %v3851, %v4011
      %v4013 = vpop.f32.mrb[0].mxu0
      %v4014 = vpop.f32.mrb[0].mxu0
      %v4015 = vadd.f32 %v3854, %v4014
      %v4016 = vpop.f32.mrb[0].mxu0
      %4017 = vmatprep.mubr.bf16.mxu0 %v1080
      %4018 = vmatmul.mubr.bf16.gmra.mrb[0].mxu0 %v1079
      %v4019 = vpop.f32.mrb[0].mxu0
      %v4020 = vadd.f32 %v3859, %v4019
      %v4021 = vpop.f32.mrb[0].mxu0
      %v4022 = vpop.f32.mrb[0].mxu0
      %v4023 = vadd.f32 %v3862, %v4022
      %v4024 = vpop.f32.mrb[0].mxu0
      %4025 = vmatprep.mubr.bf16.mxu0 %v1101
      %4026 = vmatmul.mubr.bf16.gmra.mrb[0].mxu0 %v1100
      %v4027 = vpop.f32.mrb[0].mxu0
      %v4028 = vadd.f32 %v3867, %v4027
      %v4029 = vpop.f32.mrb[0].mxu0
      %v4030 = vpop.f32.mrb[0].mxu0
      %v4031 = vadd.f32 %v3870, %v4030
      %v4032 = vpop.f32.mrb[0].mxu0
      %4033 = vmatprep.mubr.bf16.mxu0 %v1122
      %4034 = vmatmul.mubr.bf16.gmra.mrb[0].mxu0 %v1121
      %v4035 = vpop.f32.mrb[0].mxu0
      %v4036 = vadd.f32 %v3875, %v4035
      %v4037 = vpop.f32.mrb[0].mxu0
      %v4038 = vpop.f32.mrb[0].mxu0
      %v4039 = vadd.f32 %v3878, %v4038
      %v4040 = vpop.f32.mrb[0].mxu0
      %4041 = vmatprep.mubr.bf16.mxu0 %v1143
      %4042 = vmatmul.mubr.bf16.gmra.mrb[0].mxu0 %v1142
      %v4043 = vpop.f32.mrb[0].mxu0
      %v4044 = vadd.f32 %v3883, %v4043
      %v4045 = vpop.f32.mrb[0].mxu0
      %v4046 = vpop.f32.mrb[0].mxu0
      %v4047 = vadd.f32 %v3886, %v4046
      %v4048 = vpop.f32.mrb[0].mxu0
      %4049 = vmatprep.mubr.bf16.mxu0 %v1164
      %4050 = vmatmul.mubr.bf16.gmra.mrb[0].mxu0 %v1163
      %v4051 = vpop.f32.mrb[0].mxu0
      %v4052 = vadd.f32 %v3891, %v4051
      %v4053 = vpop.f32.mrb[0].mxu0
      %v4054 = vpop.f32.mrb[0].mxu0
      %v4055 = vadd.f32 %v3894, %v4054
      %v4056 = vpop.f32.mrb[0].mxu0
      %4057 = vmatprep.mubr.bf16.mxu0 %v1185
      %4058 = vmatmul.mubr.bf16.gmra.mrb[0].mxu0 %v1184
      %v4059 = vpop.f32.mrb[0].mxu0
      %v4060 = vadd.f32 %v3899, %v4059
      %v4061 = vpop.f32.mrb[0].mxu0
      %v4062 = vpop.f32.mrb[0].mxu0
      %v4063 = vadd.f32 %v3902, %v4062
      %v4064 = vpop.f32.mrb[0].mxu0
      %4065 = vmatprep.mubr.bf16.mxu0 %v1206
      %4066 = vmatmul.mubr.bf16.gmra.mrb[0].mxu0 %v1205
      %v4067 = vpop.f32.mrb[0].mxu0
      %v4068 = vadd.f32 %v3907, %v4067
      %v4069 = vpop.f32.mrb[0].mxu0
      %v4070 = vpop.f32.mrb[0].mxu0
      %v4071 = vadd.f32 %v3910, %v4070
      %v4072 = vpop.f32.mrb[0].mxu0
      %4073 = vmatprep.mubr.bf16.mxu0 %v1227
      %4074 = vmatmul.mubr.bf16.gmra.mrb[0].mxu0 %v1226
      %v4075 = vpop.f32.mrb[0].mxu0
      %v4076 = vadd.f32 %v3915, %v4075
      %v4077 = vpop.f32.mrb[0].mxu0
      %v4078 = vpop.f32.mrb[0].mxu0
      %v4079 = vadd.f32 %v3918, %v4078
      %v4080 = vpop.f32.mrb[0].mxu0
      %4081 = vmatprep.mubr.bf16.mxu0 %v1248
      %4082 = vmatmul.mubr.bf16.gmra.mrb[0].mxu0 %v1247
      %v4083 = vpop.f32.mrb[0].mxu0
      %v4084 = vadd.f32 %v3923, %v4083
      %v4085 = vpop.f32.mrb[0].mxu0
      %v4086 = vpop.f32.mrb[0].mxu0
      %v4087 = vadd.f32 %v3926, %v4086
      %v4088 = vpop.f32.mrb[0].mxu0
      %4089 = vmatprep.mubr.bf16.mxu0 %v1269
      %4090 = vmatmul.mubr.bf16.gmra.mrb[0].mxu0 %v1268
      %v4091 = vpop.f32.mrb[0].mxu0
      %v4092 = vadd.f32 %v3931, %v4091
      %v4093 = vpop.f32.mrb[0].mxu0
      %v4094 = vpop.f32.mrb[0].mxu0
      %v4095 = vadd.f32 %v3934, %v4094
      %v4096 = vpop.f32.mrb[0].mxu0
      %4097 = vmatprep.mubr.bf16.mxu0 %v1290
      %4098 = vmatmul.mubr.bf16.gmra.mrb[0].mxu0 %v1289
      %v4099 = vpop.f32.mrb[0].mxu0
      %v4100 = vadd.f32 %v3939, %v4099
      %v4101 = vpop.f32.mrb[0].mxu0
      %v4102 = vpop.f32.mrb[0].mxu0
      %v4103 = vadd.f32 %v3942, %v4102
      %v4104 = vpop.f32.mrb[0].mxu0
      %4105 = vdwg.mxu0
      %4106 = vmatprep.subr.bf16.mxu0 0
      %4107 = vmatpush1.bf16.msra.mxu0 %v2423
      %4108 = vmatprep.subr.bf16.mxu0 0
      %4109 = vmatpush1.bf16.msra.mxu0 %v2424
      %4110 = vmatprep.subr.bf16.mxu0 0
      %4111 = vmatpush1.bf16.msra.mxu0 %v2425
      %4112 = vmatprep.subr.bf16.mxu0 0
      %4113 = vmatpush1.bf16.msra.mxu0 %v2426
      %4114 = vmatprep.subr.bf16.mxu0 0
      %4115 = vmatpush1.bf16.msra.mxu0 %v2427
      %4116 = vmatprep.subr.bf16.mxu0 0
      %4117 = vmatpush1.bf16.msra.mxu0 %v2428
      %4118 = vmatprep.subr.bf16.mxu0 0
      %4119 = vmatpush1.bf16.msra.mxu0 %v2429
      %4120 = vmatprep.subr.bf16.mxu0 0
      %4121 = vmatpush1.bf16.msra.mxu0 %v2430
      %4122 = vmatprep.subr.bf16.mxu0 0
      %4123 = vmatpush1.bf16.msra.mxu0 %v2431
      %4124 = vmatprep.subr.bf16.mxu0 0
      %4125 = vmatpush1.bf16.msra.mxu0 %v2432
      %4126 = vmatprep.subr.bf16.mxu0 0
      %4127 = vmatpush1.bf16.msra.mxu0 %v2433
      %4128 = vmatprep.subr.bf16.mxu0 0
      %4129 = vmatpush1.bf16.msra.mxu0 %v2434
      %4130 = vmatprep.subr.bf16.mxu0 0
      %4131 = vmatpush1.bf16.msra.mxu0 %v2435
      %4132 = vmatprep.subr.bf16.mxu0 0
      %4133 = vmatpush1.bf16.msra.mxu0 %v2436
      %4134 = vmatprep.subr.bf16.mxu0 0
      %4135 = vmatpush1.bf16.msra.mxu0 %v2437
      %4136 = vmatprep.subr.bf16.mxu0 0
      %4137 = vmatpush1.bf16.msra.mxu0 %v2438
      %4138 = vmatprep.mubr.bf16.mxu0 %v977
      %4139 = vmatmul.mubr.bf16.gmra.mrb[0].mxu0 %v976
      %v4140 = vpop.f32.mrb[0].mxu0
      %v4141 = vadd.f32 %v3980, %v4140
      %v4142 = vpop.f32.mrb[0].mxu0
      %v4143 = vpop.f32.mrb[0].mxu0
      %v4144 = vadd.f32 %v3983, %v4143
      %v4145 = vpop.f32.mrb[0].mxu0
      %4146 = vmatprep.mubr.bf16.mxu0 %v998
      %4147 = vmatmul.mubr.bf16.gmra.mrb[0].mxu0 %v997
      %v4148 = vpop.f32.mrb[0].mxu0
      %v4149 = vadd.f32 %v3988, %v4148
      %v4150 = vpop.f32.mrb[0].mxu0
      %v4151 = vpop.f32.mrb[0].mxu0
      %v4152 = vadd.f32 %v3991, %v4151
      %v4153 = vpop.f32.mrb[0].mxu0
      %4154 = vmatprep.mubr.bf16.mxu0 %v1019
      %4155 = vmatmul.mubr.bf16.gmra.mrb[0].mxu0 %v1018
      %v4156 = vpop.f32.mrb[0].mxu0
      %v4157 = vadd.f32 %v3996, %v4156
      %v4158 = vpop.f32.mrb[0].mxu0
      %v4159 = vpop.f32.mrb[0].mxu0
      %v4160 = vadd.f32 %v3999, %v4159
      %v4161 = vpop.f32.mrb[0].mxu0
      %4162 = vmatprep.mubr.bf16.mxu0 %v1040
      %4163 = vmatmul.mubr.bf16.gmra.mrb[0].mxu0 %v1039
      %v4164 = vpop.f32.mrb[0].mxu0
      %v4165 = vadd.f32 %v4004, %v4164
      %v4166 = vpop.f32.mrb[0].mxu0
      %v4167 = vpop.f32.mrb[0].mxu0
      %v4168 = vadd.f32 %v4007, %v4167
      %v4169 = vpop.f32.mrb[0].mxu0
      %4170 = vmatprep.mubr.bf16.mxu0 %v1061
      %4171 = vmatmul.mubr.bf16.gmra.mrb[0].mxu0 %v1060
      %v4172 = vpop.f32.mrb[0].mxu0
      %v4173 = vadd.f32 %v4012, %v4172
      %v4174 = vpop.f32.mrb[0].mxu0
      %v4175 = vpop.f32.mrb[0].mxu0
      %v4176 = vadd.f32 %v4015, %v4175
      %v4177 = vpop.f32.mrb[0].mxu0
      %4178 = vmatprep.mubr.bf16.mxu0 %v1082
      %4179 = vmatmul.mubr.bf16.gmra.mrb[0].mxu0 %v1081
      %v4180 = vpop.f32.mrb[0].mxu0
      %v4181 = vadd.f32 %v4020, %v4180
      %v4182 = vpop.f32.mrb[0].mxu0
      %v4183 = vpop.f32.mrb[0].mxu0
      %v4184 = vadd.f32 %v4023, %v4183
      %v4185 = vpop.f32.mrb[0].mxu0
      %4186 = vmatprep.mubr.bf16.mxu0 %v1103
      %4187 = vmatmul.mubr.bf16.gmra.mrb[0].mxu0 %v1102
      %v4188 = vpop.f32.mrb[0].mxu0
      %v4189 = vadd.f32 %v4028, %v4188
      %v4190 = vpop.f32.mrb[0].mxu0
      %v4191 = vpop.f32.mrb[0].mxu0
      %v4192 = vadd.f32 %v4031, %v4191
      %v4193 = vpop.f32.mrb[0].mxu0
      %4194 = vmatprep.mubr.bf16.mxu0 %v1124
      %4195 = vmatmul.mubr.bf16.gmra.mrb[0].mxu0 %v1123
      %v4196 = vpop.f32.mrb[0].mxu0
      %v4197 = vadd.f32 %v4036, %v4196
      %v4198 = vpop.f32.mrb[0].mxu0
      %v4199 = vpop.f32.mrb[0].mxu0
      %v4200 = vadd.f32 %v4039, %v4199
      %v4201 = vpop.f32.mrb[0].mxu0
      %4202 = vmatprep.mubr.bf16.mxu0 %v1145
      %4203 = vmatmul.mubr.bf16.gmra.mrb[0].mxu0 %v1144
      %v4204 = vpop.f32.mrb[0].mxu0
      %v4205 = vadd.f32 %v4044, %v4204
      %v4206 = vpop.f32.mrb[0].mxu0
      %v4207 = vpop.f32.mrb[0].mxu0
      %v4208 = vadd.f32 %v4047, %v4207
      %v4209 = vpop.f32.mrb[0].mxu0
      %4210 = vmatprep.mubr.bf16.mxu0 %v1166
      %4211 = vmatmul.mubr.bf16.gmra.mrb[0].mxu0 %v1165
      %v4212 = vpop.f32.mrb[0].mxu0
      %v4213 = vadd.f32 %v4052, %v4212
      %v4214 = vpop.f32.mrb[0].mxu0
      %v4215 = vpop.f32.mrb[0].mxu0
      %v4216 = vadd.f32 %v4055, %v4215
      %v4217 = vpop.f32.mrb[0].mxu0
      %4218 = vmatprep.mubr.bf16.mxu0 %v1187
      %4219 = vmatmul.mubr.bf16.gmra.mrb[0].mxu0 %v1186
      %v4220 = vpop.f32.mrb[0].mxu0
      %v4221 = vadd.f32 %v4060, %v4220
      %v4222 = vpop.f32.mrb[0].mxu0
      %v4223 = vpop.f32.mrb[0].mxu0
      %v4224 = vadd.f32 %v4063, %v4223
      %v4225 = vpop.f32.mrb[0].mxu0
      %4226 = vmatprep.mubr.bf16.mxu0 %v1208
      %4227 = vmatmul.mubr.bf16.gmra.mrb[0].mxu0 %v1207
      %v4228 = vpop.f32.mrb[0].mxu0
      %v4229 = vadd.f32 %v4068, %v4228
      %v4230 = vpop.f32.mrb[0].mxu0
      %v4231 = vpop.f32.mrb[0].mxu0
      %v4232 = vadd.f32 %v4071, %v4231
      %v4233 = vpop.f32.mrb[0].mxu0
      %4234 = vmatprep.mubr.bf16.mxu0 %v1229
      %4235 = vmatmul.mubr.bf16.gmra.mrb[0].mxu0 %v1228
      %v4236 = vpop.f32.mrb[0].mxu0
      %v4237 = vadd.f32 %v4076, %v4236
      %v4238 = vpop.f32.mrb[0].mxu0
      %v4239 = vpop.f32.mrb[0].mxu0
      %v4240 = vadd.f32 %v4079, %v4239
      %v4241 = vpop.f32.mrb[0].mxu0
      %4242 = vmatprep.mubr.bf16.mxu0 %v1250
      %4243 = vmatmul.mubr.bf16.gmra.mrb[0].mxu0 %v1249
      %v4244 = vpop.f32.mrb[0].mxu0
      %v4245 = vadd.f32 %v4084, %v4244
      %v4246 = vpop.f32.mrb[0].mxu0
      %v4247 = vpop.f32.mrb[0].mxu0
      %v4248 = vadd.f32 %v4087, %v4247
      %v4249 = vpop.f32.mrb[0].mxu0
      %4250 = vmatprep.mubr.bf16.mxu0 %v1271
      %4251 = vmatmul.mubr.bf16.gmra.mrb[0].mxu0 %v1270
      %v4252 = vpop.f32.mrb[0].mxu0
      %v4253 = vadd.f32 %v4092, %v4252
      %v4254 = vpop.f32.mrb[0].mxu0
      %v4255 = vpop.f32.mrb[0].mxu0
      %v4256 = vadd.f32 %v4095, %v4255
      %v4257 = vpop.f32.mrb[0].mxu0
      %4258 = vmatprep.mubr.bf16.mxu0 %v1292
      %4259 = vmatmul.mubr.bf16.gmra.mrb[0].mxu0 %v1291
      %v4260 = vpop.f32.mrb[0].mxu0
      %v4261 = vadd.f32 %v4100, %v4260
      %v4262 = vpop.f32.mrb[0].mxu0
      %v4263 = vpop.f32.mrb[0].mxu0
      %v4264 = vadd.f32 %v4103, %v4263
      %v4265 = vpop.f32.mrb[0].mxu0
      %4266 = vdwg.mxu0
      %4267 = vmatprep.subr.bf16.mxu0 0
      %4268 = vmatpush1.bf16.msra.mxu0 %v2439
      %4269 = vmatprep.subr.bf16.mxu0 0
      %4270 = vmatpush1.bf16.msra.mxu0 %v2440
      %4271 = vmatprep.subr.bf16.mxu0 0
      %4272 = vmatpush1.bf16.msra.mxu0 %v2655
      %4273 = vmatprep.subr.bf16.mxu0 0
      %4274 = vmatpush1.bf16.msra.mxu0 0
      %4275 = vmatprep.subr.bf16.mxu0 0
      %4276 = vmatpush1.bf16.msra.mxu0 0
      %4277 = vmatprep.subr.bf16.mxu0 0
      %4278 = vmatpush1.bf16.msra.mxu0 0
      %4279 = vmatprep.subr.bf16.mxu0 0
      %4280 = vmatpush1.bf16.msra.mxu0 0
      %4281 = vmatprep.subr.bf16.mxu0 0
      %4282 = vmatpush1.bf16.msra.mxu0 0
      %4283 = vmatprep.subr.bf16.mxu0 0
      %4284 = vmatpush1.bf16.msra.mxu0 0
      %4285 = vmatprep.subr.bf16.mxu0 0
      %4286 = vmatpush1.bf16.msra.mxu0 0
      %4287 = vmatprep.subr.bf16.mxu0 0
      %4288 = vmatpush1.bf16.msra.mxu0 0
      %4289 = vmatprep.subr.bf16.mxu0 0
      %4290 = vmatpush1.bf16.msra.mxu0 0
      %4291 = vmatprep.subr.bf16.mxu0 0
      %4292 = vmatpush1.bf16.msra.mxu0 0
      %4293 = vmatprep.subr.bf16.mxu0 0
      %4294 = vmatpush1.bf16.msra.mxu0 0
      %4295 = vmatprep.subr.bf16.mxu0 0
      %4296 = vmatpush1.bf16.msra.mxu0 0
      %4297 = vmatprep.subr.bf16.mxu0 0
      %4298 = vmatpush1.bf16.msra.mxu0 0
      %4299 = vmatprep.mubr.bf16.mxu0 0
      %4300 = vmatmul.mubr.bf16.gmra.mrb[0].mxu0 %v2606
      %v4301 = vpop.f32.mrb[0].mxu0
      %v4302 = vadd.f32 %v4141, %v4301
      %v4303 = vpop.f32.mrb[0].mxu0
      %v4304 = vpop.f32.mrb[0].mxu0
      %v4305 = vadd.f32 %v4144, %v4304
      %v4306 = vpop.f32.mrb[0].mxu0
      %4307 = vmatprep.mubr.bf16.mxu0 0
      %4308 = vmatmul.mubr.bf16.gmra.mrb[0].mxu0 %v2609
      %v4309 = vpop.f32.mrb[0].mxu0
      %v4310 = vadd.f32 %v4149, %v4309
      %v4311 = vpop.f32.mrb[0].mxu0
      %v4312 = vpop.f32.mrb[0].mxu0
      %v4313 = vadd.f32 %v4152, %v4312
      %v4314 = vpop.f32.mrb[0].mxu0
      %4315 = vmatprep.mubr.bf16.mxu0 0
      %4316 = vmatmul.mubr.bf16.gmra.mrb[0].mxu0 %v2612
      %v4317 = vpop.f32.mrb[0].mxu0
      %v4318 = vadd.f32 %v4157, %v4317
      %v4319 = vpop.f32.mrb[0].mxu0
      %v4320 = vpop.f32.mrb[0].mxu0
      %v4321 = vadd.f32 %v4160, %v4320
      %v4322 = vpop.f32.mrb[0].mxu0
      %4323 = vmatprep.mubr.bf16.mxu0 0
      %4324 = vmatmul.mubr.bf16.gmra.mrb[0].mxu0 %v2615
      %v4325 = vpop.f32.mrb[0].mxu0
      %v4326 = vadd.f32 %v4165, %v4325
      %v4327 = vpop.f32.mrb[0].mxu0
      %v4328 = vpop.f32.mrb[0].mxu0
      %v4329 = vadd.f32 %v4168, %v4328
      %v4330 = vpop.f32.mrb[0].mxu0
      %4331 = vmatprep.mubr.bf16.mxu0 0
      %4332 = vmatmul.mubr.bf16.gmra.mrb[0].mxu0 %v2618
      %v4333 = vpop.f32.mrb[0].mxu0
      %v4334 = vadd.f32 %v4173, %v4333
      %v4335 = vpop.f32.mrb[0].mxu0
      %v4336 = vpop.f32.mrb[0].mxu0
      %v4337 = vadd.f32 %v4176, %v4336
      %v4338 = vpop.f32.mrb[0].mxu0
      %4339 = vmatprep.mubr.bf16.mxu0 0
      %4340 = vmatmul.mubr.bf16.gmra.mrb[0].mxu0 %v2621
      %v4341 = vpop.f32.mrb[0].mxu0
      %v4342 = vadd.f32 %v4181, %v4341
      %v4343 = vpop.f32.mrb[0].mxu0
      %v4344 = vpop.f32.mrb[0].mxu0
      %v4345 = vadd.f32 %v4184, %v4344
      %v4346 = vpop.f32.mrb[0].mxu0
      %4347 = vmatprep.mubr.bf16.mxu0 0
      %4348 = vmatmul.mubr.bf16.gmra.mrb[0].mxu0 %v2624
      %v4349 = vpop.f32.mrb[0].mxu0
      %v4350 = vadd.f32 %v4189, %v4349
      %v4351 = vpop.f32.mrb[0].mxu0
      %v4352 = vpop.f32.mrb[0].mxu0
      %v4353 = vadd.f32 %v4192, %v4352
      %v4354 = vpop.f32.mrb[0].mxu0
      %4355 = vmatprep.mubr.bf16.mxu0 0
      %4356 = vmatmul.mubr.bf16.gmra.mrb[0].mxu0 %v2627
      %v4357 = vpop.f32.mrb[0].mxu0
      %v4358 = vadd.f32 %v4197, %v4357
      %v4359 = vpop.f32.mrb[0].mxu0
      %v4360 = vpop.f32.mrb[0].mxu0
      %v4361 = vadd.f32 %v4200, %v4360
      %v4362 = vpop.f32.mrb[0].mxu0
      %4363 = vmatprep.mubr.bf16.mxu0 0
      %4364 = vmatmul.mubr.bf16.gmra.mrb[0].mxu0 %v2630
      %v4365 = vpop.f32.mrb[0].mxu0
      %v4366 = vadd.f32 %v4205, %v4365
      %v4367 = vpop.f32.mrb[0].mxu0
      %v4368 = vpop.f32.mrb[0].mxu0
      %v4369 = vadd.f32 %v4208, %v4368
      %v4370 = vpop.f32.mrb[0].mxu0
      %4371 = vmatprep.mubr.bf16.mxu0 0
      %4372 = vmatmul.mubr.bf16.gmra.mrb[0].mxu0 %v2633
      %v4373 = vpop.f32.mrb[0].mxu0
      %v4374 = vadd.f32 %v4213, %v4373
      %v4375 = vpop.f32.mrb[0].mxu0
      %v4376 = vpop.f32.mrb[0].mxu0
      %v4377 = vadd.f32 %v4216, %v4376
      %v4378 = vpop.f32.mrb[0].mxu0
      %4379 = vmatprep.mubr.bf16.mxu0 0
      %4380 = vmatmul.mubr.bf16.gmra.mrb[0].mxu0 %v2636
      %v4381 = vpop.f32.mrb[0].mxu0
      %v4382 = vadd.f32 %v4221, %v4381
      %v4383 = vpop.f32.mrb[0].mxu0
      %v4384 = vpop.f32.mrb[0].mxu0
      %v4385 = vadd.f32 %v4224, %v4384
      %v4386 = vpop.f32.mrb[0].mxu0
      %4387 = vmatprep.mubr.bf16.mxu0 0
      %4388 = vmatmul.mubr.bf16.gmra.mrb[0].mxu0 %v2639
      %v4389 = vpop.f32.mrb[0].mxu0
      %v4390 = vadd.f32 %v4229, %v4389
      %v4391 = vpop.f32.mrb[0].mxu0
      %v4392 = vpop.f32.mrb[0].mxu0
      %v4393 = vadd.f32 %v4232, %v4392
      %v4394 = vpop.f32.mrb[0].mxu0
      %4395 = vmatprep.mubr.bf16.mxu0 0
      %4396 = vmatmul.mubr.bf16.gmra.mrb[0].mxu0 %v2642
      %v4397 = vpop.f32.mrb[0].mxu0
      %v4398 = vadd.f32 %v4237, %v4397
      %v4399 = vpop.f32.mrb[0].mxu0
      %v4400 = vpop.f32.mrb[0].mxu0
      %v4401 = vadd.f32 %v4240, %v4400
      %v4402 = vpop.f32.mrb[0].mxu0
      %4403 = vmatprep.mubr.bf16.mxu0 0
      %4404 = vmatmul.mubr.bf16.gmra.mrb[0].mxu0 %v2645
      %v4405 = vpop.f32.mrb[0].mxu0
      %v4406 = vadd.f32 %v4245, %v4405
      %v4407 = vpop.f32.mrb[0].mxu0
      %v4408 = vpop.f32.mrb[0].mxu0
      %v4409 = vadd.f32 %v4248, %v4408
      %v4410 = vpop.f32.mrb[0].mxu0
      %4411 = vmatprep.mubr.bf16.mxu0 0
      %4412 = vmatmul.mubr.bf16.gmra.mrb[0].mxu0 %v2648
      %v4413 = vpop.f32.mrb[0].mxu0
      %v4414 = vadd.f32 %v4253, %v4413
      %v4415 = vpop.f32.mrb[0].mxu0
      %v4416 = vpop.f32.mrb[0].mxu0
      %v4417 = vadd.f32 %v4256, %v4416
      %v4418 = vpop.f32.mrb[0].mxu0
      %4419 = vmatprep.mubr.bf16.mxu0 0
      %4420 = vmatmul.mubr.bf16.gmra.mrb[0].mxu0 %v2651
      %v4421 = vpop.f32.mrb[0].mxu0
      %v4422 = vadd.f32 %v4261, %v4421
      %v4423 = vpop.f32.mrb[0].mxu0
      %v4424 = vpop.f32.mrb[0].mxu0
      %v4425 = vadd.f32 %v4264, %v4424
      %v4426 = vpop.f32.mrb[0].mxu0
      %4427 = vdwg.mxu0
      %v4428 = vmax.f32 %v4302, 0.0
      %v4429 = vmax.f32 %v4305, 0.0
      %v4430 = vmax.f32 %v4310, 0.0
      %v4431 = vmax.f32 %v4313, 0.0
      %v4432 = vmax.f32 %v4318, 0.0
      %v4433 = vmax.f32 %v4321, 0.0
      %v4434 = vmax.f32 %v4326, 0.0
      %v4435 = vmax.f32 %v4329, 0.0
      %v4436 = vmax.f32 %v4334, 0.0
      %v4437 = vmax.f32 %v4337, 0.0
      %v4438 = vmax.f32 %v4342, 0.0
      %v4439 = vmax.f32 %v4345, 0.0
      %v4440 = vmax.f32 %v4350, 0.0
      %v4441 = vmax.f32 %v4353, 0.0
      %v4442 = vmax.f32 %v4358, 0.0
      %v4443 = vmax.f32 %v4361, 0.0
      %v4444 = vmax.f32 %v4366, 0.0
      %v4445 = vmax.f32 %v4369, 0.0
      %v4446 = vmax.f32 %v4374, 0.0
      %v4447 = vmax.f32 %v4377, 0.0
      %v4448 = vmax.f32 %v4382, 0.0
      %v4449 = vmax.f32 %v4385, 0.0
      %v4450 = vmax.f32 %v4390, 0.0
      %v4451 = vmax.f32 %v4393, 0.0
      %v4452 = vmax.f32 %v4398, 0.0
      %v4453 = vmax.f32 %v4401, 0.0
      %v4454 = vmax.f32 %v4406, 0.0
      %v4455 = vmax.f32 %v4409, 0.0
      %v4456 = vmax.f32 %v4414, 0.0
      %v4457 = vmax.f32 %v4417, 0.0
      %v4458 = vmax.f32 %v4422, 0.0
      %v4459 = vmax.f32 %v4425, 0.0
      %v4460 = vld [vmem:[%s3] sm:$0xff]
      %v4461 = vld [vmem:[%s3 + $0x8] sm:$0xff]
      %v4462 = vld [vmem:[%s3 + $0x10] sm:$0xff]
      %v4463 = vld [vmem:[%s3 + $0x18] sm:$0xff]
      %v4464 = vld [vmem:[%s4] sm:$0x1]
      %v4466 = vlaneseq
      %v4467 = vshrl.u32 %v4466, 7
      %v4468 = vsub.s32 0, %v4467
      %v4469 = vrot.slane %v4464, %v4468
      %vm4471 = vcmask 261120
      %v4473 = vsel %vm4471, %v4428, 0
      %v4476 = vsel %vm4471, %v4429, 0
      %v4479 = vsel %vm4471, %v4430, 0
      %v4482 = vsel %vm4471, %v4431, 0
      %v4485 = vsel %vm4471, %v4432, 0
      %v4488 = vsel %vm4471, %v4433, 0
      %v4491 = vsel %vm4471, %v4434, 0
      %v4494 = vsel %vm4471, %v4435, 0
      %v4497 = vsel %vm4471, %v4436, 0
      %v4500 = vsel %vm4471, %v4437, 0
      %v4503 = vsel %vm4471, %v4438, 0
      %v4506 = vsel %vm4471, %v4439, 0
      %v4509 = vsel %vm4471, %v4440, 0
      %v4512 = vsel %vm4471, %v4441, 0
      %v4515 = vsel %vm4471, %v4442, 0
      %v4518 = vsel %vm4471, %v4443, 0
      %v4521 = vsel %vm4471, %v4444, 0
      %v4524 = vsel %vm4471, %v4445, 0
      %v4527 = vsel %vm4471, %v4446, 0
      %v4530 = vsel %vm4471, %v4447, 0
      %v4533 = vsel %vm4471, %v4448, 0
      %v4536 = vsel %vm4471, %v4449, 0
      %v4539 = vsel %vm4471, %v4450, 0
      %v4542 = vsel %vm4471, %v4451, 0
      %v4545 = vsel %vm4471, %v4452, 0
      %v4548 = vsel %vm4471, %v4453, 0
      %v4551 = vsel %vm4471, %v4454, 0
      %v4554 = vsel %vm4471, %v4455, 0
      %v4557 = vsel %vm4471, %v4456, 0
      %v4560 = vsel %vm4471, %v4457, 0
      %v4563 = vsel %vm4471, %v4458, 0
      %v4566 = vsel %vm4471, %v4459, 0
      %4568 = vmatprep.subr.mxu0 0.0
      %4569 = vmatpush1.msra.mxu0 %v4460
      %4570 = vmatprep.subr.mxu0 0.0
      %4571 = vmatpush1.msra.mxu0 %v4461
      %4572 = vmatprep.subr.mxu0 0.0
      %4573 = vmatpush1.msra.mxu0 %v4462
      %4574 = vmatprep.subr.mxu0 0.0
      %4575 = vmatpush1.msra.mxu0 %v4463
      %4576 = vmatprep.subr.mxu0 0.0
      %4577 = vmatpush1.msra.mxu0 0.0
      %4578 = vmatprep.subr.mxu0 0.0
      %4579 = vmatpush1.msra.mxu0 0.0
      %4580 = vmatprep.subr.mxu0 0.0
      %4581 = vmatpush1.msra.mxu0 0.0
      %4582 = vmatprep.subr.mxu0 0.0
      %4583 = vmatpush1.msra.mxu0 0.0
      %4584 = vmatprep.subr.mxu0 0.0
      %4585 = vmatpush1.msra.mxu0 0.0
      %4586 = vmatprep.subr.mxu0 0.0
      %4587 = vmatpush1.msra.mxu0 0.0
      %4588 = vmatprep.subr.mxu0 0.0
      %4589 = vmatpush1.msra.mxu0 0.0
      %4590 = vmatprep.subr.mxu0 0.0
      %4591 = vmatpush1.msra.mxu0 0.0
      %4592 = vmatprep.subr.mxu0 0.0
      %4593 = vmatpush1.msra.mxu0 0.0
      %4594 = vmatprep.subr.mxu0 0.0
      %4595 = vmatpush1.msra.mxu0 0.0
      %4596 = vmatprep.subr.mxu0 0.0
      %4597 = vmatpush1.msra.mxu0 0.0
      %4598 = vmatprep.subr.mxu0 0.0
      %4599 = vmatpush1.msra.mxu0 0.0
      %4600 = vmatprep.subr.mxu0 0.0
      %4601 = vmatpush1.msra.mxu0 0.0
      %4602 = vmatprep.subr.mxu0 0.0
      %4603 = vmatpush1.msra.mxu0 0.0
      %4604 = vmatprep.subr.mxu0 0.0
      %4605 = vmatpush1.msra.mxu0 0.0
      %4606 = vmatprep.subr.mxu0 0.0
      %4607 = vmatpush1.msra.mxu0 0.0
      %4608 = vmatprep.subr.mxu0 0.0
      %4609 = vmatpush1.msra.mxu0 0.0
      %4610 = vmatprep.subr.mxu0 0.0
      %4611 = vmatpush1.msra.mxu0 0.0
      %4612 = vmatprep.subr.mxu0 0.0
      %4613 = vmatpush1.msra.mxu0 0.0
      %4614 = vmatprep.subr.mxu0 0.0
      %4615 = vmatpush1.msra.mxu0 0.0
      %4616 = vmatprep.subr.mxu0 0.0
      %4617 = vmatpush1.msra.mxu0 0.0
      %4618 = vmatprep.subr.mxu0 0.0
      %4619 = vmatpush1.msra.mxu0 0.0
      %4620 = vmatprep.subr.mxu0 0.0
      %4621 = vmatpush1.msra.mxu0 0.0
      %4622 = vmatprep.subr.mxu0 0.0
      %4623 = vmatpush1.msra.mxu0 0.0
      %4624 = vmatprep.subr.mxu0 0.0
      %4625 = vmatpush1.msra.mxu0 0.0
      %4626 = vmatprep.subr.mxu0 0.0
      %4627 = vmatpush1.msra.mxu0 0.0
      %4628 = vmatprep.subr.mxu0 0.0
      %4629 = vmatpush1.msra.mxu0 0.0
      %4630 = vmatprep.subr.mxu0 0.0
      %4631 = vmatpush1.msra.mxu0 0.0
      %4632 = vmatprep.mubr.f32.mxu0 0.0
      %4633 = vmatmul.mubr.f32.gmra.mrb[0].mxu0 %v4473
      %v4634 = vpop.f32.mrb[0].mxu0
      %v4635 = vadd.f32 %v4469, %v4634
      %v4636 = vpop.f32.mrb[0].mxu0
      %4637 = vmatprep.mubr.f32.mxu0 0.0
      %4638 = vmatmul.mubr.f32.gmra.mrb[0].mxu0 %v4476
      %v4639 = vpop.f32.mrb[0].mxu0
      %v4640 = vadd.f32 %v4469, %v4639
      %v4641 = vpop.f32.mrb[0].mxu0
      %4642 = vmatprep.mubr.f32.mxu0 0.0
      %4643 = vmatmul.mubr.f32.gmra.mrb[0].mxu0 %v4479
      %v4644 = vpop.f32.mrb[0].mxu0
      %v4645 = vadd.f32 %v4469, %v4644
      %v4646 = vpop.f32.mrb[0].mxu0
      %4647 = vmatprep.mubr.f32.mxu0 0.0
      %4648 = vmatmul.mubr.f32.gmra.mrb[0].mxu0 %v4482
      %v4649 = vpop.f32.mrb[0].mxu0
      %v4650 = vadd.f32 %v4469, %v4649
      %v4651 = vpop.f32.mrb[0].mxu0
      %4652 = vmatprep.mubr.f32.mxu0 0.0
      %4653 = vmatmul.mubr.f32.gmra.mrb[0].mxu0 %v4485
      %v4654 = vpop.f32.mrb[0].mxu0
      %v4655 = vadd.f32 %v4469, %v4654
      %v4656 = vpop.f32.mrb[0].mxu0
      %4657 = vmatprep.mubr.f32.mxu0 0.0
      %4658 = vmatmul.mubr.f32.gmra.mrb[0].mxu0 %v4488
      %v4659 = vpop.f32.mrb[0].mxu0
      %v4660 = vadd.f32 %v4469, %v4659
      %v4661 = vpop.f32.mrb[0].mxu0
      %4662 = vmatprep.mubr.f32.mxu0 0.0
      %4663 = vmatmul.mubr.f32.gmra.mrb[0].mxu0 %v4491
      %v4664 = vpop.f32.mrb[0].mxu0
      %v4665 = vadd.f32 %v4469, %v4664
      %v4666 = vpop.f32.mrb[0].mxu0
      %4667 = vmatprep.mubr.f32.mxu0 0.0
      %4668 = vmatmul.mubr.f32.gmra.mrb[0].mxu0 %v4494
      %v4669 = vpop.f32.mrb[0].mxu0
      %v4670 = vadd.f32 %v4469, %v4669
      %v4671 = vpop.f32.mrb[0].mxu0
      %4672 = vmatprep.mubr.f32.mxu0 0.0
      %4673 = vmatmul.mubr.f32.gmra.mrb[0].mxu0 %v4497
      %v4674 = vpop.f32.mrb[0].mxu0
      %v4675 = vadd.f32 %v4469, %v4674
      %v4676 = vpop.f32.mrb[0].mxu0
      %4677 = vmatprep.mubr.f32.mxu0 0.0
      %4678 = vmatmul.mubr.f32.gmra.mrb[0].mxu0 %v4500
      %v4679 = vpop.f32.mrb[0].mxu0
      %v4680 = vadd.f32 %v4469, %v4679
      %v4681 = vpop.f32.mrb[0].mxu0
      %4682 = vmatprep.mubr.f32.mxu0 0.0
      %4683 = vmatmul.mubr.f32.gmra.mrb[0].mxu0 %v4503
      %v4684 = vpop.f32.mrb[0].mxu0
      %v4685 = vadd.f32 %v4469, %v4684
      %v4686 = vpop.f32.mrb[0].mxu0
      %4687 = vmatprep.mubr.f32.mxu0 0.0
      %4688 = vmatmul.mubr.f32.gmra.mrb[0].mxu0 %v4506
      %v4689 = vpop.f32.mrb[0].mxu0
      %v4690 = vadd.f32 %v4469, %v4689
      %v4691 = vpop.f32.mrb[0].mxu0
      %4692 = vmatprep.mubr.f32.mxu0 0.0
      %4693 = vmatmul.mubr.f32.gmra.mrb[0].mxu0 %v4509
      %v4694 = vpop.f32.mrb[0].mxu0
      %v4695 = vadd.f32 %v4469, %v4694
      %v4696 = vpop.f32.mrb[0].mxu0
      %4697 = vmatprep.mubr.f32.mxu0 0.0
      %4698 = vmatmul.mubr.f32.gmra.mrb[0].mxu0 %v4512
      %v4699 = vpop.f32.mrb[0].mxu0
      %v4700 = vadd.f32 %v4469, %v4699
      %v4701 = vpop.f32.mrb[0].mxu0
      %4702 = vmatprep.mubr.f32.mxu0 0.0
      %4703 = vmatmul.mubr.f32.gmra.mrb[0].mxu0 %v4515
      %v4704 = vpop.f32.mrb[0].mxu0
      %v4705 = vadd.f32 %v4469, %v4704
      %v4706 = vpop.f32.mrb[0].mxu0
      %4707 = vmatprep.mubr.f32.mxu0 0.0
      %4708 = vmatmul.mubr.f32.gmra.mrb[0].mxu0 %v4518
      %v4709 = vpop.f32.mrb[0].mxu0
      %v4710 = vadd.f32 %v4469, %v4709
      %v4711 = vpop.f32.mrb[0].mxu0
      %4712 = vmatprep.mubr.f32.mxu0 0.0
      %4713 = vmatmul.mubr.f32.gmra.mrb[0].mxu0 %v4521
      %v4714 = vpop.f32.mrb[0].mxu0
      %v4715 = vadd.f32 %v4469, %v4714
      %v4716 = vpop.f32.mrb[0].mxu0
      %4717 = vmatprep.mubr.f32.mxu0 0.0
      %4718 = vmatmul.mubr.f32.gmra.mrb[0].mxu0 %v4524
      %v4719 = vpop.f32.mrb[0].mxu0
      %v4720 = vadd.f32 %v4469, %v4719
      %v4721 = vpop.f32.mrb[0].mxu0
      %4722 = vmatprep.mubr.f32.mxu0 0.0
      %4723 = vmatmul.mubr.f32.gmra.mrb[0].mxu0 %v4527
      %v4724 = vpop.f32.mrb[0].mxu0
      %v4725 = vadd.f32 %v4469, %v4724
      %v4726 = vpop.f32.mrb[0].mxu0
      %4727 = vmatprep.mubr.f32.mxu0 0.0
      %4728 = vmatmul.mubr.f32.gmra.mrb[0].mxu0 %v4530
      %v4729 = vpop.f32.mrb[0].mxu0
      %v4730 = vadd.f32 %v4469, %v4729
      %v4731 = vpop.f32.mrb[0].mxu0
      %4732 = vmatprep.mubr.f32.mxu0 0.0
      %4733 = vmatmul.mubr.f32.gmra.mrb[0].mxu0 %v4533
      %v4734 = vpop.f32.mrb[0].mxu0
      %v4735 = vadd.f32 %v4469, %v4734
      %v4736 = vpop.f32.mrb[0].mxu0
      %4737 = vmatprep.mubr.f32.mxu0 0.0
      %4738 = vmatmul.mubr.f32.gmra.mrb[0].mxu0 %v4536
      %v4739 = vpop.f32.mrb[0].mxu0
      %v4740 = vadd.f32 %v4469, %v4739
      %v4741 = vpop.f32.mrb[0].mxu0
      %4742 = vmatprep.mubr.f32.mxu0 0.0
      %4743 = vmatmul.mubr.f32.gmra.mrb[0].mxu0 %v4539
      %v4744 = vpop.f32.mrb[0].mxu0
      %v4745 = vadd.f32 %v4469, %v4744
      %v4746 = vpop.f32.mrb[0].mxu0
      %4747 = vmatprep.mubr.f32.mxu0 0.0
      %4748 = vmatmul.mubr.f32.gmra.mrb[0].mxu0 %v4542
      %v4749 = vpop.f32.mrb[0].mxu0
      %v4750 = vadd.f32 %v4469, %v4749
      %v4751 = vpop.f32.mrb[0].mxu0
      %4752 = vmatprep.mubr.f32.mxu0 0.0
      %4753 = vmatmul.mubr.f32.gmra.mrb[0].mxu0 %v4545
      %v4754 = vpop.f32.mrb[0].mxu0
      %v4755 = vadd.f32 %v4469, %v4754
      %v4756 = vpop.f32.mrb[0].mxu0
      %4757 = vmatprep.mubr.f32.mxu0 0.0
      %4758 = vmatmul.mubr.f32.gmra.mrb[0].mxu0 %v4548
      %v4759 = vpop.f32.mrb[0].mxu0
      %v4760 = vadd.f32 %v4469, %v4759
      %v4761 = vpop.f32.mrb[0].mxu0
      %4762 = vmatprep.mubr.f32.mxu0 0.0
      %4763 = vmatmul.mubr.f32.gmra.mrb[0].mxu0 %v4551
      %v4764 = vpop.f32.mrb[0].mxu0
      %v4765 = vadd.f32 %v4469, %v4764
      %v4766 = vpop.f32.mrb[0].mxu0
      %4767 = vmatprep.mubr.f32.mxu0 0.0
      %4768 = vmatmul.mubr.f32.gmra.mrb[0].mxu0 %v4554
      %v4769 = vpop.f32.mrb[0].mxu0
      %v4770 = vadd.f32 %v4469, %v4769
      %v4771 = vpop.f32.mrb[0].mxu0
      %4772 = vmatprep.mubr.f32.mxu0 0.0
      %4773 = vmatmul.mubr.f32.gmra.mrb[0].mxu0 %v4557
      %v4774 = vpop.f32.mrb[0].mxu0
      %v4775 = vadd.f32 %v4469, %v4774
      %v4776 = vpop.f32.mrb[0].mxu0
      %4777 = vmatprep.mubr.f32.mxu0 0.0
      %4778 = vmatmul.mubr.f32.gmra.mrb[0].mxu0 %v4560
      %v4779 = vpop.f32.mrb[0].mxu0
      %v4780 = vadd.f32 %v4469, %v4779
      %v4781 = vpop.f32.mrb[0].mxu0
      %4782 = vmatprep.mubr.f32.mxu0 0.0
      %4783 = vmatmul.mubr.f32.gmra.mrb[0].mxu0 %v4563
      %v4784 = vpop.f32.mrb[0].mxu0
      %v4785 = vadd.f32 %v4469, %v4784
      %v4786 = vpop.f32.mrb[0].mxu0
      %4787 = vmatprep.mubr.f32.mxu0 0.0
      %4788 = vmatmul.mubr.f32.gmra.mrb[0].mxu0 %v4566
      %v4789 = vpop.f32.mrb[0].mxu0
      %v4790 = vadd.f32 %v4469, %v4789
      %v4791 = vpop.f32.mrb[0].mxu0
      %4792 = vdwg.mxu0
      %v4793 = vmax.f32 %v4635, 0.0
      %v4794 = vmax.f32 %v4640, 0.0
      %v4795 = vmax.f32 %v4645, 0.0
      %v4796 = vmax.f32 %v4650, 0.0
      %v4797 = vmax.f32 %v4655, 0.0
      %v4798 = vmax.f32 %v4660, 0.0
      %v4799 = vmax.f32 %v4665, 0.0
      %v4800 = vmax.f32 %v4670, 0.0
      %v4801 = vmax.f32 %v4675, 0.0
      %v4802 = vmax.f32 %v4680, 0.0
      %v4803 = vmax.f32 %v4685, 0.0
      %v4804 = vmax.f32 %v4690, 0.0
      %v4805 = vmax.f32 %v4695, 0.0
      %v4806 = vmax.f32 %v4700, 0.0
      %v4807 = vmax.f32 %v4705, 0.0
      %v4808 = vmax.f32 %v4710, 0.0
      %v4809 = vmax.f32 %v4715, 0.0
      %v4810 = vmax.f32 %v4720, 0.0
      %v4811 = vmax.f32 %v4725, 0.0
      %v4812 = vmax.f32 %v4730, 0.0
      %v4813 = vmax.f32 %v4735, 0.0
      %v4814 = vmax.f32 %v4740, 0.0
      %v4815 = vmax.f32 %v4745, 0.0
      %v4816 = vmax.f32 %v4750, 0.0
      %v4817 = vmax.f32 %v4755, 0.0
      %v4818 = vmax.f32 %v4760, 0.0
      %v4819 = vmax.f32 %v4765, 0.0
      %v4820 = vmax.f32 %v4770, 0.0
      %v4821 = vmax.f32 %v4775, 0.0
      %v4822 = vmax.f32 %v4780, 0.0
      %v4823 = vmax.f32 %v4785, 0.0
      %v4824 = vmax.f32 %v4790, 0.0
      %v4825 = vld [vmem:[%s5] sm:$0xff]
      %v4826 = vld [vmem:[%s5 + $0x8] sm:$0xff]
      %v4827 = vld [vmem:[%s5 + $0x10] sm:$0xff]
      %v4828 = vld [vmem:[%s5 + $0x18] sm:$0xff]
      %v4829 = vld [vmem:[%s6] sm:$0x1]
      %v4831 = vlaneseq
      %v4832 = vshrl.u32 %v4831, 7
      %v4833 = vsub.s32 0, %v4832
      %v4834 = vrot.slane %v4829, %v4833
      %v4837 = vsel %vm4471, %v4793, 0
      %v4840 = vsel %vm4471, %v4794, 0
      %v4843 = vsel %vm4471, %v4795, 0
      %v4846 = vsel %vm4471, %v4796, 0
      %v4849 = vsel %vm4471, %v4797, 0
      %v4852 = vsel %vm4471, %v4798, 0
      %v4855 = vsel %vm4471, %v4799, 0
      %v4858 = vsel %vm4471, %v4800, 0
      %v4861 = vsel %vm4471, %v4801, 0
      %v4864 = vsel %vm4471, %v4802, 0
      %v4867 = vsel %vm4471, %v4803, 0
      %v4870 = vsel %vm4471, %v4804, 0
      %v4873 = vsel %vm4471, %v4805, 0
      %v4876 = vsel %vm4471, %v4806, 0
      %v4879 = vsel %vm4471, %v4807, 0
      %v4882 = vsel %vm4471, %v4808, 0
      %v4885 = vsel %vm4471, %v4809, 0
      %v4888 = vsel %vm4471, %v4810, 0
      %v4891 = vsel %vm4471, %v4811, 0
      %v4894 = vsel %vm4471, %v4812, 0
      %v4897 = vsel %vm4471, %v4813, 0
      %v4900 = vsel %vm4471, %v4814, 0
      %v4903 = vsel %vm4471, %v4815, 0
      %v4906 = vsel %vm4471, %v4816, 0
      %v4909 = vsel %vm4471, %v4817, 0
      %v4912 = vsel %vm4471, %v4818, 0
      %v4915 = vsel %vm4471, %v4819, 0
      %v4918 = vsel %vm4471, %v4820, 0
      %v4921 = vsel %vm4471, %v4821, 0
      %v4924 = vsel %vm4471, %v4822, 0
      %v4927 = vsel %vm4471, %v4823, 0
      %v4930 = vsel %vm4471, %v4824, 0
      %4932 = vmatprep.subr.mxu0 0.0
      %4933 = vmatpush1.msra.mxu0 %v4825
      %4934 = vmatprep.subr.mxu0 0.0
      %4935 = vmatpush1.msra.mxu0 %v4826
      %4936 = vmatprep.subr.mxu0 0.0
      %4937 = vmatpush1.msra.mxu0 %v4827
      %4938 = vmatprep.subr.mxu0 0.0
      %4939 = vmatpush1.msra.mxu0 %v4828
      %4940 = vmatprep.subr.mxu0 0.0
      %4941 = vmatpush1.msra.mxu0 0.0
      %4942 = vmatprep.subr.mxu0 0.0
      %4943 = vmatpush1.msra.mxu0 0.0
      %4944 = vmatprep.subr.mxu0 0.0
      %4945 = vmatpush1.msra.mxu0 0.0
      %4946 = vmatprep.subr.mxu0 0.0
      %4947 = vmatpush1.msra.mxu0 0.0
      %4948 = vmatprep.subr.mxu0 0.0
      %4949 = vmatpush1.msra.mxu0 0.0
      %4950 = vmatprep.subr.mxu0 0.0
      %4951 = vmatpush1.msra.mxu0 0.0
      %4952 = vmatprep.subr.mxu0 0.0
      %4953 = vmatpush1.msra.mxu0 0.0
      %4954 = vmatprep.subr.mxu0 0.0
      %4955 = vmatpush1.msra.mxu0 0.0
      %4956 = vmatprep.subr.mxu0 0.0
      %4957 = vmatpush1.msra.mxu0 0.0
      %4958 = vmatprep.subr.mxu0 0.0
      %4959 = vmatpush1.msra.mxu0 0.0
      %4960 = vmatprep.subr.mxu0 0.0
      %4961 = vmatpush1.msra.mxu0 0.0
      %4962 = vmatprep.subr.mxu0 0.0
      %4963 = vmatpush1.msra.mxu0 0.0
      %4964 = vmatprep.subr.mxu0 0.0
      %4965 = vmatpush1.msra.mxu0 0.0
      %4966 = vmatprep.subr.mxu0 0.0
      %4967 = vmatpush1.msra.mxu0 0.0
      %4968 = vmatprep.subr.mxu0 0.0
      %4969 = vmatpush1.msra.mxu0 0.0
      %4970 = vmatprep.subr.mxu0 0.0
      %4971 = vmatpush1.msra.mxu0 0.0
      %4972 = vmatprep.subr.mxu0 0.0
      %4973 = vmatpush1.msra.mxu0 0.0
      %4974 = vmatprep.subr.mxu0 0.0
      %4975 = vmatpush1.msra.mxu0 0.0
      %4976 = vmatprep.subr.mxu0 0.0
      %4977 = vmatpush1.msra.mxu0 0.0
      %4978 = vmatprep.subr.mxu0 0.0
      %4979 = vmatpush1.msra.mxu0 0.0
      %4980 = vmatprep.subr.mxu0 0.0
      %4981 = vmatpush1.msra.mxu0 0.0
      %4982 = vmatprep.subr.mxu0 0.0
      %4983 = vmatpush1.msra.mxu0 0.0
      %4984 = vmatprep.subr.mxu0 0.0
      %4985 = vmatpush1.msra.mxu0 0.0
      %4986 = vmatprep.subr.mxu0 0.0
      %4987 = vmatpush1.msra.mxu0 0.0
      %4988 = vmatprep.subr.mxu0 0.0
      %4989 = vmatpush1.msra.mxu0 0.0
      %4990 = vmatprep.subr.mxu0 0.0
      %4991 = vmatpush1.msra.mxu0 0.0
      %4992 = vmatprep.subr.mxu0 0.0
      %4993 = vmatpush1.msra.mxu0 0.0
      %4994 = vmatprep.subr.mxu0 0.0
      %4995 = vmatpush1.msra.mxu0 0.0
      %4996 = vmatprep.mubr.f32.mxu0 0.0
      %4997 = vmatmul.mubr.f32.gmra.mrb[0].mxu0 %v4837
      %v4998 = vpop.f32.mrb[0].mxu0
      %v4999 = vadd.f32 %v4834, %v4998
      %v5000 = vpop.f32.mrb[0].mxu0
      %5001 = vmatprep.mubr.f32.mxu0 0.0
      %5002 = vmatmul.mubr.f32.gmra.mrb[0].mxu0 %v4840
      %v5003 = vpop.f32.mrb[0].mxu0
      %v5004 = vadd.f32 %v4834, %v5003
      %v5005 = vpop.f32.mrb[0].mxu0
      %5006 = vmatprep.mubr.f32.mxu0 0.0
      %5007 = vmatmul.mubr.f32.gmra.mrb[0].mxu0 %v4843
      %v5008 = vpop.f32.mrb[0].mxu0
      %v5009 = vadd.f32 %v4834, %v5008
      %v5010 = vpop.f32.mrb[0].mxu0
      %5011 = vmatprep.mubr.f32.mxu0 0.0
      %5012 = vmatmul.mubr.f32.gmra.mrb[0].mxu0 %v4846
      %v5013 = vpop.f32.mrb[0].mxu0
      %v5014 = vadd.f32 %v4834, %v5013
      %v5015 = vpop.f32.mrb[0].mxu0
      %5016 = vmatprep.mubr.f32.mxu0 0.0
      %5017 = vmatmul.mubr.f32.gmra.mrb[0].mxu0 %v4849
      %v5018 = vpop.f32.mrb[0].mxu0
      %v5019 = vadd.f32 %v4834, %v5018
      %v5020 = vpop.f32.mrb[0].mxu0
      %5021 = vmatprep.mubr.f32.mxu0 0.0
      %5022 = vmatmul.mubr.f32.gmra.mrb[0].mxu0 %v4852
      %v5023 = vpop.f32.mrb[0].mxu0
      %v5024 = vadd.f32 %v4834, %v5023
      %v5025 = vpop.f32.mrb[0].mxu0
      %5026 = vmatprep.mubr.f32.mxu0 0.0
      %5027 = vmatmul.mubr.f32.gmra.mrb[0].mxu0 %v4855
      %v5028 = vpop.f32.mrb[0].mxu0
      %v5029 = vadd.f32 %v4834, %v5028
      %v5030 = vpop.f32.mrb[0].mxu0
      %5031 = vmatprep.mubr.f32.mxu0 0.0
      %5032 = vmatmul.mubr.f32.gmra.mrb[0].mxu0 %v4858
      %v5033 = vpop.f32.mrb[0].mxu0
      %v5034 = vadd.f32 %v4834, %v5033
      %v5035 = vpop.f32.mrb[0].mxu0
      %5036 = vmatprep.mubr.f32.mxu0 0.0
      %5037 = vmatmul.mubr.f32.gmra.mrb[0].mxu0 %v4861
      %v5038 = vpop.f32.mrb[0].mxu0
      %v5039 = vadd.f32 %v4834, %v5038
      %v5040 = vpop.f32.mrb[0].mxu0
      %5041 = vmatprep.mubr.f32.mxu0 0.0
      %5042 = vmatmul.mubr.f32.gmra.mrb[0].mxu0 %v4864
      %v5043 = vpop.f32.mrb[0].mxu0
      %v5044 = vadd.f32 %v4834, %v5043
      %v5045 = vpop.f32.mrb[0].mxu0
      %5046 = vmatprep.mubr.f32.mxu0 0.0
      %5047 = vmatmul.mubr.f32.gmra.mrb[0].mxu0 %v4867
      %v5048 = vpop.f32.mrb[0].mxu0
      %v5049 = vadd.f32 %v4834, %v5048
      %v5050 = vpop.f32.mrb[0].mxu0
      %5051 = vmatprep.mubr.f32.mxu0 0.0
      %5052 = vmatmul.mubr.f32.gmra.mrb[0].mxu0 %v4870
      %v5053 = vpop.f32.mrb[0].mxu0
      %v5054 = vadd.f32 %v4834, %v5053
      %v5055 = vpop.f32.mrb[0].mxu0
      %5056 = vmatprep.mubr.f32.mxu0 0.0
      %5057 = vmatmul.mubr.f32.gmra.mrb[0].mxu0 %v4873
      %v5058 = vpop.f32.mrb[0].mxu0
      %v5059 = vadd.f32 %v4834, %v5058
      %v5060 = vpop.f32.mrb[0].mxu0
      %5061 = vmatprep.mubr.f32.mxu0 0.0
      %5062 = vmatmul.mubr.f32.gmra.mrb[0].mxu0 %v4876
      %v5063 = vpop.f32.mrb[0].mxu0
      %v5064 = vadd.f32 %v4834, %v5063
      %v5065 = vpop.f32.mrb[0].mxu0
      %5066 = vmatprep.mubr.f32.mxu0 0.0
      %5067 = vmatmul.mubr.f32.gmra.mrb[0].mxu0 %v4879
      %v5068 = vpop.f32.mrb[0].mxu0
      %v5069 = vadd.f32 %v4834, %v5068
      %v5070 = vpop.f32.mrb[0].mxu0
      %5071 = vmatprep.mubr.f32.mxu0 0.0
      %5072 = vmatmul.mubr.f32.gmra.mrb[0].mxu0 %v4882
      %v5073 = vpop.f32.mrb[0].mxu0
      %v5074 = vadd.f32 %v4834, %v5073
      %v5075 = vpop.f32.mrb[0].mxu0
      %5076 = vmatprep.mubr.f32.mxu0 0.0
      %5077 = vmatmul.mubr.f32.gmra.mrb[0].mxu0 %v4885
      %v5078 = vpop.f32.mrb[0].mxu0
      %v5079 = vadd.f32 %v4834, %v5078
      %v5080 = vpop.f32.mrb[0].mxu0
      %5081 = vmatprep.mubr.f32.mxu0 0.0
      %5082 = vmatmul.mubr.f32.gmra.mrb[0].mxu0 %v4888
      %v5083 = vpop.f32.mrb[0].mxu0
      %v5084 = vadd.f32 %v4834, %v5083
      %v5085 = vpop.f32.mrb[0].mxu0
      %5086 = vmatprep.mubr.f32.mxu0 0.0
      %5087 = vmatmul.mubr.f32.gmra.mrb[0].mxu0 %v4891
      %v5088 = vpop.f32.mrb[0].mxu0
      %v5089 = vadd.f32 %v4834, %v5088
      %v5090 = vpop.f32.mrb[0].mxu0
      %5091 = vmatprep.mubr.f32.mxu0 0.0
      %5092 = vmatmul.mubr.f32.gmra.mrb[0].mxu0 %v4894
      %v5093 = vpop.f32.mrb[0].mxu0
      %v5094 = vadd.f32 %v4834, %v5093
      %v5095 = vpop.f32.mrb[0].mxu0
      %5096 = vmatprep.mubr.f32.mxu0 0.0
      %5097 = vmatmul.mubr.f32.gmra.mrb[0].mxu0 %v4897
      %v5098 = vpop.f32.mrb[0].mxu0
      %v5099 = vadd.f32 %v4834, %v5098
      %v5100 = vpop.f32.mrb[0].mxu0
      %5101 = vmatprep.mubr.f32.mxu0 0.0
      %5102 = vmatmul.mubr.f32.gmra.mrb[0].mxu0 %v4900
      %v5103 = vpop.f32.mrb[0].mxu0
      %v5104 = vadd.f32 %v4834, %v5103
      %v5105 = vpop.f32.mrb[0].mxu0
      %5106 = vmatprep.mubr.f32.mxu0 0.0
      %5107 = vmatmul.mubr.f32.gmra.mrb[0].mxu0 %v4903
      %v5108 = vpop.f32.mrb[0].mxu0
      %v5109 = vadd.f32 %v4834, %v5108
      %v5110 = vpop.f32.mrb[0].mxu0
      %5111 = vmatprep.mubr.f32.mxu0 0.0
      %5112 = vmatmul.mubr.f32.gmra.mrb[0].mxu0 %v4906
      %v5113 = vpop.f32.mrb[0].mxu0
      %v5114 = vadd.f32 %v4834, %v5113
      %v5115 = vpop.f32.mrb[0].mxu0
      %5116 = vmatprep.mubr.f32.mxu0 0.0
      %5117 = vmatmul.mubr.f32.gmra.mrb[0].mxu0 %v4909
      %v5118 = vpop.f32.mrb[0].mxu0
      %v5119 = vadd.f32 %v4834, %v5118
      %v5120 = vpop.f32.mrb[0].mxu0
      %5121 = vmatprep.mubr.f32.mxu0 0.0
      %5122 = vmatmul.mubr.f32.gmra.mrb[0].mxu0 %v4912
      %v5123 = vpop.f32.mrb[0].mxu0
      %v5124 = vadd.f32 %v4834, %v5123
      %v5125 = vpop.f32.mrb[0].mxu0
      %5126 = vmatprep.mubr.f32.mxu0 0.0
      %5127 = vmatmul.mubr.f32.gmra.mrb[0].mxu0 %v4915
      %v5128 = vpop.f32.mrb[0].mxu0
      %v5129 = vadd.f32 %v4834, %v5128
      %v5130 = vpop.f32.mrb[0].mxu0
      %5131 = vmatprep.mubr.f32.mxu0 0.0
      %5132 = vmatmul.mubr.f32.gmra.mrb[0].mxu0 %v4918
      %v5133 = vpop.f32.mrb[0].mxu0
      %v5134 = vadd.f32 %v4834, %v5133
      %v5135 = vpop.f32.mrb[0].mxu0
      %5136 = vmatprep.mubr.f32.mxu0 0.0
      %5137 = vmatmul.mubr.f32.gmra.mrb[0].mxu0 %v4921
      %v5138 = vpop.f32.mrb[0].mxu0
      %v5139 = vadd.f32 %v4834, %v5138
      %v5140 = vpop.f32.mrb[0].mxu0
      %5141 = vmatprep.mubr.f32.mxu0 0.0
      %5142 = vmatmul.mubr.f32.gmra.mrb[0].mxu0 %v4924
      %v5143 = vpop.f32.mrb[0].mxu0
      %v5144 = vadd.f32 %v4834, %v5143
      %v5145 = vpop.f32.mrb[0].mxu0
      %5146 = vmatprep.mubr.f32.mxu0 0.0
      %5147 = vmatmul.mubr.f32.gmra.mrb[0].mxu0 %v4927
      %v5148 = vpop.f32.mrb[0].mxu0
      %v5149 = vadd.f32 %v4834, %v5148
      %v5150 = vpop.f32.mrb[0].mxu0
      %5151 = vmatprep.mubr.f32.mxu0 0.0
      %5152 = vmatmul.mubr.f32.gmra.mrb[0].mxu0 %v4930
      %v5153 = vpop.f32.mrb[0].mxu0
      %v5154 = vadd.f32 %v4834, %v5153
      %v5155 = vpop.f32.mrb[0].mxu0
      %5156 = vdwg.mxu0
      %5157 = vst [vmem:[%s283] sm:$0xff] %v4999
      %5158 = vst [vmem:[%s283 + $0x8] sm:$0xff] %v5004
      %5159 = vst [vmem:[%s283 + $0x10] sm:$0xff] %v5009
      %5160 = vst [vmem:[%s283 + $0x18] sm:$0xff] %v5014
      %5161 = vst [vmem:[%s283 + $0x20] sm:$0xff] %v5019
      %5162 = vst [vmem:[%s283 + $0x28] sm:$0xff] %v5024
      %5163 = vst [vmem:[%s283 + $0x30] sm:$0xff] %v5029
      %5164 = vst [vmem:[%s283 + $0x38] sm:$0xff] %v5034
      %5165 = vst [vmem:[%s283 + $0x40] sm:$0xff] %v5039
      %5166 = vst [vmem:[%s283 + $0x48] sm:$0xff] %v5044
      %5167 = vst [vmem:[%s283 + $0x50] sm:$0xff] %v5049
      %5168 = vst [vmem:[%s283 + $0x58] sm:$0xff] %v5054
      %5169 = vst [vmem:[%s283 + $0x60] sm:$0xff] %v5059
      %5170 = vst [vmem:[%s283 + $0x68] sm:$0xff] %v5064
      %5171 = vst [vmem:[%s283 + $0x70] sm:$0xff] %v5069
      %5172 = vst [vmem:[%s283 + $0x78] sm:$0xff] %v5074
      %5173 = vst [vmem:[%s283 + $0x80] sm:$0xff] %v5079
      %5174 = vst [vmem:[%s283 + $0x88] sm:$0xff] %v5084
      %5175 = vst [vmem:[%s283 + $0x90] sm:$0xff] %v5089
      %5176 = vst [vmem:[%s283 + $0x98] sm:$0xff] %v5094
      %5177 = vst [vmem:[%s283 + $0xa0] sm:$0xff] %v5099
      %5178 = vst [vmem:[%s283 + $0xa8] sm:$0xff] %v5104
      %5179 = vst [vmem:[%s283 + $0xb0] sm:$0xff] %v5109
      %5180 = vst [vmem:[%s283 + $0xb8] sm:$0xff] %v5114
      %5181 = vst [vmem:[%s283 + $0xc0] sm:$0xff] %v5119
      %5182 = vst [vmem:[%s283 + $0xc8] sm:$0xff] %v5124
      %5183 = vst [vmem:[%s283 + $0xd0] sm:$0xff] %v5129
      %5184 = vst [vmem:[%s283 + $0xd8] sm:$0xff] %v5134
      %5185 = vst [vmem:[%s283 + $0xe0] sm:$0xff] %v5139
      %5186 = vst [vmem:[%s283 + $0xe8] sm:$0xff] %v5144
      %5187 = vst [vmem:[%s283 + $0xf0] sm:$0xff] %v5149
      %5188 = vst [vmem:[%s283 + $0xf8] sm:$0xff] %v5154
      %s5189 = smul.u32 32, %s18
      %p5190 = scmp.lt.s32.totalorder %s5189, 63
      %s5191 = scalar_select %p5190, %s5189, 63
      %s5192 = smul.addr %s5191, 8
      %s5193 = scalar_lea.vmem %s7, %s5192
      // Predicated region
      $region49: #{qvalue_forward.1} parent=47 // pred_check
        %p5194 = pneg %p188
      $region50: #{qvalue_forward.1} parent=47 // pred_check_branch
        %5196 = sbr.rel (%p5194) target = $region52
      $region51: #{qvalue_forward.1} parent=47 // pred_region
        %s5197 = smul.u32 32, %s18
      $region52: #{qvalue_forward.1} parent=47 // pred_fallthru
        _
    $region48: #{qvalue_forward.1} parent=5 // pred_fallthru
      _
    %p5198 = scmp.le.s32.totalorder 2, %s13
    // Predicated region
    $region53: #{qvalue_forward.1} parent=5 // pred_check
      %p5199 = pneg %p5198
    $region54: #{qvalue_forward.1} parent=5 // pred_check_branch
      %5201 = sbr.rel (%p5199) target = $region56
    $region55: #{qvalue_forward.1} parent=5 // pred_region
      %s5202 = ssub.s32 %s13, 2
      // Predicated region
      $region57: #{qvalue_forward.1} parent=55 // pred_check
        %p5203 = pneg %p194
      $region58: #{qvalue_forward.1} parent=55 // pred_check_branch
        %5205 = sbr.rel (%p5203) target = $region60
      $region59: #{qvalue_forward.1} parent=55 // pred_region
        %s5206 = smul.u32 32, %s19
        %p5207 = scmp.lt.s32.totalorder %s5206, 63
        %s5208 = scalar_select %p5207, %s5206, 63
        %s5209 = smul.addr %s5208, 8
        %s5210 = scalar_lea.vmem %s7, %s5209
      $region60: #{qvalue_forward.1} parent=55 // pred_fallthru
        _
    $region56: #{qvalue_forward.1} parent=5 // pred_fallthru
      _
  $region6: #{qvalue_forward.1} parent=0 // loop_footer
    %s17 = sadd.s32 1, %s13
  $region7: #{qvalue_forward.1} parent=0 // loop_footer_branch
    %12 = sbr.rel target = $region3
  $region8: #{qvalue_forward.1} parent=0 // loop_exit
    _

</llo_original>
